<compile_context>
chip_gen: v7x
topology: tpu7x:2x2x1
jax: 0.10.0
libtpu: 0.0.40
codegen_flags: <defaults>
</compile_context>

<pallas_src>
import numpy as np
import jax
import jax.numpy as jnp
from jax import lax
from jax.experimental import pallas as pl

# ----------------------------- Problem shapes --------------------------------
N_TILES = 2      # bag of image tiles per sample (images[0, :] in step())
C_IN    = 4
H = W   = 16
C_FEAT  = 32     # cnn feature dim
M_MED   = 8      # medical_data dim
KH = KW = 3

HP, WP   = H + 2, W + 2                            # SAME-padded spatial extent
PLANE    = HP * WP                                 # 324 flat positions per tile
NCOLS    = N_TILES * PLANE                         # 648 flat (tile, y, x) positions
N_VALID  = N_TILES * H * W                         # 512 real conv-output positions
CONV_COLS = ((NCOLS + 127) // 128) * 128           # 768 lane-aligned conv width
MAX_OFF  = (KH - 1) * WP + (KW - 1)                # 38: largest conv-tap shift
SLAB_COLS = ((CONV_COLS + MAX_OFF + 127) // 128) * 128   # 896

# Activation slab rows (one (8, 896) f32 input = one DMA).
CH_STRIDE = 8            # channels padded 4 -> 8 (one sublane group per conv tap)
ROW_POOL  = 4            # pool weights: 1/512 at valid positions, else 0
ROW_ONES  = 5            # all-ones row -> carries the conv bias through the matmul
ROW_MED   = 6            # medical_data in lanes 0..M_MED-1
X_ROWS    = CH_STRIDE    # rows 4..7 have zero conv weight, so they never leak into conv

# Parameter slab rows (one (80, 128) f32 input = one DMA).
P_LANES   = 128
ROW_WCONV = 0                            # (C_FEAT, KH*KW*8) conv weights (+ bias column)
ROW_WFEAT = C_FEAT                       # (C_FEAT, 128) feature-head columns
ROW_WMED  = 2 * C_FEAT                   # (M_MED, 128) med-head columns
ROW_BIAS  = 2 * C_FEAT + M_MED           # (1, 128) head-bias row
P_ROWS    = ((ROW_BIAS + 1 + 7) // 8) * 8            # 80

# Output lanes of the single (1, 128) result row.
LANE_Y_MED, LANE_Y_CNN, LANE_Y_JOINT = 0, 1, 2


# ----------------------------- Pallas kernel ---------------------------------

def _backbone_kernel(x_ref, p_ref, out_ref):
    """Fused conv(+bias,ReLU) + masked mean-pool + tile aggregate + 3 heads.

    x_ref : (8, 896)  activation slab (see layout above)
    p_ref : (80, 128) parameter slab
    out_ref: (1, 128) packed result row, lanes 0..2 = (y_med, y_cnn, y_joint)
    """
    # Conv over the *extended* (padded, 18x18) output grid, channel-major.
    # conv[co, c] for a valid flat position c = n*PLANE + y*WP + x equals
    #   sum_{dy,dx,ci} w[co,ci,dy,dx] * xpad[n, y+dy, x+dx, ci] + b[co]
    # (bias comes from the ones row via the weight column set in prepare_params;
    #  invalid grid positions produce finite junk that the pool weights zero out).
    conv = None
    for i in range(KH * KW):
        dy, dx = divmod(i, KW)
        off = dy * WP + dx                                   # static shift, 0..38
        term = jnp.dot(
            p_ref[ROW_WCONV:ROW_WCONV + C_FEAT, CH_STRIDE * i:CH_STRIDE * (i + 1)],
            x_ref[:, off:off + CONV_COLS],                   # (8, 768) shifted slab view
            preferred_element_type=jnp.float32)              # (C_FEAT, 768)
        conv = term if conv is None else conv + term

    act = jnp.maximum(conv, 0.0)                             # ReLU (bias already in conv)

    # Per-tile global-average-pool followed by tile mean == weighted sum over all
    # valid positions with weight 1/512 (equal pixel count per tile).  The pool
    # weights live in the slab, so this is one A·Bᵀ dot producing the feature ROW.
    poolw = x_ref[ROW_POOL:ROW_POOL + 1, 0:CONV_COLS]        # (1, 768)
    agg = lax.dot_general(poolw, act, (((1,), (1,)), ((), ())),
                          preferred_element_type=jnp.float32)  # (1, C_FEAT)

    med = x_ref[ROW_MED:ROW_MED + 1, 0:M_MED]                # (1, M_MED)

    # Heads: two tiny dots against the packed head-weight blocks land all three
    # scalars directly in lanes 0..2 of one output row -> single store / DMA.
    out_ref[...] = (
        jnp.dot(agg, p_ref[ROW_WFEAT:ROW_WFEAT + C_FEAT, :],
                preferred_element_type=jnp.float32)
        + jnp.dot(med, p_ref[ROW_WMED:ROW_WMED + M_MED, :],
                  preferred_element_type=jnp.float32)
        + p_ref[ROW_BIAS:ROW_BIAS + 1, :])


# ------------------------------ Wrappers --------------------------------------

def _full_block(shape):
    """Full-array VMEM block for a grid-less pallas_call (index_map takes no args)."""
    nd = len(shape)

    def index_map():
        return (0,) * nd

    return pl.BlockSpec(shape, index_map)


def _x_slab_template():
    """Constant part of the activation slab: pool-weight row + ones row (numpy)."""
    t = np.zeros((X_ROWS, SLAB_COLS), np.float32)
    c = np.arange(NCOLS)
    yp = (c % PLANE) // WP
    xp = c % WP
    valid = (yp < H) & (xp < W)
    assert int(valid.sum()) == N_VALID
    t[ROW_POOL, :NCOLS] = valid.astype(np.float32) / float(N_VALID)
    t[ROW_ONES, :NCOLS] = 1.0
    return t


_X_TEMPLATE = _x_slab_template()


def prepare_params(p):
    """One-time packing of every parameter into a single (80, 128) f32 slab."""
    f32 = jnp.float32
    # Conv weights -> (C_FEAT, 72) with column 8*(3*dy+dx)+ci = conv_w[co, ci, dy, dx];
    # channels 4..7 of every tap group stay zero (they face the pool/ones/med rows).
    w = jnp.transpose(p["conv_w"].astype(f32), (2, 3, 1, 0))          # (KH,KW,C_IN,C_FEAT)
    w = jnp.pad(w, ((0, 0), (0, 0), (0, CH_STRIDE - C_IN), (0, 0)))   # (KH,KW,8,C_FEAT)
    wmat = w.reshape(KH * KW * CH_STRIDE, C_FEAT).T                   # (C_FEAT, 72)
    # Conv bias rides the ones row of the activation slab: tap group 0, channel ROW_ONES.
    wmat = wmat.at[:, 0 * CH_STRIDE + ROW_ONES].set(
        p["conv_b_row"].astype(f32).reshape(C_FEAT))

    slab = jnp.zeros((P_ROWS, P_LANES), f32)
    slab = slab.at[ROW_WCONV:ROW_WCONV + C_FEAT, 0:KH * KW * CH_STRIDE].set(wmat)
    # Feature-head block: output lane 1 <- w_cnn, lane 2 <- wj_feat.
    slab = slab.at[ROW_WFEAT:ROW_WFEAT + C_FEAT, LANE_Y_CNN].set(p["w_cnn"].astype(f32)[:, 0])
    slab = slab.at[ROW_WFEAT:ROW_WFEAT + C_FEAT, LANE_Y_JOINT].set(p["wj_feat"].astype(f32)[:, 0])
    # Med-head block: output lane 0 <- w_med, lane 2 <- wj_med.
    slab = slab.at[ROW_WMED:ROW_WMED + M_MED, LANE_Y_MED].set(p["w_med"].astype(f32)[:, 0])
    slab = slab.at[ROW_WMED:ROW_WMED + M_MED, LANE_Y_JOINT].set(p["wj_med"].astype(f32)[:, 0])
    # Head biases.
    slab = slab.at[ROW_BIAS, LANE_Y_MED].set(p["b_med"][0, 0])
    slab = slab.at[ROW_BIAS, LANE_Y_CNN].set(p["b_cnn"][0, 0])
    slab = slab.at[ROW_BIAS, LANE_Y_JOINT].set(p["b_joint"][0, 0])
    return slab


@jax.jit
def backbone_forward(images, medical_data, param_slab):
    """BackBone.forward: returns (y_med, y_cnn, y_joint) scalars.

    images: (N_TILES, C_IN, H, W) NCHW; medical_data: (M_MED,).
    The wrapper only pads + channel-transposes the raw image into the (8, 896)
    activation slab (no im2col in HBM) and drops medical_data into its row.
    """
    x = images.astype(jnp.float32)
    xpad = jnp.pad(x, ((0, 0), (0, 0), (1, 1), (1, 1)))               # (N, C, 18, 18)
    planes = jnp.transpose(xpad, (1, 0, 2, 3)).reshape(C_IN, NCOLS)   # (C_IN, 648)

    xslab = jnp.asarray(_X_TEMPLATE)
    xslab = xslab.at[0:C_IN, 0:NCOLS].set(planes)
    xslab = xslab.at[ROW_MED, 0:M_MED].set(medical_data.astype(jnp.float32))

    out = pl.pallas_call(
        _backbone_kernel,
        out_shape=jax.ShapeDtypeStruct((1, P_LANES), jnp.float32),
        in_specs=[_full_block(xslab.shape), _full_block(param_slab.shape)],
        out_specs=_full_block((1, P_LANES)),
    )(xslab, param_slab)

    return out[0, LANE_Y_MED], out[0, LANE_Y_CNN], out[0, LANE_Y_JOINT]


# ------------------------------ Reference -------------------------------------

def reference_forward(images, medical_data, p):
    conv = lax.conv_general_dilated(
        images.astype(jnp.float32), p["conv_w"],
        window_strides=(1, 1), padding="SAME",
        dimension_numbers=("NCHW", "OIHW", "NCHW"))
    conv = jnp.maximum(conv + p["conv_b_row"].reshape(1, C_FEAT, 1, 1), 0.0)
    feats = conv.mean(axis=(2, 3))            # (N, C_FEAT) per-tile GAP
    agg = feats.mean(axis=0)                  # (C_FEAT,)   tile mean
    med = medical_data.astype(jnp.float32)
    y_med = med @ p["w_med"][:, 0] + p["b_med"][0, 0]
    y_cnn = agg @ p["w_cnn"][:, 0] + p["b_cnn"][0, 0]
    y_joint = (agg @ p["wj_feat"][:, 0] + med @ p["wj_med"][:, 0]
               + p["b_joint"][0, 0])
    return y_med, y_cnn, y_joint


# ------------------------------ Main -------------------------------------------

def init_params(key):
    ks = jax.random.split(key, 8)
    scale = 0.1
    return {
        "conv_w":     scale * jax.random.normal(ks[0], (C_FEAT, C_IN, KH, KW), jnp.float32),
        "conv_b_row": scale * jax.random.normal(ks[1], (1, C_FEAT), jnp.float32),
        "w_med":      scale * jax.random.normal(ks[2], (M_MED, 1), jnp.float32),
        "b_med":      scale * jax.random.normal(ks[3], (1, 1), jnp.float32),
        "w_cnn":      scale * jax.random.normal(ks[4], (C_FEAT, 1), jnp.float32),
        "b_cnn":      scale * jax.random.normal(ks[5], (1, 1), jnp.float32),
        "wj_feat":    scale * jax.random.normal(ks[6], (C_FEAT, 1), jnp.float32),
        "wj_med":     scale * jax.random.normal(ks[7], (M_MED, 1), jnp.float32),
        "b_joint":    jnp.full((1, 1), 0.05, jnp.float32),
    }


if __name__ == "__main__":
    key = jax.random.PRNGKey(0)
    k_img, k_med, k_par = jax.random.split(key, 3)
    images = jax.random.normal(k_img, (N_TILES, C_IN, H, W), jnp.float32)
    medical_data = jax.random.normal(k_med, (M_MED,), jnp.float32)
    params = init_params(k_par)
    param_slab = prepare_params(params)       # one-time parameter packing (hoisted)

    y_med, y_cnn, y_joint = backbone_forward(images, medical_data, param_slab)
    jax.block_until_ready((y_med, y_cnn, y_joint))

    r_med, r_cnn, r_joint = reference_forward(images, medical_data, params)
    assert np.allclose(np.asarray(y_med), np.asarray(r_med), atol=2e-4, rtol=2e-4)
    assert np.allclose(np.asarray(y_cnn), np.asarray(r_cnn), atol=2e-4, rtol=2e-4)
    assert np.allclose(np.asarray(y_joint), np.asarray(r_joint), atol=2e-4, rtol=2e-4)

    print("KERNEL_OK")
</pallas_src>

<mosaic_0001>
module attributes {stable_mosaic.version = 11 : i64} {
  func.func @_backbone_kernel(%arg0: memref<8x896xf32, #tpu.memory_space<vmem>>, %arg1: memref<80x128xf32, #tpu.memory_space<vmem>>, %arg2: memref<1x128xf32, #tpu.memory_space<vmem>>) attributes {dimension_semantics = [], scalar_prefetch = 0 : i64, scratch_operands = 0 : i64, tpu.core_type = #tpu.core_type<tc>} {
    %c0 = arith.constant 0 : index
    %c0_0 = arith.constant 0 : index
    %0 = vector.load %arg1[%c0, %c0_0] : memref<80x128xf32, #tpu.memory_space<vmem>>, vector<32x8xf32>
    %c0_1 = arith.constant 0 : index
    %c0_2 = arith.constant 0 : index
    %1 = vector.load %arg0[%c0_1, %c0_2] : memref<8x896xf32, #tpu.memory_space<vmem>>, vector<8x768xf32>
    %cst = arith.constant dense<0.000000e+00> : vector<32x768xf32>
    %2 = tpu.matmul %0, %1, %cst {dimension_numbers = #tpu.dot_dimension_numbers<[1], [0], [0], [1], [0, 0, 1, 1], [], []>} : vector<32x8xf32>, vector<8x768xf32>, vector<32x768xf32> -> vector<32x768xf32>
    %c0_3 = arith.constant 0 : index
    %c8 = arith.constant 8 : index
    %3 = vector.load %arg1[%c0_3, %c8] : memref<80x128xf32, #tpu.memory_space<vmem>>, vector<32x8xf32>
    %c0_4 = arith.constant 0 : index
    %c1 = arith.constant 1 : index
    %4 = vector.load %arg0[%c0_4, %c1] : memref<8x896xf32, #tpu.memory_space<vmem>>, vector<8x768xf32>
    %cst_5 = arith.constant dense<0.000000e+00> : vector<32x768xf32>
    %5 = tpu.matmul %3, %4, %cst_5 {dimension_numbers = #tpu.dot_dimension_numbers<[1], [0], [0], [1], [0, 0, 1, 1], [], []>} : vector<32x8xf32>, vector<8x768xf32>, vector<32x768xf32> -> vector<32x768xf32>
    %6 = arith.addf %2, %5 : vector<32x768xf32>
    %c0_6 = arith.constant 0 : index
    %c16 = arith.constant 16 : index
    %7 = vector.load %arg1[%c0_6, %c16] : memref<80x128xf32, #tpu.memory_space<vmem>>, vector<32x8xf32>
    %c0_7 = arith.constant 0 : index
    %c2 = arith.constant 2 : index
    %8 = vector.load %arg0[%c0_7, %c2] : memref<8x896xf32, #tpu.memory_space<vmem>>, vector<8x768xf32>
    %cst_8 = arith.constant dense<0.000000e+00> : vector<32x768xf32>
    %9 = tpu.matmul %7, %8, %cst_8 {dimension_numbers = #tpu.dot_dimension_numbers<[1], [0], [0], [1], [0, 0, 1, 1], [], []>} : vector<32x8xf32>, vector<8x768xf32>, vector<32x768xf32> -> vector<32x768xf32>
    %10 = arith.addf %6, %9 : vector<32x768xf32>
    %c0_9 = arith.constant 0 : index
    %c24 = arith.constant 24 : index
    %11 = vector.load %arg1[%c0_9, %c24] : memref<80x128xf32, #tpu.memory_space<vmem>>, vector<32x8xf32>
    %c0_10 = arith.constant 0 : index
    %c18 = arith.constant 18 : index
    %12 = vector.load %arg0[%c0_10, %c18] : memref<8x896xf32, #tpu.memory_space<vmem>>, vector<8x768xf32>
    %cst_11 = arith.constant dense<0.000000e+00> : vector<32x768xf32>
    %13 = tpu.matmul %11, %12, %cst_11 {dimension_numbers = #tpu.dot_dimension_numbers<[1], [0], [0], [1], [0, 0, 1, 1], [], []>} : vector<32x8xf32>, vector<8x768xf32>, vector<32x768xf32> -> vector<32x768xf32>
    %14 = arith.addf %10, %13 : vector<32x768xf32>
    %c0_12 = arith.constant 0 : index
    %c32 = arith.constant 32 : index
    %15 = vector.load %arg1[%c0_12, %c32] : memref<80x128xf32, #tpu.memory_space<vmem>>, vector<32x8xf32>
    %c0_13 = arith.constant 0 : index
    %c19 = arith.constant 19 : index
    %16 = vector.load %arg0[%c0_13, %c19] : memref<8x896xf32, #tpu.memory_space<vmem>>, vector<8x768xf32>
    %cst_14 = arith.constant dense<0.000000e+00> : vector<32x768xf32>
    %17 = tpu.matmul %15, %16, %cst_14 {dimension_numbers = #tpu.dot_dimension_numbers<[1], [0], [0], [1], [0, 0, 1, 1], [], []>} : vector<32x8xf32>, vector<8x768xf32>, vector<32x768xf32> -> vector<32x768xf32>
    %18 = arith.addf %14, %17 : vector<32x768xf32>
    %c0_15 = arith.constant 0 : index
    %c40 = arith.constant 40 : index
    %19 = vector.load %arg1[%c0_15, %c40] : memref<80x128xf32, #tpu.memory_space<vmem>>, vector<32x8xf32>
    %c0_16 = arith.constant 0 : index
    %c20 = arith.constant 20 : index
    %20 = vector.load %arg0[%c0_16, %c20] : memref<8x896xf32, #tpu.memory_space<vmem>>, vector<8x768xf32>
    %cst_17 = arith.constant dense<0.000000e+00> : vector<32x768xf32>
    %21 = tpu.matmul %19, %20, %cst_17 {dimension_numbers = #tpu.dot_dimension_numbers<[1], [0], [0], [1], [0, 0, 1, 1], [], []>} : vector<32x8xf32>, vector<8x768xf32>, vector<32x768xf32> -> vector<32x768xf32>
    %22 = arith.addf %18, %21 : vector<32x768xf32>
    %c0_18 = arith.constant 0 : index
    %c48 = arith.constant 48 : index
    %23 = vector.load %arg1[%c0_18, %c48] : memref<80x128xf32, #tpu.memory_space<vmem>>, vector<32x8xf32>
    %c0_19 = arith.constant 0 : index
    %c36 = arith.constant 36 : index
    %24 = vector.load %arg0[%c0_19, %c36] : memref<8x896xf32, #tpu.memory_space<vmem>>, vector<8x768xf32>
    %cst_20 = arith.constant dense<0.000000e+00> : vector<32x768xf32>
    %25 = tpu.matmul %23, %24, %cst_20 {dimension_numbers = #tpu.dot_dimension_numbers<[1], [0], [0], [1], [0, 0, 1, 1], [], []>} : vector<32x8xf32>, vector<8x768xf32>, vector<32x768xf32> -> vector<32x768xf32>
    %26 = arith.addf %22, %25 : vector<32x768xf32>
    %c0_21 = arith.constant 0 : index
    %c56 = arith.constant 56 : index
    %27 = vector.load %arg1[%c0_21, %c56] : memref<80x128xf32, #tpu.memory_space<vmem>>, vector<32x8xf32>
    %c0_22 = arith.constant 0 : index
    %c37 = arith.constant 37 : index
    %28 = vector.load %arg0[%c0_22, %c37] : memref<8x896xf32, #tpu.memory_space<vmem>>, vector<8x768xf32>
    %cst_23 = arith.constant dense<0.000000e+00> : vector<32x768xf32>
    %29 = tpu.matmul %27, %28, %cst_23 {dimension_numbers = #tpu.dot_dimension_numbers<[1], [0], [0], [1], [0, 0, 1, 1], [], []>} : vector<32x8xf32>, vector<8x768xf32>, vector<32x768xf32> -> vector<32x768xf32>
    %30 = arith.addf %26, %29 : vector<32x768xf32>
    %c0_24 = arith.constant 0 : index
    %c64 = arith.constant 64 : index
    %31 = vector.load %arg1[%c0_24, %c64] : memref<80x128xf32, #tpu.memory_space<vmem>>, vector<32x8xf32>
    %c0_25 = arith.constant 0 : index
    %c38 = arith.constant 38 : index
    %32 = vector.load %arg0[%c0_25, %c38] : memref<8x896xf32, #tpu.memory_space<vmem>>, vector<8x768xf32>
    %cst_26 = arith.constant dense<0.000000e+00> : vector<32x768xf32>
    %33 = tpu.matmul %31, %32, %cst_26 {dimension_numbers = #tpu.dot_dimension_numbers<[1], [0], [0], [1], [0, 0, 1, 1], [], []>} : vector<32x8xf32>, vector<8x768xf32>, vector<32x768xf32> -> vector<32x768xf32>
    %34 = arith.addf %30, %33 : vector<32x768xf32>
    %cst_27 = arith.constant 0.000000e+00 : f32
    %35 = vector.broadcast %cst_27 : f32 to vector<32x768xf32>
    %36 = arith.maximumf %34, %35 : vector<32x768xf32>
    %c4 = arith.constant 4 : index
    %c0_28 = arith.constant 0 : index
    %37 = vector.load %arg0[%c4, %c0_28] : memref<8x896xf32, #tpu.memory_space<vmem>>, vector<1x768xf32>
    %cst_29 = arith.constant dense<0.000000e+00> : vector<1x32xf32>
    %38 = tpu.matmul %37, %36, %cst_29 {dimension_numbers = #tpu.dot_dimension_numbers<[1], [1], [0], [0], [0, 0, 1, 0], [], []>} : vector<1x768xf32>, vector<32x768xf32>, vector<1x32xf32> -> vector<1x32xf32>
    %c6 = arith.constant 6 : index
    %c0_30 = arith.constant 0 : index
    %39 = vector.load %arg0[%c6, %c0_30] : memref<8x896xf32, #tpu.memory_space<vmem>>, vector<1x8xf32>
    %c32_31 = arith.constant 32 : index
    %c0_32 = arith.constant 0 : index
    %40 = vector.load %arg1[%c32_31, %c0_32] : memref<80x128xf32, #tpu.memory_space<vmem>>, vector<32x128xf32>
    %cst_33 = arith.constant dense<0.000000e+00> : vector<1x128xf32>
    %41 = tpu.matmul %38, %40, %cst_33 {dimension_numbers = #tpu.dot_dimension_numbers<[1], [0], [0], [1], [0, 0, 1, 1], [], []>} : vector<1x32xf32>, vector<32x128xf32>, vector<1x128xf32> -> vector<1x128xf32>
    %c64_34 = arith.constant 64 : index
    %c0_35 = arith.constant 0 : index
    %42 = vector.load %arg1[%c64_34, %c0_35] : memref<80x128xf32, #tpu.memory_space<vmem>>, vector<8x128xf32>
    %cst_36 = arith.constant dense<0.000000e+00> : vector<1x128xf32>
    %43 = tpu.matmul %39, %42, %cst_36 {dimension_numbers = #tpu.dot_dimension_numbers<[1], [0], [0], [1], [0, 0, 1, 1], [], []>} : vector<1x8xf32>, vector<8x128xf32>, vector<1x128xf32> -> vector<1x128xf32>
    %44 = arith.addf %41, %43 : vector<1x128xf32>
    %c72 = arith.constant 72 : index
    %c0_37 = arith.constant 0 : index
    %45 = vector.load %arg1[%c72, %c0_37] : memref<80x128xf32, #tpu.memory_space<vmem>>, vector<1x128xf32>
    %46 = arith.addf %44, %45 : vector<1x128xf32>
    %c0_38 = arith.constant 0 : index
    %c0_39 = arith.constant 0 : index
    %47 = vector.load %arg2[%c0_38, %c0_39] : memref<1x128xf32, #tpu.memory_space<vmem>>, vector<1x128xf32>
    tpu.vector_store %arg2[%c0_38, %c0_39], %46 {strides = array<i32>} : memref<1x128xf32, #tpu.memory_space<vmem>>, vector<1x128xf32>,
    return
  }
}

</mosaic_0001>

<llo_original>
// kernel: backbone_forward.1
$region0: #{backbone_forward.1}
  #allocation0 [shape = 'u32[]', space=smem, size = 0x4, offset = 0x4, fixed_abs, tag = 'smem constant byte address 0x4 - core index']
  #allocation1 [shape = 'u32[144,128]{1,0:T(1,128)}', space=vmem, size = 0x12000, scoped, tag = 'internal scratch']
  %s0 = inlined_call_operand.vmem [shape: f32[8,896], index: 0, kind: input, shape index: {}]
  %s1 = inlined_call_operand.vmem [shape: f32[80,128], index: 1, kind: input, shape index: {}]
  %s2 = inlined_call_operand.vmem [shape: f32[1,128], index: 2, kind: output, shape index: {}]
  %s3 = sld [smem:[#allocation0]]
  $region18: #{backbone_forward.1} parent=0
    _
  %s5 = ssub.s32 1, %s3
  %s6 = scalar_select 0, %s5, %s3
  // Predicated region
  $region2: #{backbone_forward.1} parent=0 // pred_check
    _
  $region3: #{backbone_forward.1} parent=0 // pred_check_branch
    %8 = sbr.rel (0) target = $region5
  $region4: #{backbone_forward.1} parent=0 // pred_region
    _
  $region5: #{backbone_forward.1} parent=0 // pred_fallthru
    _
  // Predicated region
  $region6: #{backbone_forward.1} parent=0 // pred_check
    _
  $region7: #{backbone_forward.1} parent=0 // pred_check_branch
    %10 = sbr.rel (0) target = $region9
  $region8: #{backbone_forward.1} parent=0 // pred_region
    _
  $region9: #{backbone_forward.1} parent=0 // pred_fallthru
    _
  %v11 = vld [vmem:[%s1] sm:$0xff]
  %v12 = vld [vmem:[%s1 + $0x8] sm:$0xff]
  %v13 = vld [vmem:[%s1 + $0x10] sm:$0xff]
  %v14 = vld [vmem:[%s1 + $0x18] sm:$0xff]
  %v15 = vld [vmem:[%s0] sm:$0xff]
  %v16 = vld [vmem:[%s0 + $0x8] sm:$0xff]
  %v17 = vld [vmem:[%s0 + $0x10] sm:$0xff]
  %v18 = vld [vmem:[%s0 + $0x18] sm:$0xff]
  %v19 = vld [vmem:[%s0 + $0x20] sm:$0xff]
  %v20 = vld [vmem:[%s0 + $0x28] sm:$0xff]
  %v21 = vld [vmem:[%s0] sm:$0xff]
  %v22 = vld [vmem:[%s0 + $0x8] sm:$0xff]
  %v23 = vld [vmem:[%s0 + $0x10] sm:$0xff]
  %v24 = vld [vmem:[%s0 + $0x18] sm:$0xff]
  %v25 = vld [vmem:[%s0 + $0x20] sm:$0xff]
  %v26 = vld [vmem:[%s0 + $0x28] sm:$0xff]
  %v27 = vld [vmem:[%s0 + $0x30] sm:$0xff]
  %32 = vrot.lane.b32.xlu0 %v11, 120
  %v33 = vpop.permute.xlu0 %32
  %34 = vrot.lane.b32.xlu0 %v12, 120
  %v35 = vpop.permute.xlu0 %34
  %36 = vrot.lane.b32.xlu0 %v13, 120
  %v37 = vpop.permute.xlu0 %36
  %38 = vrot.lane.b32.xlu0 %v14, 120
  %v39 = vpop.permute.xlu0 %38
  %47 = vrot.lane.b32.xlu0 %v21, 127
  %v48 = vpop.permute.xlu0 %47
  %49 = vrot.lane.b32.xlu0 %v22, 127
  %v50 = vpop.permute.xlu0 %49
  %51 = vrot.lane.b32.xlu0 %v23, 127
  %v52 = vpop.permute.xlu0 %51
  %53 = vrot.lane.b32.xlu0 %v24, 127
  %v54 = vpop.permute.xlu0 %53
  %55 = vrot.lane.b32.xlu0 %v25, 127
  %v56 = vpop.permute.xlu0 %55
  %57 = vrot.lane.b32.xlu0 %v26, 127
  %v58 = vpop.permute.xlu0 %57
  %59 = vrot.lane.b32.xlu0 %v27, 127
  %v60 = vpop.permute.xlu0 %59
  %vm61 = vcmask 1039360
  %v62 = vsel %vm61, %v48, %v50
  %v63 = vsel %vm61, %v50, %v52
  %v64 = vsel %vm61, %v52, %v54
  %v65 = vsel %vm61, %v54, %v56
  %v66 = vsel %vm61, %v56, %v58
  %v67 = vsel %vm61, %v58, %v60
  %vm74 = vcmask 64512
  %v75 = vsel %vm74, %v33, 0
  %v77 = vsel %vm74, %v35, 0
  %v79 = vsel %vm74, %v37, 0
  %v81 = vsel %vm74, %v39, 0
  %83 = vmatprep.subr.mxu0 %v63
  %84 = vmatpush1.msra.mxu0 %v62
  %85 = vmatprep.subr.mxu0 0.0
  %86 = vmatpush1.msra.mxu0 0.0
  %87 = vmatprep.subr.mxu0 0.0
  %88 = vmatpush1.msra.mxu0 0.0
  %89 = vmatprep.subr.mxu0 0.0
  %90 = vmatpush1.msra.mxu0 0.0
  %91 = vmatprep.subr.mxu0 0.0
  %92 = vmatpush1.msra.mxu0 0.0
  %93 = vmatprep.subr.mxu0 0.0
  %94 = vmatpush1.msra.mxu0 0.0
  %95 = vmatprep.subr.mxu0 0.0
  %96 = vmatpush1.msra.mxu0 0.0
  %97 = vmatprep.subr.mxu0 0.0
  %98 = vmatpush1.msra.mxu0 0.0
  %99 = vmatprep.subr.mxu0 0.0
  %100 = vmatpush1.msra.mxu0 0.0
  %101 = vmatprep.subr.mxu0 0.0
  %102 = vmatpush1.msra.mxu0 0.0
  %103 = vmatprep.subr.mxu0 0.0
  %104 = vmatpush1.msra.mxu0 0.0
  %105 = vmatprep.subr.mxu0 0.0
  %106 = vmatpush1.msra.mxu0 0.0
  %107 = vmatprep.subr.mxu0 0.0
  %108 = vmatpush1.msra.mxu0 0.0
  %109 = vmatprep.subr.mxu0 0.0
  %110 = vmatpush1.msra.mxu0 0.0
  %111 = vmatprep.subr.mxu0 0.0
  %112 = vmatpush1.msra.mxu0 0.0
  %113 = vmatprep.subr.mxu0 0.0
  %114 = vmatpush1.msra.mxu0 0.0
  %115 = vmatprep.subr.mxu0 0.0
  %116 = vmatpush1.msra.mxu0 0.0
  %117 = vmatprep.subr.mxu0 0.0
  %118 = vmatpush1.msra.mxu0 0.0
  %119 = vmatprep.subr.mxu0 0.0
  %120 = vmatpush1.msra.mxu0 0.0
  %121 = vmatprep.subr.mxu0 0.0
  %122 = vmatpush1.msra.mxu0 0.0
  %123 = vmatprep.subr.mxu0 0.0
  %124 = vmatpush1.msra.mxu0 0.0
  %125 = vmatprep.subr.mxu0 0.0
  %126 = vmatpush1.msra.mxu0 0.0
  %127 = vmatprep.subr.mxu0 0.0
  %128 = vmatpush1.msra.mxu0 0.0
  %129 = vmatprep.subr.mxu0 0.0
  %130 = vmatpush1.msra.mxu0 0.0
  %131 = vmatprep.subr.mxu0 0.0
  %132 = vmatpush1.msra.mxu0 0.0
  %133 = vmatprep.subr.mxu0 0.0
  %134 = vmatpush1.msra.mxu0 0.0
  %135 = vmatprep.subr.mxu0 0.0
  %136 = vmatpush1.msra.mxu0 0.0
  %137 = vmatprep.subr.mxu0 0.0
  %138 = vmatpush1.msra.mxu0 0.0
  %139 = vmatprep.subr.mxu0 0.0
  %140 = vmatpush1.msra.mxu0 0.0
  %141 = vmatprep.subr.mxu0 0.0
  %142 = vmatpush1.msra.mxu0 0.0
  %143 = vmatprep.subr.mxu0 0.0
  %144 = vmatpush1.msra.mxu0 0.0
  %145 = vmatprep.subr.mxu0 0.0
  %146 = vmatpush1.msra.mxu0 0.0
  %147 = vmatprep.mubr.f32.mxu0 0.0
  %148 = vmatmul.mubr.f32.gmra.mrb[0].mxu0 %v75
  %v149 = vpop.f32.mrb[0].mxu0
  %v150 = vadd.f32 0.0, %v149
  %v151 = vpop.f32.mrb[0].mxu0
  %v152 = vadd.f32 0.0, %v151
  %153 = vmatprep.mubr.f32.mxu0 0.0
  %154 = vmatmul.mubr.f32.gmra.mrb[0].mxu0 %v77
  %v155 = vpop.f32.mrb[0].mxu0
  %v156 = vadd.f32 0.0, %v155
  %v157 = vpop.f32.mrb[0].mxu0
  %v158 = vadd.f32 0.0, %v157
  %159 = vmatprep.mubr.f32.mxu0 0.0
  %160 = vmatmul.mubr.f32.gmra.mrb[0].mxu0 %v79
  %v161 = vpop.f32.mrb[0].mxu0
  %v162 = vadd.f32 0.0, %v161
  %v163 = vpop.f32.mrb[0].mxu0
  %v164 = vadd.f32 0.0, %v163
  %165 = vmatprep.mubr.f32.mxu0 0.0
  %166 = vmatmul.mubr.f32.gmra.mrb[0].mxu0 %v81
  %v167 = vpop.f32.mrb[0].mxu0
  %v168 = vadd.f32 0.0, %v167
  %v169 = vpop.f32.mrb[0].mxu0
  %v170 = vadd.f32 0.0, %v169
  %171 = vdwg.mxu0
  %172 = vmatprep.subr.mxu0 %v65
  %173 = vmatpush1.msra.mxu0 %v64
  %174 = vmatprep.subr.mxu0 0.0
  %175 = vmatpush1.msra.mxu0 0.0
  %176 = vmatprep.subr.mxu0 0.0
  %177 = vmatpush1.msra.mxu0 0.0
  %178 = vmatprep.subr.mxu0 0.0
  %179 = vmatpush1.msra.mxu0 0.0
  %180 = vmatprep.subr.mxu0 0.0
  %181 = vmatpush1.msra.mxu0 0.0
  %182 = vmatprep.subr.mxu0 0.0
  %183 = vmatpush1.msra.mxu0 0.0
  %184 = vmatprep.subr.mxu0 0.0
  %185 = vmatpush1.msra.mxu0 0.0
  %186 = vmatprep.subr.mxu0 0.0
  %187 = vmatpush1.msra.mxu0 0.0
  %188 = vmatprep.subr.mxu0 0.0
  %189 = vmatpush1.msra.mxu0 0.0
  %190 = vmatprep.subr.mxu0 0.0
  %191 = vmatpush1.msra.mxu0 0.0
  %192 = vmatprep.subr.mxu0 0.0
  %193 = vmatpush1.msra.mxu0 0.0
  %194 = vmatprep.subr.mxu0 0.0
  %195 = vmatpush1.msra.mxu0 0.0
  %196 = vmatprep.subr.mxu0 0.0
  %197 = vmatpush1.msra.mxu0 0.0
  %198 = vmatprep.subr.mxu0 0.0
  %199 = vmatpush1.msra.mxu0 0.0
  %200 = vmatprep.subr.mxu0 0.0
  %201 = vmatpush1.msra.mxu0 0.0
  %202 = vmatprep.subr.mxu0 0.0
  %203 = vmatpush1.msra.mxu0 0.0
  %204 = vmatprep.subr.mxu0 0.0
  %205 = vmatpush1.msra.mxu0 0.0
  %206 = vmatprep.subr.mxu0 0.0
  %207 = vmatpush1.msra.mxu0 0.0
  %208 = vmatprep.subr.mxu0 0.0
  %209 = vmatpush1.msra.mxu0 0.0
  %210 = vmatprep.subr.mxu0 0.0
  %211 = vmatpush1.msra.mxu0 0.0
  %212 = vmatprep.subr.mxu0 0.0
  %213 = vmatpush1.msra.mxu0 0.0
  %214 = vmatprep.subr.mxu0 0.0
  %215 = vmatpush1.msra.mxu0 0.0
  %216 = vmatprep.subr.mxu0 0.0
  %217 = vmatpush1.msra.mxu0 0.0
  %218 = vmatprep.subr.mxu0 0.0
  %219 = vmatpush1.msra.mxu0 0.0
  %220 = vmatprep.subr.mxu0 0.0
  %221 = vmatpush1.msra.mxu0 0.0
  %222 = vmatprep.subr.mxu0 0.0
  %223 = vmatpush1.msra.mxu0 0.0
  %224 = vmatprep.subr.mxu0 0.0
  %225 = vmatpush1.msra.mxu0 0.0
  %226 = vmatprep.subr.mxu0 0.0
  %227 = vmatpush1.msra.mxu0 0.0
  %228 = vmatprep.subr.mxu0 0.0
  %229 = vmatpush1.msra.mxu0 0.0
  %230 = vmatprep.subr.mxu0 0.0
  %231 = vmatpush1.msra.mxu0 0.0
  %232 = vmatprep.subr.mxu0 0.0
  %233 = vmatpush1.msra.mxu0 0.0
  %234 = vmatprep.subr.mxu0 0.0
  %235 = vmatpush1.msra.mxu0 0.0
  %236 = vmatprep.mubr.f32.mxu0 0.0
  %237 = vmatmul.mubr.f32.gmra.mrb[0].mxu0 %v75
  %v238 = vpop.f32.mrb[0].mxu0
  %v239 = vadd.f32 0.0, %v238
  %v240 = vpop.f32.mrb[0].mxu0
  %v241 = vadd.f32 0.0, %v240
  %242 = vmatprep.mubr.f32.mxu0 0.0
  %243 = vmatmul.mubr.f32.gmra.mrb[0].mxu0 %v77
  %v244 = vpop.f32.mrb[0].mxu0
  %v245 = vadd.f32 0.0, %v244
  %v246 = vpop.f32.mrb[0].mxu0
  %v247 = vadd.f32 0.0, %v246
  %248 = vmatprep.mubr.f32.mxu0 0.0
  %249 = vmatmul.mubr.f32.gmra.mrb[0].mxu0 %v79
  %v250 = vpop.f32.mrb[0].mxu0
  %v251 = vadd.f32 0.0, %v250
  %v252 = vpop.f32.mrb[0].mxu0
  %v253 = vadd.f32 0.0, %v252
  %254 = vmatprep.mubr.f32.mxu0 0.0
  %255 = vmatmul.mubr.f32.gmra.mrb[0].mxu0 %v81
  %v256 = vpop.f32.mrb[0].mxu0
  %v257 = vadd.f32 0.0, %v256
  %v258 = vpop.f32.mrb[0].mxu0
  %v259 = vadd.f32 0.0, %v258
  %260 = vdwg.mxu0
  %261 = vmatprep.subr.mxu0 %v67
  %262 = vmatpush1.msra.mxu0 %v66
  %263 = vmatprep.subr.mxu0 0.0
  %264 = vmatpush1.msra.mxu0 0.0
  %265 = vmatprep.subr.mxu0 0.0
  %266 = vmatpush1.msra.mxu0 0.0
  %267 = vmatprep.subr.mxu0 0.0
  %268 = vmatpush1.msra.mxu0 0.0
  %269 = vmatprep.subr.mxu0 0.0
  %270 = vmatpush1.msra.mxu0 0.0
  %271 = vmatprep.subr.mxu0 0.0
  %272 = vmatpush1.msra.mxu0 0.0
  %273 = vmatprep.subr.mxu0 0.0
  %274 = vmatpush1.msra.mxu0 0.0
  %275 = vmatprep.subr.mxu0 0.0
  %276 = vmatpush1.msra.mxu0 0.0
  %277 = vmatprep.subr.mxu0 0.0
  %278 = vmatpush1.msra.mxu0 0.0
  %279 = vmatprep.subr.mxu0 0.0
  %280 = vmatpush1.msra.mxu0 0.0
  %281 = vmatprep.subr.mxu0 0.0
  %282 = vmatpush1.msra.mxu0 0.0
  %283 = vmatprep.subr.mxu0 0.0
  %284 = vmatpush1.msra.mxu0 0.0
  %285 = vmatprep.subr.mxu0 0.0
  %286 = vmatpush1.msra.mxu0 0.0
  %287 = vmatprep.subr.mxu0 0.0
  %288 = vmatpush1.msra.mxu0 0.0
  %289 = vmatprep.subr.mxu0 0.0
  %290 = vmatpush1.msra.mxu0 0.0
  %291 = vmatprep.subr.mxu0 0.0
  %292 = vmatpush1.msra.mxu0 0.0
  %293 = vmatprep.subr.mxu0 0.0
  %294 = vmatpush1.msra.mxu0 0.0
  %295 = vmatprep.subr.mxu0 0.0
  %296 = vmatpush1.msra.mxu0 0.0
  %297 = vmatprep.subr.mxu0 0.0
  %298 = vmatpush1.msra.mxu0 0.0
  %299 = vmatprep.subr.mxu0 0.0
  %300 = vmatpush1.msra.mxu0 0.0
  %301 = vmatprep.subr.mxu0 0.0
  %302 = vmatpush1.msra.mxu0 0.0
  %303 = vmatprep.subr.mxu0 0.0
  %304 = vmatpush1.msra.mxu0 0.0
  %305 = vmatprep.subr.mxu0 0.0
  %306 = vmatpush1.msra.mxu0 0.0
  %307 = vmatprep.subr.mxu0 0.0
  %308 = vmatpush1.msra.mxu0 0.0
  %309 = vmatprep.subr.mxu0 0.0
  %310 = vmatpush1.msra.mxu0 0.0
  %311 = vmatprep.subr.mxu0 0.0
  %312 = vmatpush1.msra.mxu0 0.0
  %313 = vmatprep.subr.mxu0 0.0
  %314 = vmatpush1.msra.mxu0 0.0
  %315 = vmatprep.subr.mxu0 0.0
  %316 = vmatpush1.msra.mxu0 0.0
  %317 = vmatprep.subr.mxu0 0.0
  %318 = vmatpush1.msra.mxu0 0.0
  %319 = vmatprep.subr.mxu0 0.0
  %320 = vmatpush1.msra.mxu0 0.0
  %321 = vmatprep.subr.mxu0 0.0
  %322 = vmatpush1.msra.mxu0 0.0
  %323 = vmatprep.subr.mxu0 0.0
  %324 = vmatpush1.msra.mxu0 0.0
  %325 = vmatprep.mubr.f32.mxu0 0.0
  %326 = vmatmul.mubr.f32.gmra.mrb[0].mxu0 %v75
  %v327 = vpop.f32.mrb[0].mxu0
  %v328 = vadd.f32 0.0, %v327
  %v329 = vpop.f32.mrb[0].mxu0
  %v330 = vadd.f32 0.0, %v329
  %331 = vmatprep.mubr.f32.mxu0 0.0
  %332 = vmatmul.mubr.f32.gmra.mrb[0].mxu0 %v77
  %v333 = vpop.f32.mrb[0].mxu0
  %v334 = vadd.f32 0.0, %v333
  %v335 = vpop.f32.mrb[0].mxu0
  %v336 = vadd.f32 0.0, %v335
  %337 = vmatprep.mubr.f32.mxu0 0.0
  %338 = vmatmul.mubr.f32.gmra.mrb[0].mxu0 %v79
  %v339 = vpop.f32.mrb[0].mxu0
  %v340 = vadd.f32 0.0, %v339
  %v341 = vpop.f32.mrb[0].mxu0
  %v342 = vadd.f32 0.0, %v341
  %343 = vmatprep.mubr.f32.mxu0 0.0
  %344 = vmatmul.mubr.f32.gmra.mrb[0].mxu0 %v81
  %v345 = vpop.f32.mrb[0].mxu0
  %v346 = vadd.f32 0.0, %v345
  %v347 = vpop.f32.mrb[0].mxu0
  %v348 = vadd.f32 0.0, %v347
  %349 = vdwg.mxu0
  %v350 = vsel %vm74, %v11, 0
  %v352 = vsel %vm74, %v12, 0
  %v354 = vsel %vm74, %v13, 0
  %v356 = vsel %vm74, %v14, 0
  %358 = vmatprep.subr.mxu0 %v16
  %359 = vmatpush1.msra.mxu0 %v15
  %360 = vmatprep.subr.mxu0 0.0
  %361 = vmatpush1.msra.mxu0 0.0
  %362 = vmatprep.subr.mxu0 0.0
  %363 = vmatpush1.msra.mxu0 0.0
  %364 = vmatprep.subr.mxu0 0.0
  %365 = vmatpush1.msra.mxu0 0.0
  %366 = vmatprep.subr.mxu0 0.0
  %367 = vmatpush1.msra.mxu0 0.0
  %368 = vmatprep.subr.mxu0 0.0
  %369 = vmatpush1.msra.mxu0 0.0
  %370 = vmatprep.subr.mxu0 0.0
  %371 = vmatpush1.msra.mxu0 0.0
  %372 = vmatprep.subr.mxu0 0.0
  %373 = vmatpush1.msra.mxu0 0.0
  %374 = vmatprep.subr.mxu0 0.0
  %375 = vmatpush1.msra.mxu0 0.0
  %376 = vmatprep.subr.mxu0 0.0
  %377 = vmatpush1.msra.mxu0 0.0
  %378 = vmatprep.subr.mxu0 0.0
  %379 = vmatpush1.msra.mxu0 0.0
  %380 = vmatprep.subr.mxu0 0.0
  %381 = vmatpush1.msra.mxu0 0.0
  %382 = vmatprep.subr.mxu0 0.0
  %383 = vmatpush1.msra.mxu0 0.0
  %384 = vmatprep.subr.mxu0 0.0
  %385 = vmatpush1.msra.mxu0 0.0
  %386 = vmatprep.subr.mxu0 0.0
  %387 = vmatpush1.msra.mxu0 0.0
  %388 = vmatprep.subr.mxu0 0.0
  %389 = vmatpush1.msra.mxu0 0.0
  %390 = vmatprep.subr.mxu0 0.0
  %391 = vmatpush1.msra.mxu0 0.0
  %392 = vmatprep.subr.mxu0 0.0
  %393 = vmatpush1.msra.mxu0 0.0
  %394 = vmatprep.subr.mxu0 0.0
  %395 = vmatpush1.msra.mxu0 0.0
  %396 = vmatprep.subr.mxu0 0.0
  %397 = vmatpush1.msra.mxu0 0.0
  %398 = vmatprep.subr.mxu0 0.0
  %399 = vmatpush1.msra.mxu0 0.0
  %400 = vmatprep.subr.mxu0 0.0
  %401 = vmatpush1.msra.mxu0 0.0
  %402 = vmatprep.subr.mxu0 0.0
  %403 = vmatpush1.msra.mxu0 0.0
  %404 = vmatprep.subr.mxu0 0.0
  %405 = vmatpush1.msra.mxu0 0.0
  %406 = vmatprep.subr.mxu0 0.0
  %407 = vmatpush1.msra.mxu0 0.0
  %408 = vmatprep.subr.mxu0 0.0
  %409 = vmatpush1.msra.mxu0 0.0
  %410 = vmatprep.subr.mxu0 0.0
  %411 = vmatpush1.msra.mxu0 0.0
  %412 = vmatprep.subr.mxu0 0.0
  %413 = vmatpush1.msra.mxu0 0.0
  %414 = vmatprep.subr.mxu0 0.0
  %415 = vmatpush1.msra.mxu0 0.0
  %416 = vmatprep.subr.mxu0 0.0
  %417 = vmatpush1.msra.mxu0 0.0
  %418 = vmatprep.subr.mxu0 0.0
  %419 = vmatpush1.msra.mxu0 0.0
  %420 = vmatprep.subr.mxu0 0.0
  %421 = vmatpush1.msra.mxu0 0.0
  %422 = vmatprep.mubr.f32.mxu0 0.0
  %423 = vmatmul.mubr.f32.gmra.mrb[0].mxu0 %v350
  %v424 = vpop.f32.mrb[0].mxu0
  %v425 = vadd.f32 %v150, %v424
  %v426 = vpop.f32.mrb[0].mxu0
  %v427 = vadd.f32 %v152, %v426
  %428 = vmatprep.mubr.f32.mxu0 0.0
  %429 = vmatmul.mubr.f32.gmra.mrb[0].mxu0 %v352
  %v430 = vpop.f32.mrb[0].mxu0
  %v431 = vadd.f32 %v156, %v430
  %v432 = vpop.f32.mrb[0].mxu0
  %v433 = vadd.f32 %v158, %v432
  %434 = vmatprep.mubr.f32.mxu0 0.0
  %435 = vmatmul.mubr.f32.gmra.mrb[0].mxu0 %v354
  %v436 = vpop.f32.mrb[0].mxu0
  %v437 = vadd.f32 %v162, %v436
  %v438 = vpop.f32.mrb[0].mxu0
  %v439 = vadd.f32 %v164, %v438
  %440 = vmatprep.mubr.f32.mxu0 0.0
  %441 = vmatmul.mubr.f32.gmra.mrb[0].mxu0 %v356
  %v442 = vpop.f32.mrb[0].mxu0
  %v443 = vadd.f32 %v168, %v442
  %v444 = vpop.f32.mrb[0].mxu0
  %v445 = vadd.f32 %v170, %v444
  %446 = vdwg.mxu0
  %447 = vmatprep.subr.mxu0 %v18
  %448 = vmatpush1.msra.mxu0 %v17
  %449 = vmatprep.subr.mxu0 0.0
  %450 = vmatpush1.msra.mxu0 0.0
  %451 = vmatprep.subr.mxu0 0.0
  %452 = vmatpush1.msra.mxu0 0.0
  %453 = vmatprep.subr.mxu0 0.0
  %454 = vmatpush1.msra.mxu0 0.0
  %455 = vmatprep.subr.mxu0 0.0
  %456 = vmatpush1.msra.mxu0 0.0
  %457 = vmatprep.subr.mxu0 0.0
  %458 = vmatpush1.msra.mxu0 0.0
  %459 = vmatprep.subr.mxu0 0.0
  %460 = vmatpush1.msra.mxu0 0.0
  %461 = vmatprep.subr.mxu0 0.0
  %462 = vmatpush1.msra.mxu0 0.0
  %463 = vmatprep.subr.mxu0 0.0
  %464 = vmatpush1.msra.mxu0 0.0
  %465 = vmatprep.subr.mxu0 0.0
  %466 = vmatpush1.msra.mxu0 0.0
  %467 = vmatprep.subr.mxu0 0.0
  %468 = vmatpush1.msra.mxu0 0.0
  %469 = vmatprep.subr.mxu0 0.0
  %470 = vmatpush1.msra.mxu0 0.0
  %471 = vmatprep.subr.mxu0 0.0
  %472 = vmatpush1.msra.mxu0 0.0
  %473 = vmatprep.subr.mxu0 0.0
  %474 = vmatpush1.msra.mxu0 0.0
  %475 = vmatprep.subr.mxu0 0.0
  %476 = vmatpush1.msra.mxu0 0.0
  %477 = vmatprep.subr.mxu0 0.0
  %478 = vmatpush1.msra.mxu0 0.0
  %479 = vmatprep.subr.mxu0 0.0
  %480 = vmatpush1.msra.mxu0 0.0
  %481 = vmatprep.subr.mxu0 0.0
  %482 = vmatpush1.msra.mxu0 0.0
  %483 = vmatprep.subr.mxu0 0.0
  %484 = vmatpush1.msra.mxu0 0.0
  %485 = vmatprep.subr.mxu0 0.0
  %486 = vmatpush1.msra.mxu0 0.0
  %487 = vmatprep.subr.mxu0 0.0
  %488 = vmatpush1.msra.mxu0 0.0
  %489 = vmatprep.subr.mxu0 0.0
  %490 = vmatpush1.msra.mxu0 0.0
  %491 = vmatprep.subr.mxu0 0.0
  %492 = vmatpush1.msra.mxu0 0.0
  %493 = vmatprep.subr.mxu0 0.0
  %494 = vmatpush1.msra.mxu0 0.0
  %495 = vmatprep.subr.mxu0 0.0
  %496 = vmatpush1.msra.mxu0 0.0
  %497 = vmatprep.subr.mxu0 0.0
  %498 = vmatpush1.msra.mxu0 0.0
  %499 = vmatprep.subr.mxu0 0.0
  %500 = vmatpush1.msra.mxu0 0.0
  %501 = vmatprep.subr.mxu0 0.0
  %502 = vmatpush1.msra.mxu0 0.0
  %503 = vmatprep.subr.mxu0 0.0
  %504 = vmatpush1.msra.mxu0 0.0
  %505 = vmatprep.subr.mxu0 0.0
  %506 = vmatpush1.msra.mxu0 0.0
  %507 = vmatprep.subr.mxu0 0.0
  %508 = vmatpush1.msra.mxu0 0.0
  %509 = vmatprep.subr.mxu0 0.0
  %510 = vmatpush1.msra.mxu0 0.0
  %511 = vmatprep.mubr.f32.mxu0 0.0
  %512 = vmatmul.mubr.f32.gmra.mrb[0].mxu0 %v350
  %v513 = vpop.f32.mrb[0].mxu0
  %v514 = vadd.f32 %v239, %v513
  %v515 = vpop.f32.mrb[0].mxu0
  %v516 = vadd.f32 %v241, %v515
  %517 = vmatprep.mubr.f32.mxu0 0.0
  %518 = vmatmul.mubr.f32.gmra.mrb[0].mxu0 %v352
  %v519 = vpop.f32.mrb[0].mxu0
  %v520 = vadd.f32 %v245, %v519
  %v521 = vpop.f32.mrb[0].mxu0
  %v522 = vadd.f32 %v247, %v521
  %523 = vmatprep.mubr.f32.mxu0 0.0
  %524 = vmatmul.mubr.f32.gmra.mrb[0].mxu0 %v354
  %v525 = vpop.f32.mrb[0].mxu0
  %v526 = vadd.f32 %v251, %v525
  %v527 = vpop.f32.mrb[0].mxu0
  %v528 = vadd.f32 %v253, %v527
  %529 = vmatprep.mubr.f32.mxu0 0.0
  %530 = vmatmul.mubr.f32.gmra.mrb[0].mxu0 %v356
  %v531 = vpop.f32.mrb[0].mxu0
  %v532 = vadd.f32 %v257, %v531
  %v533 = vpop.f32.mrb[0].mxu0
  %v534 = vadd.f32 %v259, %v533
  %535 = vdwg.mxu0
  %536 = vmatprep.subr.mxu0 %v20
  %537 = vmatpush1.msra.mxu0 %v19
  %538 = vmatprep.subr.mxu0 0.0
  %539 = vmatpush1.msra.mxu0 0.0
  %540 = vmatprep.subr.mxu0 0.0
  %541 = vmatpush1.msra.mxu0 0.0
  %542 = vmatprep.subr.mxu0 0.0
  %543 = vmatpush1.msra.mxu0 0.0
  %544 = vmatprep.subr.mxu0 0.0
  %545 = vmatpush1.msra.mxu0 0.0
  %546 = vmatprep.subr.mxu0 0.0
  %547 = vmatpush1.msra.mxu0 0.0
  %548 = vmatprep.subr.mxu0 0.0
  %549 = vmatpush1.msra.mxu0 0.0
  %550 = vmatprep.subr.mxu0 0.0
  %551 = vmatpush1.msra.mxu0 0.0
  %552 = vmatprep.subr.mxu0 0.0
  %553 = vmatpush1.msra.mxu0 0.0
  %554 = vmatprep.subr.mxu0 0.0
  %555 = vmatpush1.msra.mxu0 0.0
  %556 = vmatprep.subr.mxu0 0.0
  %557 = vmatpush1.msra.mxu0 0.0
  %558 = vmatprep.subr.mxu0 0.0
  %559 = vmatpush1.msra.mxu0 0.0
  %560 = vmatprep.subr.mxu0 0.0
  %561 = vmatpush1.msra.mxu0 0.0
  %562 = vmatprep.subr.mxu0 0.0
  %563 = vmatpush1.msra.mxu0 0.0
  %564 = vmatprep.subr.mxu0 0.0
  %565 = vmatpush1.msra.mxu0 0.0
  %566 = vmatprep.subr.mxu0 0.0
  %567 = vmatpush1.msra.mxu0 0.0
  %568 = vmatprep.subr.mxu0 0.0
  %569 = vmatpush1.msra.mxu0 0.0
  %570 = vmatprep.subr.mxu0 0.0
  %571 = vmatpush1.msra.mxu0 0.0
  %572 = vmatprep.subr.mxu0 0.0
  %573 = vmatpush1.msra.mxu0 0.0
  %574 = vmatprep.subr.mxu0 0.0
  %575 = vmatpush1.msra.mxu0 0.0
  %576 = vmatprep.subr.mxu0 0.0
  %577 = vmatpush1.msra.mxu0 0.0
  %578 = vmatprep.subr.mxu0 0.0
  %579 = vmatpush1.msra.mxu0 0.0
  %580 = vmatprep.subr.mxu0 0.0
  %581 = vmatpush1.msra.mxu0 0.0
  %582 = vmatprep.subr.mxu0 0.0
  %583 = vmatpush1.msra.mxu0 0.0
  %584 = vmatprep.subr.mxu0 0.0
  %585 = vmatpush1.msra.mxu0 0.0
  %586 = vmatprep.subr.mxu0 0.0
  %587 = vmatpush1.msra.mxu0 0.0
  %588 = vmatprep.subr.mxu0 0.0
  %589 = vmatpush1.msra.mxu0 0.0
  %590 = vmatprep.subr.mxu0 0.0
  %591 = vmatpush1.msra.mxu0 0.0
  %592 = vmatprep.subr.mxu0 0.0
  %593 = vmatpush1.msra.mxu0 0.0
  %594 = vmatprep.subr.mxu0 0.0
  %595 = vmatpush1.msra.mxu0 0.0
  %596 = vmatprep.subr.mxu0 0.0
  %597 = vmatpush1.msra.mxu0 0.0
  %598 = vmatprep.subr.mxu0 0.0
  %599 = vmatpush1.msra.mxu0 0.0
  %600 = vmatprep.mubr.f32.mxu0 0.0
  %601 = vmatmul.mubr.f32.gmra.mrb[0].mxu0 %v350
  %v602 = vpop.f32.mrb[0].mxu0
  %v603 = vadd.f32 %v328, %v602
  %v604 = vpop.f32.mrb[0].mxu0
  %v605 = vadd.f32 %v330, %v604
  %606 = vmatprep.mubr.f32.mxu0 0.0
  %607 = vmatmul.mubr.f32.gmra.mrb[0].mxu0 %v352
  %v608 = vpop.f32.mrb[0].mxu0
  %v609 = vadd.f32 %v334, %v608
  %v610 = vpop.f32.mrb[0].mxu0
  %v611 = vadd.f32 %v336, %v610
  %612 = vmatprep.mubr.f32.mxu0 0.0
  %613 = vmatmul.mubr.f32.gmra.mrb[0].mxu0 %v354
  %v614 = vpop.f32.mrb[0].mxu0
  %v615 = vadd.f32 %v340, %v614
  %v616 = vpop.f32.mrb[0].mxu0
  %v617 = vadd.f32 %v342, %v616
  %618 = vmatprep.mubr.f32.mxu0 0.0
  %619 = vmatmul.mubr.f32.gmra.mrb[0].mxu0 %v356
  %v620 = vpop.f32.mrb[0].mxu0
  %v621 = vadd.f32 %v346, %v620
  %v622 = vpop.f32.mrb[0].mxu0
  %v623 = vadd.f32 %v348, %v622
  %624 = vdwg.mxu0
  %625 = vrot.lane.b32.xlu0 %v11, 112
  %v626 = vpop.permute.xlu0 %625
  %627 = vrot.lane.b32.xlu0 %v12, 112
  %v628 = vpop.permute.xlu0 %627
  %629 = vrot.lane.b32.xlu0 %v13, 112
  %v630 = vpop.permute.xlu0 %629
  %631 = vrot.lane.b32.xlu0 %v14, 112
  %v632 = vpop.permute.xlu0 %631
  %633 = vrot.lane.b32.xlu0 %v21, 126
  %v634 = vpop.permute.xlu0 %633
  %635 = vrot.lane.b32.xlu0 %v22, 126
  %v636 = vpop.permute.xlu0 %635
  %637 = vrot.lane.b32.xlu0 %v23, 126
  %v638 = vpop.permute.xlu0 %637
  %639 = vrot.lane.b32.xlu0 %v24, 126
  %v640 = vpop.permute.xlu0 %639
  %641 = vrot.lane.b32.xlu0 %v25, 126
  %v642 = vpop.permute.xlu0 %641
  %643 = vrot.lane.b32.xlu0 %v26, 126
  %v644 = vpop.permute.xlu0 %643
  %645 = vrot.lane.b32.xlu0 %v27, 126
  %v646 = vpop.permute.xlu0 %645
  %vm647 = vcmask 1031168
  %v648 = vsel %vm647, %v634, %v636
  %v649 = vsel %vm647, %v636, %v638
  %v650 = vsel %vm647, %v638, %v640
  %v651 = vsel %vm647, %v640, %v642
  %v652 = vsel %vm647, %v642, %v644
  %v653 = vsel %vm647, %v644, %v646
  %v660 = vsel %vm74, %v626, 0
  %v662 = vsel %vm74, %v628, 0
  %v664 = vsel %vm74, %v630, 0
  %v666 = vsel %vm74, %v632, 0
  %668 = vmatprep.subr.mxu0 %v649
  %669 = vmatpush1.msra.mxu0 %v648
  %670 = vmatprep.subr.mxu0 0.0
  %671 = vmatpush1.msra.mxu0 0.0
  %672 = vmatprep.subr.mxu0 0.0
  %673 = vmatpush1.msra.mxu0 0.0
  %674 = vmatprep.subr.mxu0 0.0
  %675 = vmatpush1.msra.mxu0 0.0
  %676 = vmatprep.subr.mxu0 0.0
  %677 = vmatpush1.msra.mxu0 0.0
  %678 = vmatprep.subr.mxu0 0.0
  %679 = vmatpush1.msra.mxu0 0.0
  %680 = vmatprep.subr.mxu0 0.0
  %681 = vmatpush1.msra.mxu0 0.0
  %682 = vmatprep.subr.mxu0 0.0
  %683 = vmatpush1.msra.mxu0 0.0
  %684 = vmatprep.subr.mxu0 0.0
  %685 = vmatpush1.msra.mxu0 0.0
  %686 = vmatprep.subr.mxu0 0.0
  %687 = vmatpush1.msra.mxu0 0.0
  %688 = vmatprep.subr.mxu0 0.0
  %689 = vmatpush1.msra.mxu0 0.0
  %690 = vmatprep.subr.mxu0 0.0
  %691 = vmatpush1.msra.mxu0 0.0
  %692 = vmatprep.subr.mxu0 0.0
  %693 = vmatpush1.msra.mxu0 0.0
  %694 = vmatprep.subr.mxu0 0.0
  %695 = vmatpush1.msra.mxu0 0.0
  %696 = vmatprep.subr.mxu0 0.0
  %697 = vmatpush1.msra.mxu0 0.0
  %698 = vmatprep.subr.mxu0 0.0
  %699 = vmatpush1.msra.mxu0 0.0
  %700 = vmatprep.subr.mxu0 0.0
  %701 = vmatpush1.msra.mxu0 0.0
  %702 = vmatprep.subr.mxu0 0.0
  %703 = vmatpush1.msra.mxu0 0.0
  %704 = vmatprep.subr.mxu0 0.0
  %705 = vmatpush1.msra.mxu0 0.0
  %706 = vmatprep.subr.mxu0 0.0
  %707 = vmatpush1.msra.mxu0 0.0
  %708 = vmatprep.subr.mxu0 0.0
  %709 = vmatpush1.msra.mxu0 0.0
  %710 = vmatprep.subr.mxu0 0.0
  %711 = vmatpush1.msra.mxu0 0.0
  %712 = vmatprep.subr.mxu0 0.0
  %713 = vmatpush1.msra.mxu0 0.0
  %714 = vmatprep.subr.mxu0 0.0
  %715 = vmatpush1.msra.mxu0 0.0
  %716 = vmatprep.subr.mxu0 0.0
  %717 = vmatpush1.msra.mxu0 0.0
  %718 = vmatprep.subr.mxu0 0.0
  %719 = vmatpush1.msra.mxu0 0.0
  %720 = vmatprep.subr.mxu0 0.0
  %721 = vmatpush1.msra.mxu0 0.0
  %722 = vmatprep.subr.mxu0 0.0
  %723 = vmatpush1.msra.mxu0 0.0
  %724 = vmatprep.subr.mxu0 0.0
  %725 = vmatpush1.msra.mxu0 0.0
  %726 = vmatprep.subr.mxu0 0.0
  %727 = vmatpush1.msra.mxu0 0.0
  %728 = vmatprep.subr.mxu0 0.0
  %729 = vmatpush1.msra.mxu0 0.0
  %730 = vmatprep.subr.mxu0 0.0
  %731 = vmatpush1.msra.mxu0 0.0
  %732 = vmatprep.mubr.f32.mxu0 0.0
  %733 = vmatmul.mubr.f32.gmra.mrb[0].mxu0 %v660
  %v734 = vpop.f32.mrb[0].mxu0
  %v735 = vadd.f32 0.0, %v734
  %v736 = vpop.f32.mrb[0].mxu0
  %v737 = vadd.f32 0.0, %v736
  %738 = vmatprep.mubr.f32.mxu0 0.0
  %739 = vmatmul.mubr.f32.gmra.mrb[0].mxu0 %v662
  %v740 = vpop.f32.mrb[0].mxu0
  %v741 = vadd.f32 0.0, %v740
  %v742 = vpop.f32.mrb[0].mxu0
  %v743 = vadd.f32 0.0, %v742
  %744 = vmatprep.mubr.f32.mxu0 0.0
  %745 = vmatmul.mubr.f32.gmra.mrb[0].mxu0 %v664
  %v746 = vpop.f32.mrb[0].mxu0
  %v747 = vadd.f32 0.0, %v746
  %v748 = vpop.f32.mrb[0].mxu0
  %v749 = vadd.f32 0.0, %v748
  %750 = vmatprep.mubr.f32.mxu0 0.0
  %751 = vmatmul.mubr.f32.gmra.mrb[0].mxu0 %v666
  %v752 = vpop.f32.mrb[0].mxu0
  %v753 = vadd.f32 0.0, %v752
  %v754 = vpop.f32.mrb[0].mxu0
  %v755 = vadd.f32 0.0, %v754
  %756 = vdwg.mxu0
  %757 = vmatprep.subr.mxu0 %v651
  %758 = vmatpush1.msra.mxu0 %v650
  %759 = vmatprep.subr.mxu0 0.0
  %760 = vmatpush1.msra.mxu0 0.0
  %761 = vmatprep.subr.mxu0 0.0
  %762 = vmatpush1.msra.mxu0 0.0
  %763 = vmatprep.subr.mxu0 0.0
  %764 = vmatpush1.msra.mxu0 0.0
  %765 = vmatprep.subr.mxu0 0.0
  %766 = vmatpush1.msra.mxu0 0.0
  %767 = vmatprep.subr.mxu0 0.0
  %768 = vmatpush1.msra.mxu0 0.0
  %769 = vmatprep.subr.mxu0 0.0
  %770 = vmatpush1.msra.mxu0 0.0
  %771 = vmatprep.subr.mxu0 0.0
  %772 = vmatpush1.msra.mxu0 0.0
  %773 = vmatprep.subr.mxu0 0.0
  %774 = vmatpush1.msra.mxu0 0.0
  %775 = vmatprep.subr.mxu0 0.0
  %776 = vmatpush1.msra.mxu0 0.0
  %777 = vmatprep.subr.mxu0 0.0
  %778 = vmatpush1.msra.mxu0 0.0
  %779 = vmatprep.subr.mxu0 0.0
  %780 = vmatpush1.msra.mxu0 0.0
  %781 = vmatprep.subr.mxu0 0.0
  %782 = vmatpush1.msra.mxu0 0.0
  %783 = vmatprep.subr.mxu0 0.0
  %784 = vmatpush1.msra.mxu0 0.0
  %785 = vmatprep.subr.mxu0 0.0
  %786 = vmatpush1.msra.mxu0 0.0
  %787 = vmatprep.subr.mxu0 0.0
  %788 = vmatpush1.msra.mxu0 0.0
  %789 = vmatprep.subr.mxu0 0.0
  %790 = vmatpush1.msra.mxu0 0.0
  %791 = vmatprep.subr.mxu0 0.0
  %792 = vmatpush1.msra.mxu0 0.0
  %793 = vmatprep.subr.mxu0 0.0
  %794 = vmatpush1.msra.mxu0 0.0
  %795 = vmatprep.subr.mxu0 0.0
  %796 = vmatpush1.msra.mxu0 0.0
  %797 = vmatprep.subr.mxu0 0.0
  %798 = vmatpush1.msra.mxu0 0.0
  %799 = vmatprep.subr.mxu0 0.0
  %800 = vmatpush1.msra.mxu0 0.0
  %801 = vmatprep.subr.mxu0 0.0
  %802 = vmatpush1.msra.mxu0 0.0
  %803 = vmatprep.subr.mxu0 0.0
  %804 = vmatpush1.msra.mxu0 0.0
  %805 = vmatprep.subr.mxu0 0.0
  %806 = vmatpush1.msra.mxu0 0.0
  %807 = vmatprep.subr.mxu0 0.0
  %808 = vmatpush1.msra.mxu0 0.0
  %809 = vmatprep.subr.mxu0 0.0
  %810 = vmatpush1.msra.mxu0 0.0
  %811 = vmatprep.subr.mxu0 0.0
  %812 = vmatpush1.msra.mxu0 0.0
  %813 = vmatprep.subr.mxu0 0.0
  %814 = vmatpush1.msra.mxu0 0.0
  %815 = vmatprep.subr.mxu0 0.0
  %816 = vmatpush1.msra.mxu0 0.0
  %817 = vmatprep.subr.mxu0 0.0
  %818 = vmatpush1.msra.mxu0 0.0
  %819 = vmatprep.subr.mxu0 0.0
  %820 = vmatpush1.msra.mxu0 0.0
  %821 = vmatprep.mubr.f32.mxu0 0.0
  %822 = vmatmul.mubr.f32.gmra.mrb[0].mxu0 %v660
  %v823 = vpop.f32.mrb[0].mxu0
  %v824 = vadd.f32 0.0, %v823
  %v825 = vpop.f32.mrb[0].mxu0
  %v826 = vadd.f32 0.0, %v825
  %827 = vmatprep.mubr.f32.mxu0 0.0
  %828 = vmatmul.mubr.f32.gmra.mrb[0].mxu0 %v662
  %v829 = vpop.f32.mrb[0].mxu0
  %v830 = vadd.f32 0.0, %v829
  %v831 = vpop.f32.mrb[0].mxu0
  %v832 = vadd.f32 0.0, %v831
  %833 = vmatprep.mubr.f32.mxu0 0.0
  %834 = vmatmul.mubr.f32.gmra.mrb[0].mxu0 %v664
  %v835 = vpop.f32.mrb[0].mxu0
  %v836 = vadd.f32 0.0, %v835
  %v837 = vpop.f32.mrb[0].mxu0
  %v838 = vadd.f32 0.0, %v837
  %839 = vmatprep.mubr.f32.mxu0 0.0
  %840 = vmatmul.mubr.f32.gmra.mrb[0].mxu0 %v666
  %v841 = vpop.f32.mrb[0].mxu0
  %v842 = vadd.f32 0.0, %v841
  %v843 = vpop.f32.mrb[0].mxu0
  %v844 = vadd.f32 0.0, %v843
  %845 = vdwg.mxu0
  %846 = vmatprep.subr.mxu0 %v653
  %847 = vmatpush1.msra.mxu0 %v652
  %848 = vmatprep.subr.mxu0 0.0
  %849 = vmatpush1.msra.mxu0 0.0
  %850 = vmatprep.subr.mxu0 0.0
  %851 = vmatpush1.msra.mxu0 0.0
  %852 = vmatprep.subr.mxu0 0.0
  %853 = vmatpush1.msra.mxu0 0.0
  %854 = vmatprep.subr.mxu0 0.0
  %855 = vmatpush1.msra.mxu0 0.0
  %856 = vmatprep.subr.mxu0 0.0
  %857 = vmatpush1.msra.mxu0 0.0
  %858 = vmatprep.subr.mxu0 0.0
  %859 = vmatpush1.msra.mxu0 0.0
  %860 = vmatprep.subr.mxu0 0.0
  %861 = vmatpush1.msra.mxu0 0.0
  %862 = vmatprep.subr.mxu0 0.0
  %863 = vmatpush1.msra.mxu0 0.0
  %864 = vmatprep.subr.mxu0 0.0
  %865 = vmatpush1.msra.mxu0 0.0
  %866 = vmatprep.subr.mxu0 0.0
  %867 = vmatpush1.msra.mxu0 0.0
  %868 = vmatprep.subr.mxu0 0.0
  %869 = vmatpush1.msra.mxu0 0.0
  %870 = vmatprep.subr.mxu0 0.0
  %871 = vmatpush1.msra.mxu0 0.0
  %872 = vmatprep.subr.mxu0 0.0
  %873 = vmatpush1.msra.mxu0 0.0
  %874 = vmatprep.subr.mxu0 0.0
  %875 = vmatpush1.msra.mxu0 0.0
  %876 = vmatprep.subr.mxu0 0.0
  %877 = vmatpush1.msra.mxu0 0.0
  %878 = vmatprep.subr.mxu0 0.0
  %879 = vmatpush1.msra.mxu0 0.0
  %880 = vmatprep.subr.mxu0 0.0
  %881 = vmatpush1.msra.mxu0 0.0
  %882 = vmatprep.subr.mxu0 0.0
  %883 = vmatpush1.msra.mxu0 0.0
  %884 = vmatprep.subr.mxu0 0.0
  %885 = vmatpush1.msra.mxu0 0.0
  %886 = vmatprep.subr.mxu0 0.0
  %887 = vmatpush1.msra.mxu0 0.0
  %888 = vmatprep.subr.mxu0 0.0
  %889 = vmatpush1.msra.mxu0 0.0
  %890 = vmatprep.subr.mxu0 0.0
  %891 = vmatpush1.msra.mxu0 0.0
  %892 = vmatprep.subr.mxu0 0.0
  %893 = vmatpush1.msra.mxu0 0.0
  %894 = vmatprep.subr.mxu0 0.0
  %895 = vmatpush1.msra.mxu0 0.0
  %896 = vmatprep.subr.mxu0 0.0
  %897 = vmatpush1.msra.mxu0 0.0
  %898 = vmatprep.subr.mxu0 0.0
  %899 = vmatpush1.msra.mxu0 0.0
  %900 = vmatprep.subr.mxu0 0.0
  %901 = vmatpush1.msra.mxu0 0.0
  %902 = vmatprep.subr.mxu0 0.0
  %903 = vmatpush1.msra.mxu0 0.0
  %904 = vmatprep.subr.mxu0 0.0
  %905 = vmatpush1.msra.mxu0 0.0
  %906 = vmatprep.subr.mxu0 0.0
  %907 = vmatpush1.msra.mxu0 0.0
  %908 = vmatprep.subr.mxu0 0.0
  %909 = vmatpush1.msra.mxu0 0.0
  %910 = vmatprep.mubr.f32.mxu0 0.0
  %911 = vmatmul.mubr.f32.gmra.mrb[0].mxu0 %v660
  %v912 = vpop.f32.mrb[0].mxu0
  %v913 = vadd.f32 0.0, %v912
  %v914 = vpop.f32.mrb[0].mxu0
  %v915 = vadd.f32 0.0, %v914
  %916 = vmatprep.mubr.f32.mxu0 0.0
  %917 = vmatmul.mubr.f32.gmra.mrb[0].mxu0 %v662
  %v918 = vpop.f32.mrb[0].mxu0
  %v919 = vadd.f32 0.0, %v918
  %v920 = vpop.f32.mrb[0].mxu0
  %v921 = vadd.f32 0.0, %v920
  %922 = vmatprep.mubr.f32.mxu0 0.0
  %923 = vmatmul.mubr.f32.gmra.mrb[0].mxu0 %v664
  %v924 = vpop.f32.mrb[0].mxu0
  %v925 = vadd.f32 0.0, %v924
  %v926 = vpop.f32.mrb[0].mxu0
  %v927 = vadd.f32 0.0, %v926
  %928 = vmatprep.mubr.f32.mxu0 0.0
  %929 = vmatmul.mubr.f32.gmra.mrb[0].mxu0 %v666
  %v930 = vpop.f32.mrb[0].mxu0
  %v931 = vadd.f32 0.0, %v930
  %v932 = vpop.f32.mrb[0].mxu0
  %v933 = vadd.f32 0.0, %v932
  %934 = vdwg.mxu0
  %v935 = vadd.f32 %v425, %v735
  %v936 = vadd.f32 %v427, %v737
  %v937 = vadd.f32 %v514, %v824
  %v938 = vadd.f32 %v516, %v826
  %v939 = vadd.f32 %v603, %v913
  %v940 = vadd.f32 %v605, %v915
  %v941 = vadd.f32 %v431, %v741
  %v942 = vadd.f32 %v433, %v743
  %v943 = vadd.f32 %v520, %v830
  %v944 = vadd.f32 %v522, %v832
  %v945 = vadd.f32 %v609, %v919
  %v946 = vadd.f32 %v611, %v921
  %v947 = vadd.f32 %v437, %v747
  %v948 = vadd.f32 %v439, %v749
  %v949 = vadd.f32 %v526, %v836
  %v950 = vadd.f32 %v528, %v838
  %v951 = vadd.f32 %v615, %v925
  %v952 = vadd.f32 %v617, %v927
  %v953 = vadd.f32 %v443, %v753
  %v954 = vadd.f32 %v445, %v755
  %v955 = vadd.f32 %v532, %v842
  %v956 = vadd.f32 %v534, %v844
  %v957 = vadd.f32 %v621, %v931
  %v958 = vadd.f32 %v623, %v933
  %959 = vrot.lane.b32.xlu0 %v11, 104
  %v960 = vpop.permute.xlu0 %959
  %961 = vrot.lane.b32.xlu0 %v12, 104
  %v962 = vpop.permute.xlu0 %961
  %963 = vrot.lane.b32.xlu0 %v13, 104
  %v964 = vpop.permute.xlu0 %963
  %965 = vrot.lane.b32.xlu0 %v14, 104
  %v966 = vpop.permute.xlu0 %965
  %967 = vrot.lane.b32.xlu0 %v21, 110
  %v968 = vpop.permute.xlu0 %967
  %969 = vrot.lane.b32.xlu0 %v22, 110
  %v970 = vpop.permute.xlu0 %969
  %971 = vrot.lane.b32.xlu0 %v23, 110
  %v972 = vpop.permute.xlu0 %971
  %973 = vrot.lane.b32.xlu0 %v24, 110
  %v974 = vpop.permute.xlu0 %973
  %975 = vrot.lane.b32.xlu0 %v25, 110
  %v976 = vpop.permute.xlu0 %975
  %977 = vrot.lane.b32.xlu0 %v26, 110
  %v978 = vpop.permute.xlu0 %977
  %979 = vrot.lane.b32.xlu0 %v27, 110
  %v980 = vpop.permute.xlu0 %979
  %vm981 = vcmask 900096
  %v982 = vsel %vm981, %v968, %v970
  %v983 = vsel %vm981, %v970, %v972
  %v984 = vsel %vm981, %v972, %v974
  %v985 = vsel %vm981, %v974, %v976
  %v986 = vsel %vm981, %v976, %v978
  %v987 = vsel %vm981, %v978, %v980
  %v994 = vsel %vm74, %v960, 0
  %v996 = vsel %vm74, %v962, 0
  %v998 = vsel %vm74, %v964, 0
  %v1000 = vsel %vm74, %v966, 0
  %1002 = vmatprep.subr.mxu0 %v983
  %1003 = vmatpush1.msra.mxu0 %v982
  %1004 = vmatprep.subr.mxu0 0.0
  %1005 = vmatpush1.msra.mxu0 0.0
  %1006 = vmatprep.subr.mxu0 0.0
  %1007 = vmatpush1.msra.mxu0 0.0
  %1008 = vmatprep.subr.mxu0 0.0
  %1009 = vmatpush1.msra.mxu0 0.0
  %1010 = vmatprep.subr.mxu0 0.0
  %1011 = vmatpush1.msra.mxu0 0.0
  %1012 = vmatprep.subr.mxu0 0.0
  %1013 = vmatpush1.msra.mxu0 0.0
  %1014 = vmatprep.subr.mxu0 0.0
  %1015 = vmatpush1.msra.mxu0 0.0
  %1016 = vmatprep.subr.mxu0 0.0
  %1017 = vmatpush1.msra.mxu0 0.0
  %1018 = vmatprep.subr.mxu0 0.0
  %1019 = vmatpush1.msra.mxu0 0.0
  %1020 = vmatprep.subr.mxu0 0.0
  %1021 = vmatpush1.msra.mxu0 0.0
  %1022 = vmatprep.subr.mxu0 0.0
  %1023 = vmatpush1.msra.mxu0 0.0
  %1024 = vmatprep.subr.mxu0 0.0
  %1025 = vmatpush1.msra.mxu0 0.0
  %1026 = vmatprep.subr.mxu0 0.0
  %1027 = vmatpush1.msra.mxu0 0.0
  %1028 = vmatprep.subr.mxu0 0.0
  %1029 = vmatpush1.msra.mxu0 0.0
  %1030 = vmatprep.subr.mxu0 0.0
  %1031 = vmatpush1.msra.mxu0 0.0
  %1032 = vmatprep.subr.mxu0 0.0
  %1033 = vmatpush1.msra.mxu0 0.0
  %1034 = vmatprep.subr.mxu0 0.0
  %1035 = vmatpush1.msra.mxu0 0.0
  %1036 = vmatprep.subr.mxu0 0.0
  %1037 = vmatpush1.msra.mxu0 0.0
  %1038 = vmatprep.subr.mxu0 0.0
  %1039 = vmatpush1.msra.mxu0 0.0
  %1040 = vmatprep.subr.mxu0 0.0
  %1041 = vmatpush1.msra.mxu0 0.0
  %1042 = vmatprep.subr.mxu0 0.0
  %1043 = vmatpush1.msra.mxu0 0.0
  %1044 = vmatprep.subr.mxu0 0.0
  %1045 = vmatpush1.msra.mxu0 0.0
  %1046 = vmatprep.subr.mxu0 0.0
  %1047 = vmatpush1.msra.mxu0 0.0
  %1048 = vmatprep.subr.mxu0 0.0
  %1049 = vmatpush1.msra.mxu0 0.0
  %1050 = vmatprep.subr.mxu0 0.0
  %1051 = vmatpush1.msra.mxu0 0.0
  %1052 = vmatprep.subr.mxu0 0.0
  %1053 = vmatpush1.msra.mxu0 0.0
  %1054 = vmatprep.subr.mxu0 0.0
  %1055 = vmatpush1.msra.mxu0 0.0
  %1056 = vmatprep.subr.mxu0 0.0
  %1057 = vmatpush1.msra.mxu0 0.0
  %1058 = vmatprep.subr.mxu0 0.0
  %1059 = vmatpush1.msra.mxu0 0.0
  %1060 = vmatprep.subr.mxu0 0.0
  %1061 = vmatpush1.msra.mxu0 0.0
  %1062 = vmatprep.subr.mxu0 0.0
  %1063 = vmatpush1.msra.mxu0 0.0
  %1064 = vmatprep.subr.mxu0 0.0
  %1065 = vmatpush1.msra.mxu0 0.0
  %1066 = vmatprep.mubr.f32.mxu0 0.0
  %1067 = vmatmul.mubr.f32.gmra.mrb[0].mxu0 %v994
  %v1068 = vpop.f32.mrb[0].mxu0
  %v1069 = vadd.f32 0.0, %v1068
  %v1070 = vpop.f32.mrb[0].mxu0
  %v1071 = vadd.f32 0.0, %v1070
  %1072 = vmatprep.mubr.f32.mxu0 0.0
  %1073 = vmatmul.mubr.f32.gmra.mrb[0].mxu0 %v996
  %v1074 = vpop.f32.mrb[0].mxu0
  %v1075 = vadd.f32 0.0, %v1074
  %v1076 = vpop.f32.mrb[0].mxu0
  %v1077 = vadd.f32 0.0, %v1076
  %1078 = vmatprep.mubr.f32.mxu0 0.0
  %1079 = vmatmul.mubr.f32.gmra.mrb[0].mxu0 %v998
  %v1080 = vpop.f32.mrb[0].mxu0
  %v1081 = vadd.f32 0.0, %v1080
  %v1082 = vpop.f32.mrb[0].mxu0
  %v1083 = vadd.f32 0.0, %v1082
  %1084 = vmatprep.mubr.f32.mxu0 0.0
  %1085 = vmatmul.mubr.f32.gmra.mrb[0].mxu0 %v1000
  %v1086 = vpop.f32.mrb[0].mxu0
  %v1087 = vadd.f32 0.0, %v1086
  %v1088 = vpop.f32.mrb[0].mxu0
  %v1089 = vadd.f32 0.0, %v1088
  %1090 = vdwg.mxu0
  %1091 = vmatprep.subr.mxu0 %v985
  %1092 = vmatpush1.msra.mxu0 %v984
  %1093 = vmatprep.subr.mxu0 0.0
  %1094 = vmatpush1.msra.mxu0 0.0
  %1095 = vmatprep.subr.mxu0 0.0
  %1096 = vmatpush1.msra.mxu0 0.0
  %1097 = vmatprep.subr.mxu0 0.0
  %1098 = vmatpush1.msra.mxu0 0.0
  %1099 = vmatprep.subr.mxu0 0.0
  %1100 = vmatpush1.msra.mxu0 0.0
  %1101 = vmatprep.subr.mxu0 0.0
  %1102 = vmatpush1.msra.mxu0 0.0
  %1103 = vmatprep.subr.mxu0 0.0
  %1104 = vmatpush1.msra.mxu0 0.0
  %1105 = vmatprep.subr.mxu0 0.0
  %1106 = vmatpush1.msra.mxu0 0.0
  %1107 = vmatprep.subr.mxu0 0.0
  %1108 = vmatpush1.msra.mxu0 0.0
  %1109 = vmatprep.subr.mxu0 0.0
  %1110 = vmatpush1.msra.mxu0 0.0
  %1111 = vmatprep.subr.mxu0 0.0
  %1112 = vmatpush1.msra.mxu0 0.0
  %1113 = vmatprep.subr.mxu0 0.0
  %1114 = vmatpush1.msra.mxu0 0.0
  %1115 = vmatprep.subr.mxu0 0.0
  %1116 = vmatpush1.msra.mxu0 0.0
  %1117 = vmatprep.subr.mxu0 0.0
  %1118 = vmatpush1.msra.mxu0 0.0
  %1119 = vmatprep.subr.mxu0 0.0
  %1120 = vmatpush1.msra.mxu0 0.0
  %1121 = vmatprep.subr.mxu0 0.0
  %1122 = vmatpush1.msra.mxu0 0.0
  %1123 = vmatprep.subr.mxu0 0.0
  %1124 = vmatpush1.msra.mxu0 0.0
  %1125 = vmatprep.subr.mxu0 0.0
  %1126 = vmatpush1.msra.mxu0 0.0
  %1127 = vmatprep.subr.mxu0 0.0
  %1128 = vmatpush1.msra.mxu0 0.0
  %1129 = vmatprep.subr.mxu0 0.0
  %1130 = vmatpush1.msra.mxu0 0.0
  %1131 = vmatprep.subr.mxu0 0.0
  %1132 = vmatpush1.msra.mxu0 0.0
  %1133 = vmatprep.subr.mxu0 0.0
  %1134 = vmatpush1.msra.mxu0 0.0
  %1135 = vmatprep.subr.mxu0 0.0
  %1136 = vmatpush1.msra.mxu0 0.0
  %1137 = vmatprep.subr.mxu0 0.0
  %1138 = vmatpush1.msra.mxu0 0.0
  %1139 = vmatprep.subr.mxu0 0.0
  %1140 = vmatpush1.msra.mxu0 0.0
  %1141 = vmatprep.subr.mxu0 0.0
  %1142 = vmatpush1.msra.mxu0 0.0
  %1143 = vmatprep.subr.mxu0 0.0
  %1144 = vmatpush1.msra.mxu0 0.0
  %1145 = vmatprep.subr.mxu0 0.0
  %1146 = vmatpush1.msra.mxu0 0.0
  %1147 = vmatprep.subr.mxu0 0.0
  %1148 = vmatpush1.msra.mxu0 0.0
  %1149 = vmatprep.subr.mxu0 0.0
  %1150 = vmatpush1.msra.mxu0 0.0
  %1151 = vmatprep.subr.mxu0 0.0
  %1152 = vmatpush1.msra.mxu0 0.0
  %1153 = vmatprep.subr.mxu0 0.0
  %1154 = vmatpush1.msra.mxu0 0.0
  %1155 = vmatprep.mubr.f32.mxu0 0.0
  %1156 = vmatmul.mubr.f32.gmra.mrb[0].mxu0 %v994
  %v1157 = vpop.f32.mrb[0].mxu0
  %v1158 = vadd.f32 0.0, %v1157
  %v1159 = vpop.f32.mrb[0].mxu0
  %v1160 = vadd.f32 0.0, %v1159
  %1161 = vmatprep.mubr.f32.mxu0 0.0
  %1162 = vmatmul.mubr.f32.gmra.mrb[0].mxu0 %v996
  %v1163 = vpop.f32.mrb[0].mxu0
  %v1164 = vadd.f32 0.0, %v1163
  %v1165 = vpop.f32.mrb[0].mxu0
  %v1166 = vadd.f32 0.0, %v1165
  %1167 = vmatprep.mubr.f32.mxu0 0.0
  %1168 = vmatmul.mubr.f32.gmra.mrb[0].mxu0 %v998
  %v1169 = vpop.f32.mrb[0].mxu0
  %v1170 = vadd.f32 0.0, %v1169
  %v1171 = vpop.f32.mrb[0].mxu0
  %v1172 = vadd.f32 0.0, %v1171
  %1173 = vmatprep.mubr.f32.mxu0 0.0
  %1174 = vmatmul.mubr.f32.gmra.mrb[0].mxu0 %v1000
  %v1175 = vpop.f32.mrb[0].mxu0
  %v1176 = vadd.f32 0.0, %v1175
  %v1177 = vpop.f32.mrb[0].mxu0
  %v1178 = vadd.f32 0.0, %v1177
  %1179 = vdwg.mxu0
  %1180 = vmatprep.subr.mxu0 %v987
  %1181 = vmatpush1.msra.mxu0 %v986
  %1182 = vmatprep.subr.mxu0 0.0
  %1183 = vmatpush1.msra.mxu0 0.0
  %1184 = vmatprep.subr.mxu0 0.0
  %1185 = vmatpush1.msra.mxu0 0.0
  %1186 = vmatprep.subr.mxu0 0.0
  %1187 = vmatpush1.msra.mxu0 0.0
  %1188 = vmatprep.subr.mxu0 0.0
  %1189 = vmatpush1.msra.mxu0 0.0
  %1190 = vmatprep.subr.mxu0 0.0
  %1191 = vmatpush1.msra.mxu0 0.0
  %1192 = vmatprep.subr.mxu0 0.0
  %1193 = vmatpush1.msra.mxu0 0.0
  %1194 = vmatprep.subr.mxu0 0.0
  %1195 = vmatpush1.msra.mxu0 0.0
  %1196 = vmatprep.subr.mxu0 0.0
  %1197 = vmatpush1.msra.mxu0 0.0
  %1198 = vmatprep.subr.mxu0 0.0
  %1199 = vmatpush1.msra.mxu0 0.0
  %1200 = vmatprep.subr.mxu0 0.0
  %1201 = vmatpush1.msra.mxu0 0.0
  %1202 = vmatprep.subr.mxu0 0.0
  %1203 = vmatpush1.msra.mxu0 0.0
  %1204 = vmatprep.subr.mxu0 0.0
  %1205 = vmatpush1.msra.mxu0 0.0
  %1206 = vmatprep.subr.mxu0 0.0
  %1207 = vmatpush1.msra.mxu0 0.0
  %1208 = vmatprep.subr.mxu0 0.0
  %1209 = vmatpush1.msra.mxu0 0.0
  %1210 = vmatprep.subr.mxu0 0.0
  %1211 = vmatpush1.msra.mxu0 0.0
  %1212 = vmatprep.subr.mxu0 0.0
  %1213 = vmatpush1.msra.mxu0 0.0
  %1214 = vmatprep.subr.mxu0 0.0
  %1215 = vmatpush1.msra.mxu0 0.0
  %1216 = vmatprep.subr.mxu0 0.0
  %1217 = vmatpush1.msra.mxu0 0.0
  %1218 = vmatprep.subr.mxu0 0.0
  %1219 = vmatpush1.msra.mxu0 0.0
  %1220 = vmatprep.subr.mxu0 0.0
  %1221 = vmatpush1.msra.mxu0 0.0
  %1222 = vmatprep.subr.mxu0 0.0
  %1223 = vmatpush1.msra.mxu0 0.0
  %1224 = vmatprep.subr.mxu0 0.0
  %1225 = vmatpush1.msra.mxu0 0.0
  %1226 = vmatprep.subr.mxu0 0.0
  %1227 = vmatpush1.msra.mxu0 0.0
  %1228 = vmatprep.subr.mxu0 0.0
  %1229 = vmatpush1.msra.mxu0 0.0
  %1230 = vmatprep.subr.mxu0 0.0
  %1231 = vmatpush1.msra.mxu0 0.0
  %1232 = vmatprep.subr.mxu0 0.0
  %1233 = vmatpush1.msra.mxu0 0.0
  %1234 = vmatprep.subr.mxu0 0.0
  %1235 = vmatpush1.msra.mxu0 0.0
  %1236 = vmatprep.subr.mxu0 0.0
  %1237 = vmatpush1.msra.mxu0 0.0
  %1238 = vmatprep.subr.mxu0 0.0
  %1239 = vmatpush1.msra.mxu0 0.0
  %1240 = vmatprep.subr.mxu0 0.0
  %1241 = vmatpush1.msra.mxu0 0.0
  %1242 = vmatprep.subr.mxu0 0.0
  %1243 = vmatpush1.msra.mxu0 0.0
  %1244 = vmatprep.mubr.f32.mxu0 0.0
  %1245 = vmatmul.mubr.f32.gmra.mrb[0].mxu0 %v994
  %v1246 = vpop.f32.mrb[0].mxu0
  %v1247 = vadd.f32 0.0, %v1246
  %v1248 = vpop.f32.mrb[0].mxu0
  %v1249 = vadd.f32 0.0, %v1248
  %1250 = vmatprep.mubr.f32.mxu0 0.0
  %1251 = vmatmul.mubr.f32.gmra.mrb[0].mxu0 %v996
  %v1252 = vpop.f32.mrb[0].mxu0
  %v1253 = vadd.f32 0.0, %v1252
  %v1254 = vpop.f32.mrb[0].mxu0
  %v1255 = vadd.f32 0.0, %v1254
  %1256 = vmatprep.mubr.f32.mxu0 0.0
  %1257 = vmatmul.mubr.f32.gmra.mrb[0].mxu0 %v998
  %v1258 = vpop.f32.mrb[0].mxu0
  %v1259 = vadd.f32 0.0, %v1258
  %v1260 = vpop.f32.mrb[0].mxu0
  %v1261 = vadd.f32 0.0, %v1260
  %1262 = vmatprep.mubr.f32.mxu0 0.0
  %1263 = vmatmul.mubr.f32.gmra.mrb[0].mxu0 %v1000
  %v1264 = vpop.f32.mrb[0].mxu0
  %v1265 = vadd.f32 0.0, %v1264
  %v1266 = vpop.f32.mrb[0].mxu0
  %v1267 = vadd.f32 0.0, %v1266
  %1268 = vdwg.mxu0
  %v1269 = vadd.f32 %v935, %v1069
  %v1270 = vadd.f32 %v936, %v1071
  %v1271 = vadd.f32 %v937, %v1158
  %v1272 = vadd.f32 %v938, %v1160
  %v1273 = vadd.f32 %v939, %v1247
  %v1274 = vadd.f32 %v940, %v1249
  %v1275 = vadd.f32 %v941, %v1075
  %v1276 = vadd.f32 %v942, %v1077
  %v1277 = vadd.f32 %v943, %v1164
  %v1278 = vadd.f32 %v944, %v1166
  %v1279 = vadd.f32 %v945, %v1253
  %v1280 = vadd.f32 %v946, %v1255
  %v1281 = vadd.f32 %v947, %v1081
  %v1282 = vadd.f32 %v948, %v1083
  %v1283 = vadd.f32 %v949, %v1170
  %v1284 = vadd.f32 %v950, %v1172
  %v1285 = vadd.f32 %v951, %v1259
  %v1286 = vadd.f32 %v952, %v1261
  %v1287 = vadd.f32 %v953, %v1087
  %v1288 = vadd.f32 %v954, %v1089
  %v1289 = vadd.f32 %v955, %v1176
  %v1290 = vadd.f32 %v956, %v1178
  %v1291 = vadd.f32 %v957, %v1265
  %v1292 = vadd.f32 %v958, %v1267
  %1293 = vrot.lane.b32.xlu0 %v11, 96
  %v1294 = vpop.permute.xlu0 %1293
  %1295 = vrot.lane.b32.xlu0 %v12, 96
  %v1296 = vpop.permute.xlu0 %1295
  %1297 = vrot.lane.b32.xlu0 %v13, 96
  %v1298 = vpop.permute.xlu0 %1297
  %1299 = vrot.lane.b32.xlu0 %v14, 96
  %v1300 = vpop.permute.xlu0 %1299
  %1301 = vrot.lane.b32.xlu0 %v21, 109
  %v1302 = vpop.permute.xlu0 %1301
  %1303 = vrot.lane.b32.xlu0 %v22, 109
  %v1304 = vpop.permute.xlu0 %1303
  %1305 = vrot.lane.b32.xlu0 %v23, 109
  %v1306 = vpop.permute.xlu0 %1305
  %1307 = vrot.lane.b32.xlu0 %v24, 109
  %v1308 = vpop.permute.xlu0 %1307
  %1309 = vrot.lane.b32.xlu0 %v25, 109
  %v1310 = vpop.permute.xlu0 %1309
  %1311 = vrot.lane.b32.xlu0 %v26, 109
  %v1312 = vpop.permute.xlu0 %1311
  %1313 = vrot.lane.b32.xlu0 %v27, 109
  %v1314 = vpop.permute.xlu0 %1313
  %vm1315 = vcmask 891904
  %v1316 = vsel %vm1315, %v1302, %v1304
  %v1317 = vsel %vm1315, %v1304, %v1306
  %v1318 = vsel %vm1315, %v1306, %v1308
  %v1319 = vsel %vm1315, %v1308, %v1310
  %v1320 = vsel %vm1315, %v1310, %v1312
  %v1321 = vsel %vm1315, %v1312, %v1314
  %v1328 = vsel %vm74, %v1294, 0
  %v1330 = vsel %vm74, %v1296, 0
  %v1332 = vsel %vm74, %v1298, 0
  %v1334 = vsel %vm74, %v1300, 0
  %1336 = vmatprep.subr.mxu0 %v1317
  %1337 = vmatpush1.msra.mxu0 %v1316
  %1338 = vmatprep.subr.mxu0 0.0
  %1339 = vmatpush1.msra.mxu0 0.0
  %1340 = vmatprep.subr.mxu0 0.0
  %1341 = vmatpush1.msra.mxu0 0.0
  %1342 = vmatprep.subr.mxu0 0.0
  %1343 = vmatpush1.msra.mxu0 0.0
  %1344 = vmatprep.subr.mxu0 0.0
  %1345 = vmatpush1.msra.mxu0 0.0
  %1346 = vmatprep.subr.mxu0 0.0
  %1347 = vmatpush1.msra.mxu0 0.0
  %1348 = vmatprep.subr.mxu0 0.0
  %1349 = vmatpush1.msra.mxu0 0.0
  %1350 = vmatprep.subr.mxu0 0.0
  %1351 = vmatpush1.msra.mxu0 0.0
  %1352 = vmatprep.subr.mxu0 0.0
  %1353 = vmatpush1.msra.mxu0 0.0
  %1354 = vmatprep.subr.mxu0 0.0
  %1355 = vmatpush1.msra.mxu0 0.0
  %1356 = vmatprep.subr.mxu0 0.0
  %1357 = vmatpush1.msra.mxu0 0.0
  %1358 = vmatprep.subr.mxu0 0.0
  %1359 = vmatpush1.msra.mxu0 0.0
  %1360 = vmatprep.subr.mxu0 0.0
  %1361 = vmatpush1.msra.mxu0 0.0
  %1362 = vmatprep.subr.mxu0 0.0
  %1363 = vmatpush1.msra.mxu0 0.0
  %1364 = vmatprep.subr.mxu0 0.0
  %1365 = vmatpush1.msra.mxu0 0.0
  %1366 = vmatprep.subr.mxu0 0.0
  %1367 = vmatpush1.msra.mxu0 0.0
  %1368 = vmatprep.subr.mxu0 0.0
  %1369 = vmatpush1.msra.mxu0 0.0
  %1370 = vmatprep.subr.mxu0 0.0
  %1371 = vmatpush1.msra.mxu0 0.0
  %1372 = vmatprep.subr.mxu0 0.0
  %1373 = vmatpush1.msra.mxu0 0.0
  %1374 = vmatprep.subr.mxu0 0.0
  %1375 = vmatpush1.msra.mxu0 0.0
  %1376 = vmatprep.subr.mxu0 0.0
  %1377 = vmatpush1.msra.mxu0 0.0
  %1378 = vmatprep.subr.mxu0 0.0
  %1379 = vmatpush1.msra.mxu0 0.0
  %1380 = vmatprep.subr.mxu0 0.0
  %1381 = vmatpush1.msra.mxu0 0.0
  %1382 = vmatprep.subr.mxu0 0.0
  %1383 = vmatpush1.msra.mxu0 0.0
  %1384 = vmatprep.subr.mxu0 0.0
  %1385 = vmatpush1.msra.mxu0 0.0
  %1386 = vmatprep.subr.mxu0 0.0
  %1387 = vmatpush1.msra.mxu0 0.0
  %1388 = vmatprep.subr.mxu0 0.0
  %1389 = vmatpush1.msra.mxu0 0.0
  %1390 = vmatprep.subr.mxu0 0.0
  %1391 = vmatpush1.msra.mxu0 0.0
  %1392 = vmatprep.subr.mxu0 0.0
  %1393 = vmatpush1.msra.mxu0 0.0
  %1394 = vmatprep.subr.mxu0 0.0
  %1395 = vmatpush1.msra.mxu0 0.0
  %1396 = vmatprep.subr.mxu0 0.0
  %1397 = vmatpush1.msra.mxu0 0.0
  %1398 = vmatprep.subr.mxu0 0.0
  %1399 = vmatpush1.msra.mxu0 0.0
  %1400 = vmatprep.mubr.f32.mxu0 0.0
  %1401 = vmatmul.mubr.f32.gmra.mrb[0].mxu0 %v1328
  %v1402 = vpop.f32.mrb[0].mxu0
  %v1403 = vadd.f32 0.0, %v1402
  %v1404 = vpop.f32.mrb[0].mxu0
  %v1405 = vadd.f32 0.0, %v1404
  %1406 = vmatprep.mubr.f32.mxu0 0.0
  %1407 = vmatmul.mubr.f32.gmra.mrb[0].mxu0 %v1330
  %v1408 = vpop.f32.mrb[0].mxu0
  %v1409 = vadd.f32 0.0, %v1408
  %v1410 = vpop.f32.mrb[0].mxu0
  %v1411 = vadd.f32 0.0, %v1410
  %1412 = vmatprep.mubr.f32.mxu0 0.0
  %1413 = vmatmul.mubr.f32.gmra.mrb[0].mxu0 %v1332
  %v1414 = vpop.f32.mrb[0].mxu0
  %v1415 = vadd.f32 0.0, %v1414
  %v1416 = vpop.f32.mrb[0].mxu0
  %v1417 = vadd.f32 0.0, %v1416
  %1418 = vmatprep.mubr.f32.mxu0 0.0
  %1419 = vmatmul.mubr.f32.gmra.mrb[0].mxu0 %v1334
  %v1420 = vpop.f32.mrb[0].mxu0
  %v1421 = vadd.f32 0.0, %v1420
  %v1422 = vpop.f32.mrb[0].mxu0
  %v1423 = vadd.f32 0.0, %v1422
  %1424 = vdwg.mxu0
  %1425 = vmatprep.subr.mxu0 %v1319
  %1426 = vmatpush1.msra.mxu0 %v1318
  %1427 = vmatprep.subr.mxu0 0.0
  %1428 = vmatpush1.msra.mxu0 0.0
  %1429 = vmatprep.subr.mxu0 0.0
  %1430 = vmatpush1.msra.mxu0 0.0
  %1431 = vmatprep.subr.mxu0 0.0
  %1432 = vmatpush1.msra.mxu0 0.0
  %1433 = vmatprep.subr.mxu0 0.0
  %1434 = vmatpush1.msra.mxu0 0.0
  %1435 = vmatprep.subr.mxu0 0.0
  %1436 = vmatpush1.msra.mxu0 0.0
  %1437 = vmatprep.subr.mxu0 0.0
  %1438 = vmatpush1.msra.mxu0 0.0
  %1439 = vmatprep.subr.mxu0 0.0
  %1440 = vmatpush1.msra.mxu0 0.0
  %1441 = vmatprep.subr.mxu0 0.0
  %1442 = vmatpush1.msra.mxu0 0.0
  %1443 = vmatprep.subr.mxu0 0.0
  %1444 = vmatpush1.msra.mxu0 0.0
  %1445 = vmatprep.subr.mxu0 0.0
  %1446 = vmatpush1.msra.mxu0 0.0
  %1447 = vmatprep.subr.mxu0 0.0
  %1448 = vmatpush1.msra.mxu0 0.0
  %1449 = vmatprep.subr.mxu0 0.0
  %1450 = vmatpush1.msra.mxu0 0.0
  %1451 = vmatprep.subr.mxu0 0.0
  %1452 = vmatpush1.msra.mxu0 0.0
  %1453 = vmatprep.subr.mxu0 0.0
  %1454 = vmatpush1.msra.mxu0 0.0
  %1455 = vmatprep.subr.mxu0 0.0
  %1456 = vmatpush1.msra.mxu0 0.0
  %1457 = vmatprep.subr.mxu0 0.0
  %1458 = vmatpush1.msra.mxu0 0.0
  %1459 = vmatprep.subr.mxu0 0.0
  %1460 = vmatpush1.msra.mxu0 0.0
  %1461 = vmatprep.subr.mxu0 0.0
  %1462 = vmatpush1.msra.mxu0 0.0
  %1463 = vmatprep.subr.mxu0 0.0
  %1464 = vmatpush1.msra.mxu0 0.0
  %1465 = vmatprep.subr.mxu0 0.0
  %1466 = vmatpush1.msra.mxu0 0.0
  %1467 = vmatprep.subr.mxu0 0.0
  %1468 = vmatpush1.msra.mxu0 0.0
  %1469 = vmatprep.subr.mxu0 0.0
  %1470 = vmatpush1.msra.mxu0 0.0
  %1471 = vmatprep.subr.mxu0 0.0
  %1472 = vmatpush1.msra.mxu0 0.0
  %1473 = vmatprep.subr.mxu0 0.0
  %1474 = vmatpush1.msra.mxu0 0.0
  %1475 = vmatprep.subr.mxu0 0.0
  %1476 = vmatpush1.msra.mxu0 0.0
  %1477 = vmatprep.subr.mxu0 0.0
  %1478 = vmatpush1.msra.mxu0 0.0
  %1479 = vmatprep.subr.mxu0 0.0
  %1480 = vmatpush1.msra.mxu0 0.0
  %1481 = vmatprep.subr.mxu0 0.0
  %1482 = vmatpush1.msra.mxu0 0.0
  %1483 = vmatprep.subr.mxu0 0.0
  %1484 = vmatpush1.msra.mxu0 0.0
  %1485 = vmatprep.subr.mxu0 0.0
  %1486 = vmatpush1.msra.mxu0 0.0
  %1487 = vmatprep.subr.mxu0 0.0
  %1488 = vmatpush1.msra.mxu0 0.0
  %1489 = vmatprep.mubr.f32.mxu0 0.0
  %1490 = vmatmul.mubr.f32.gmra.mrb[0].mxu0 %v1328
  %v1491 = vpop.f32.mrb[0].mxu0
  %v1492 = vadd.f32 0.0, %v1491
  %v1493 = vpop.f32.mrb[0].mxu0
  %v1494 = vadd.f32 0.0, %v1493
  %1495 = vmatprep.mubr.f32.mxu0 0.0
  %1496 = vmatmul.mubr.f32.gmra.mrb[0].mxu0 %v1330
  %v1497 = vpop.f32.mrb[0].mxu0
  %v1498 = vadd.f32 0.0, %v1497
  %v1499 = vpop.f32.mrb[0].mxu0
  %v1500 = vadd.f32 0.0, %v1499
  %1501 = vmatprep.mubr.f32.mxu0 0.0
  %1502 = vmatmul.mubr.f32.gmra.mrb[0].mxu0 %v1332
  %v1503 = vpop.f32.mrb[0].mxu0
  %v1504 = vadd.f32 0.0, %v1503
  %v1505 = vpop.f32.mrb[0].mxu0
  %v1506 = vadd.f32 0.0, %v1505
  %1507 = vmatprep.mubr.f32.mxu0 0.0
  %1508 = vmatmul.mubr.f32.gmra.mrb[0].mxu0 %v1334
  %v1509 = vpop.f32.mrb[0].mxu0
  %v1510 = vadd.f32 0.0, %v1509
  %v1511 = vpop.f32.mrb[0].mxu0
  %v1512 = vadd.f32 0.0, %v1511
  %1513 = vdwg.mxu0
  %1514 = vmatprep.subr.mxu0 %v1321
  %1515 = vmatpush1.msra.mxu0 %v1320
  %1516 = vmatprep.subr.mxu0 0.0
  %1517 = vmatpush1.msra.mxu0 0.0
  %1518 = vmatprep.subr.mxu0 0.0
  %1519 = vmatpush1.msra.mxu0 0.0
  %1520 = vmatprep.subr.mxu0 0.0
  %1521 = vmatpush1.msra.mxu0 0.0
  %1522 = vmatprep.subr.mxu0 0.0
  %1523 = vmatpush1.msra.mxu0 0.0
  %1524 = vmatprep.subr.mxu0 0.0
  %1525 = vmatpush1.msra.mxu0 0.0
  %1526 = vmatprep.subr.mxu0 0.0
  %1527 = vmatpush1.msra.mxu0 0.0
  %1528 = vmatprep.subr.mxu0 0.0
  %1529 = vmatpush1.msra.mxu0 0.0
  %1530 = vmatprep.subr.mxu0 0.0
  %1531 = vmatpush1.msra.mxu0 0.0
  %1532 = vmatprep.subr.mxu0 0.0
  %1533 = vmatpush1.msra.mxu0 0.0
  %1534 = vmatprep.subr.mxu0 0.0
  %1535 = vmatpush1.msra.mxu0 0.0
  %1536 = vmatprep.subr.mxu0 0.0
  %1537 = vmatpush1.msra.mxu0 0.0
  %1538 = vmatprep.subr.mxu0 0.0
  %1539 = vmatpush1.msra.mxu0 0.0
  %1540 = vmatprep.subr.mxu0 0.0
  %1541 = vmatpush1.msra.mxu0 0.0
  %1542 = vmatprep.subr.mxu0 0.0
  %1543 = vmatpush1.msra.mxu0 0.0
  %1544 = vmatprep.subr.mxu0 0.0
  %1545 = vmatpush1.msra.mxu0 0.0
  %1546 = vmatprep.subr.mxu0 0.0
  %1547 = vmatpush1.msra.mxu0 0.0
  %1548 = vmatprep.subr.mxu0 0.0
  %1549 = vmatpush1.msra.mxu0 0.0
  %1550 = vmatprep.subr.mxu0 0.0
  %1551 = vmatpush1.msra.mxu0 0.0
  %1552 = vmatprep.subr.mxu0 0.0
  %1553 = vmatpush1.msra.mxu0 0.0
  %1554 = vmatprep.subr.mxu0 0.0
  %1555 = vmatpush1.msra.mxu0 0.0
  %1556 = vmatprep.subr.mxu0 0.0
  %1557 = vmatpush1.msra.mxu0 0.0
  %1558 = vmatprep.subr.mxu0 0.0
  %1559 = vmatpush1.msra.mxu0 0.0
  %1560 = vmatprep.subr.mxu0 0.0
  %1561 = vmatpush1.msra.mxu0 0.0
  %1562 = vmatprep.subr.mxu0 0.0
  %1563 = vmatpush1.msra.mxu0 0.0
  %1564 = vmatprep.subr.mxu0 0.0
  %1565 = vmatpush1.msra.mxu0 0.0
  %1566 = vmatprep.subr.mxu0 0.0
  %1567 = vmatpush1.msra.mxu0 0.0
  %1568 = vmatprep.subr.mxu0 0.0
  %1569 = vmatpush1.msra.mxu0 0.0
  %1570 = vmatprep.subr.mxu0 0.0
  %1571 = vmatpush1.msra.mxu0 0.0
  %1572 = vmatprep.subr.mxu0 0.0
  %1573 = vmatpush1.msra.mxu0 0.0
  %1574 = vmatprep.subr.mxu0 0.0
  %1575 = vmatpush1.msra.mxu0 0.0
  %1576 = vmatprep.subr.mxu0 0.0
  %1577 = vmatpush1.msra.mxu0 0.0
  %1578 = vmatprep.mubr.f32.mxu0 0.0
  %1579 = vmatmul.mubr.f32.gmra.mrb[0].mxu0 %v1328
  %v1580 = vpop.f32.mrb[0].mxu0
  %v1581 = vadd.f32 0.0, %v1580
  %v1582 = vpop.f32.mrb[0].mxu0
  %v1583 = vadd.f32 0.0, %v1582
  %1584 = vmatprep.mubr.f32.mxu0 0.0
  %1585 = vmatmul.mubr.f32.gmra.mrb[0].mxu0 %v1330
  %v1586 = vpop.f32.mrb[0].mxu0
  %v1587 = vadd.f32 0.0, %v1586
  %v1588 = vpop.f32.mrb[0].mxu0
  %v1589 = vadd.f32 0.0, %v1588
  %1590 = vmatprep.mubr.f32.mxu0 0.0
  %1591 = vmatmul.mubr.f32.gmra.mrb[0].mxu0 %v1332
  %v1592 = vpop.f32.mrb[0].mxu0
  %v1593 = vadd.f32 0.0, %v1592
  %v1594 = vpop.f32.mrb[0].mxu0
  %v1595 = vadd.f32 0.0, %v1594
  %1596 = vmatprep.mubr.f32.mxu0 0.0
  %1597 = vmatmul.mubr.f32.gmra.mrb[0].mxu0 %v1334
  %v1598 = vpop.f32.mrb[0].mxu0
  %v1599 = vadd.f32 0.0, %v1598
  %v1600 = vpop.f32.mrb[0].mxu0
  %v1601 = vadd.f32 0.0, %v1600
  %1602 = vdwg.mxu0
  %v1603 = vadd.f32 %v1269, %v1403
  %v1604 = vadd.f32 %v1270, %v1405
  %v1605 = vadd.f32 %v1271, %v1492
  %v1606 = vadd.f32 %v1272, %v1494
  %v1607 = vadd.f32 %v1273, %v1581
  %v1608 = vadd.f32 %v1274, %v1583
  %v1609 = vadd.f32 %v1275, %v1409
  %v1610 = vadd.f32 %v1276, %v1411
  %v1611 = vadd.f32 %v1277, %v1498
  %v1612 = vadd.f32 %v1278, %v1500
  %v1613 = vadd.f32 %v1279, %v1587
  %v1614 = vadd.f32 %v1280, %v1589
  %v1615 = vadd.f32 %v1281, %v1415
  %v1616 = vadd.f32 %v1282, %v1417
  %v1617 = vadd.f32 %v1283, %v1504
  %v1618 = vadd.f32 %v1284, %v1506
  %v1619 = vadd.f32 %v1285, %v1593
  %v1620 = vadd.f32 %v1286, %v1595
  %v1621 = vadd.f32 %v1287, %v1421
  %v1622 = vadd.f32 %v1288, %v1423
  %v1623 = vadd.f32 %v1289, %v1510
  %v1624 = vadd.f32 %v1290, %v1512
  %v1625 = vadd.f32 %v1291, %v1599
  %v1626 = vadd.f32 %v1292, %v1601
  %1627 = vrot.lane.b32.xlu0 %v11, 88
  %v1628 = vpop.permute.xlu0 %1627
  %1629 = vrot.lane.b32.xlu0 %v12, 88
  %v1630 = vpop.permute.xlu0 %1629
  %1631 = vrot.lane.b32.xlu0 %v13, 88
  %v1632 = vpop.permute.xlu0 %1631
  %1633 = vrot.lane.b32.xlu0 %v14, 88
  %v1634 = vpop.permute.xlu0 %1633
  %1635 = vrot.lane.b32.xlu0 %v21, 108
  %v1636 = vpop.permute.xlu0 %1635
  %1637 = vrot.lane.b32.xlu0 %v22, 108
  %v1638 = vpop.permute.xlu0 %1637
  %1639 = vrot.lane.b32.xlu0 %v23, 108
  %v1640 = vpop.permute.xlu0 %1639
  %1641 = vrot.lane.b32.xlu0 %v24, 108
  %v1642 = vpop.permute.xlu0 %1641
  %1643 = vrot.lane.b32.xlu0 %v25, 108
  %v1644 = vpop.permute.xlu0 %1643
  %1645 = vrot.lane.b32.xlu0 %v26, 108
  %v1646 = vpop.permute.xlu0 %1645
  %1647 = vrot.lane.b32.xlu0 %v27, 108
  %v1648 = vpop.permute.xlu0 %1647
  %vm1649 = vcmask 883712
  %v1650 = vsel %vm1649, %v1636, %v1638
  %v1651 = vsel %vm1649, %v1638, %v1640
  %v1652 = vsel %vm1649, %v1640, %v1642
  %v1653 = vsel %vm1649, %v1642, %v1644
  %v1654 = vsel %vm1649, %v1644, %v1646
  %v1655 = vsel %vm1649, %v1646, %v1648
  %v1662 = vsel %vm74, %v1628, 0
  %v1664 = vsel %vm74, %v1630, 0
  %v1666 = vsel %vm74, %v1632, 0
  %v1668 = vsel %vm74, %v1634, 0
  %1670 = vmatprep.subr.mxu0 %v1651
  %1671 = vmatpush1.msra.mxu0 %v1650
  %1672 = vmatprep.subr.mxu0 0.0
  %1673 = vmatpush1.msra.mxu0 0.0
  %1674 = vmatprep.subr.mxu0 0.0
  %1675 = vmatpush1.msra.mxu0 0.0
  %1676 = vmatprep.subr.mxu0 0.0
  %1677 = vmatpush1.msra.mxu0 0.0
  %1678 = vmatprep.subr.mxu0 0.0
  %1679 = vmatpush1.msra.mxu0 0.0
  %1680 = vmatprep.subr.mxu0 0.0
  %1681 = vmatpush1.msra.mxu0 0.0
  %1682 = vmatprep.subr.mxu0 0.0
  %1683 = vmatpush1.msra.mxu0 0.0
  %1684 = vmatprep.subr.mxu0 0.0
  %1685 = vmatpush1.msra.mxu0 0.0
  %1686 = vmatprep.subr.mxu0 0.0
  %1687 = vmatpush1.msra.mxu0 0.0
  %1688 = vmatprep.subr.mxu0 0.0
  %1689 = vmatpush1.msra.mxu0 0.0
  %1690 = vmatprep.subr.mxu0 0.0
  %1691 = vmatpush1.msra.mxu0 0.0
  %1692 = vmatprep.subr.mxu0 0.0
  %1693 = vmatpush1.msra.mxu0 0.0
  %1694 = vmatprep.subr.mxu0 0.0
  %1695 = vmatpush1.msra.mxu0 0.0
  %1696 = vmatprep.subr.mxu0 0.0
  %1697 = vmatpush1.msra.mxu0 0.0
  %1698 = vmatprep.subr.mxu0 0.0
  %1699 = vmatpush1.msra.mxu0 0.0
  %1700 = vmatprep.subr.mxu0 0.0
  %1701 = vmatpush1.msra.mxu0 0.0
  %1702 = vmatprep.subr.mxu0 0.0
  %1703 = vmatpush1.msra.mxu0 0.0
  %1704 = vmatprep.subr.mxu0 0.0
  %1705 = vmatpush1.msra.mxu0 0.0
  %1706 = vmatprep.subr.mxu0 0.0
  %1707 = vmatpush1.msra.mxu0 0.0
  %1708 = vmatprep.subr.mxu0 0.0
  %1709 = vmatpush1.msra.mxu0 0.0
  %1710 = vmatprep.subr.mxu0 0.0
  %1711 = vmatpush1.msra.mxu0 0.0
  %1712 = vmatprep.subr.mxu0 0.0
  %1713 = vmatpush1.msra.mxu0 0.0
  %1714 = vmatprep.subr.mxu0 0.0
  %1715 = vmatpush1.msra.mxu0 0.0
  %1716 = vmatprep.subr.mxu0 0.0
  %1717 = vmatpush1.msra.mxu0 0.0
  %1718 = vmatprep.subr.mxu0 0.0
  %1719 = vmatpush1.msra.mxu0 0.0
  %1720 = vmatprep.subr.mxu0 0.0
  %1721 = vmatpush1.msra.mxu0 0.0
  %1722 = vmatprep.subr.mxu0 0.0
  %1723 = vmatpush1.msra.mxu0 0.0
  %1724 = vmatprep.subr.mxu0 0.0
  %1725 = vmatpush1.msra.mxu0 0.0
  %1726 = vmatprep.subr.mxu0 0.0
  %1727 = vmatpush1.msra.mxu0 0.0
  %1728 = vmatprep.subr.mxu0 0.0
  %1729 = vmatpush1.msra.mxu0 0.0
  %1730 = vmatprep.subr.mxu0 0.0
  %1731 = vmatpush1.msra.mxu0 0.0
  %1732 = vmatprep.subr.mxu0 0.0
  %1733 = vmatpush1.msra.mxu0 0.0
  %1734 = vmatprep.mubr.f32.mxu0 0.0
  %1735 = vmatmul.mubr.f32.gmra.mrb[0].mxu0 %v1662
  %v1736 = vpop.f32.mrb[0].mxu0
  %v1737 = vadd.f32 0.0, %v1736
  %v1738 = vpop.f32.mrb[0].mxu0
  %v1739 = vadd.f32 0.0, %v1738
  %1740 = vmatprep.mubr.f32.mxu0 0.0
  %1741 = vmatmul.mubr.f32.gmra.mrb[0].mxu0 %v1664
  %v1742 = vpop.f32.mrb[0].mxu0
  %v1743 = vadd.f32 0.0, %v1742
  %v1744 = vpop.f32.mrb[0].mxu0
  %v1745 = vadd.f32 0.0, %v1744
  %1746 = vmatprep.mubr.f32.mxu0 0.0
  %1747 = vmatmul.mubr.f32.gmra.mrb[0].mxu0 %v1666
  %v1748 = vpop.f32.mrb[0].mxu0
  %v1749 = vadd.f32 0.0, %v1748
  %v1750 = vpop.f32.mrb[0].mxu0
  %v1751 = vadd.f32 0.0, %v1750
  %1752 = vmatprep.mubr.f32.mxu0 0.0
  %1753 = vmatmul.mubr.f32.gmra.mrb[0].mxu0 %v1668
  %v1754 = vpop.f32.mrb[0].mxu0
  %v1755 = vadd.f32 0.0, %v1754
  %v1756 = vpop.f32.mrb[0].mxu0
  %v1757 = vadd.f32 0.0, %v1756
  %1758 = vdwg.mxu0
  %1759 = vmatprep.subr.mxu0 %v1653
  %1760 = vmatpush1.msra.mxu0 %v1652
  %1761 = vmatprep.subr.mxu0 0.0
  %1762 = vmatpush1.msra.mxu0 0.0
  %1763 = vmatprep.subr.mxu0 0.0
  %1764 = vmatpush1.msra.mxu0 0.0
  %1765 = vmatprep.subr.mxu0 0.0
  %1766 = vmatpush1.msra.mxu0 0.0
  %1767 = vmatprep.subr.mxu0 0.0
  %1768 = vmatpush1.msra.mxu0 0.0
  %1769 = vmatprep.subr.mxu0 0.0
  %1770 = vmatpush1.msra.mxu0 0.0
  %1771 = vmatprep.subr.mxu0 0.0
  %1772 = vmatpush1.msra.mxu0 0.0
  %1773 = vmatprep.subr.mxu0 0.0
  %1774 = vmatpush1.msra.mxu0 0.0
  %1775 = vmatprep.subr.mxu0 0.0
  %1776 = vmatpush1.msra.mxu0 0.0
  %1777 = vmatprep.subr.mxu0 0.0
  %1778 = vmatpush1.msra.mxu0 0.0
  %1779 = vmatprep.subr.mxu0 0.0
  %1780 = vmatpush1.msra.mxu0 0.0
  %1781 = vmatprep.subr.mxu0 0.0
  %1782 = vmatpush1.msra.mxu0 0.0
  %1783 = vmatprep.subr.mxu0 0.0
  %1784 = vmatpush1.msra.mxu0 0.0
  %1785 = vmatprep.subr.mxu0 0.0
  %1786 = vmatpush1.msra.mxu0 0.0
  %1787 = vmatprep.subr.mxu0 0.0
  %1788 = vmatpush1.msra.mxu0 0.0
  %1789 = vmatprep.subr.mxu0 0.0
  %1790 = vmatpush1.msra.mxu0 0.0
  %1791 = vmatprep.subr.mxu0 0.0
  %1792 = vmatpush1.msra.mxu0 0.0
  %1793 = vmatprep.subr.mxu0 0.0
  %1794 = vmatpush1.msra.mxu0 0.0
  %1795 = vmatprep.subr.mxu0 0.0
  %1796 = vmatpush1.msra.mxu0 0.0
  %1797 = vmatprep.subr.mxu0 0.0
  %1798 = vmatpush1.msra.mxu0 0.0
  %1799 = vmatprep.subr.mxu0 0.0
  %1800 = vmatpush1.msra.mxu0 0.0
  %1801 = vmatprep.subr.mxu0 0.0
  %1802 = vmatpush1.msra.mxu0 0.0
  %1803 = vmatprep.subr.mxu0 0.0
  %1804 = vmatpush1.msra.mxu0 0.0
  %1805 = vmatprep.subr.mxu0 0.0
  %1806 = vmatpush1.msra.mxu0 0.0
  %1807 = vmatprep.subr.mxu0 0.0
  %1808 = vmatpush1.msra.mxu0 0.0
  %1809 = vmatprep.subr.mxu0 0.0
  %1810 = vmatpush1.msra.mxu0 0.0
  %1811 = vmatprep.subr.mxu0 0.0
  %1812 = vmatpush1.msra.mxu0 0.0
  %1813 = vmatprep.subr.mxu0 0.0
  %1814 = vmatpush1.msra.mxu0 0.0
  %1815 = vmatprep.subr.mxu0 0.0
  %1816 = vmatpush1.msra.mxu0 0.0
  %1817 = vmatprep.subr.mxu0 0.0
  %1818 = vmatpush1.msra.mxu0 0.0
  %1819 = vmatprep.subr.mxu0 0.0
  %1820 = vmatpush1.msra.mxu0 0.0
  %1821 = vmatprep.subr.mxu0 0.0
  %1822 = vmatpush1.msra.mxu0 0.0
  %1823 = vmatprep.mubr.f32.mxu0 0.0
  %1824 = vmatmul.mubr.f32.gmra.mrb[0].mxu0 %v1662
  %v1825 = vpop.f32.mrb[0].mxu0
  %v1826 = vadd.f32 0.0, %v1825
  %v1827 = vpop.f32.mrb[0].mxu0
  %v1828 = vadd.f32 0.0, %v1827
  %1829 = vmatprep.mubr.f32.mxu0 0.0
  %1830 = vmatmul.mubr.f32.gmra.mrb[0].mxu0 %v1664
  %v1831 = vpop.f32.mrb[0].mxu0
  %v1832 = vadd.f32 0.0, %v1831
  %v1833 = vpop.f32.mrb[0].mxu0
  %v1834 = vadd.f32 0.0, %v1833
  %1835 = vmatprep.mubr.f32.mxu0 0.0
  %1836 = vmatmul.mubr.f32.gmra.mrb[0].mxu0 %v1666
  %v1837 = vpop.f32.mrb[0].mxu0
  %v1838 = vadd.f32 0.0, %v1837
  %v1839 = vpop.f32.mrb[0].mxu0
  %v1840 = vadd.f32 0.0, %v1839
  %1841 = vmatprep.mubr.f32.mxu0 0.0
  %1842 = vmatmul.mubr.f32.gmra.mrb[0].mxu0 %v1668
  %v1843 = vpop.f32.mrb[0].mxu0
  %v1844 = vadd.f32 0.0, %v1843
  %v1845 = vpop.f32.mrb[0].mxu0
  %v1846 = vadd.f32 0.0, %v1845
  %1847 = vdwg.mxu0
  %1848 = vmatprep.subr.mxu0 %v1655
  %1849 = vmatpush1.msra.mxu0 %v1654
  %1850 = vmatprep.subr.mxu0 0.0
  %1851 = vmatpush1.msra.mxu0 0.0
  %1852 = vmatprep.subr.mxu0 0.0
  %1853 = vmatpush1.msra.mxu0 0.0
  %1854 = vmatprep.subr.mxu0 0.0
  %1855 = vmatpush1.msra.mxu0 0.0
  %1856 = vmatprep.subr.mxu0 0.0
  %1857 = vmatpush1.msra.mxu0 0.0
  %1858 = vmatprep.subr.mxu0 0.0
  %1859 = vmatpush1.msra.mxu0 0.0
  %1860 = vmatprep.subr.mxu0 0.0
  %1861 = vmatpush1.msra.mxu0 0.0
  %1862 = vmatprep.subr.mxu0 0.0
  %1863 = vmatpush1.msra.mxu0 0.0
  %1864 = vmatprep.subr.mxu0 0.0
  %1865 = vmatpush1.msra.mxu0 0.0
  %1866 = vmatprep.subr.mxu0 0.0
  %1867 = vmatpush1.msra.mxu0 0.0
  %1868 = vmatprep.subr.mxu0 0.0
  %1869 = vmatpush1.msra.mxu0 0.0
  %1870 = vmatprep.subr.mxu0 0.0
  %1871 = vmatpush1.msra.mxu0 0.0
  %1872 = vmatprep.subr.mxu0 0.0
  %1873 = vmatpush1.msra.mxu0 0.0
  %1874 = vmatprep.subr.mxu0 0.0
  %1875 = vmatpush1.msra.mxu0 0.0
  %1876 = vmatprep.subr.mxu0 0.0
  %1877 = vmatpush1.msra.mxu0 0.0
  %1878 = vmatprep.subr.mxu0 0.0
  %1879 = vmatpush1.msra.mxu0 0.0
  %1880 = vmatprep.subr.mxu0 0.0
  %1881 = vmatpush1.msra.mxu0 0.0
  %1882 = vmatprep.subr.mxu0 0.0
  %1883 = vmatpush1.msra.mxu0 0.0
  %1884 = vmatprep.subr.mxu0 0.0
  %1885 = vmatpush1.msra.mxu0 0.0
  %1886 = vmatprep.subr.mxu0 0.0
  %1887 = vmatpush1.msra.mxu0 0.0
  %1888 = vmatprep.subr.mxu0 0.0
  %1889 = vmatpush1.msra.mxu0 0.0
  %1890 = vmatprep.subr.mxu0 0.0
  %1891 = vmatpush1.msra.mxu0 0.0
  %1892 = vmatprep.subr.mxu0 0.0
  %1893 = vmatpush1.msra.mxu0 0.0
  %1894 = vmatprep.subr.mxu0 0.0
  %1895 = vmatpush1.msra.mxu0 0.0
  %1896 = vmatprep.subr.mxu0 0.0
  %1897 = vmatpush1.msra.mxu0 0.0
  %1898 = vmatprep.subr.mxu0 0.0
  %1899 = vmatpush1.msra.mxu0 0.0
  %1900 = vmatprep.subr.mxu0 0.0
  %1901 = vmatpush1.msra.mxu0 0.0
  %1902 = vmatprep.subr.mxu0 0.0
  %1903 = vmatpush1.msra.mxu0 0.0
  %1904 = vmatprep.subr.mxu0 0.0
  %1905 = vmatpush1.msra.mxu0 0.0
  %1906 = vmatprep.subr.mxu0 0.0
  %1907 = vmatpush1.msra.mxu0 0.0
  %1908 = vmatprep.subr.mxu0 0.0
  %1909 = vmatpush1.msra.mxu0 0.0
  %1910 = vmatprep.subr.mxu0 0.0
  %1911 = vmatpush1.msra.mxu0 0.0
  %1912 = vmatprep.mubr.f32.mxu0 0.0
  %1913 = vmatmul.mubr.f32.gmra.mrb[0].mxu0 %v1662
  %v1914 = vpop.f32.mrb[0].mxu0
  %v1915 = vadd.f32 0.0, %v1914
  %v1916 = vpop.f32.mrb[0].mxu0
  %v1917 = vadd.f32 0.0, %v1916
  %1918 = vmatprep.mubr.f32.mxu0 0.0
  %1919 = vmatmul.mubr.f32.gmra.mrb[0].mxu0 %v1664
  %v1920 = vpop.f32.mrb[0].mxu0
  %v1921 = vadd.f32 0.0, %v1920
  %v1922 = vpop.f32.mrb[0].mxu0
  %v1923 = vadd.f32 0.0, %v1922
  %1924 = vmatprep.mubr.f32.mxu0 0.0
  %1925 = vmatmul.mubr.f32.gmra.mrb[0].mxu0 %v1666
  %v1926 = vpop.f32.mrb[0].mxu0
  %v1927 = vadd.f32 0.0, %v1926
  %v1928 = vpop.f32.mrb[0].mxu0
  %v1929 = vadd.f32 0.0, %v1928
  %1930 = vmatprep.mubr.f32.mxu0 0.0
  %1931 = vmatmul.mubr.f32.gmra.mrb[0].mxu0 %v1668
  %v1932 = vpop.f32.mrb[0].mxu0
  %v1933 = vadd.f32 0.0, %v1932
  %v1934 = vpop.f32.mrb[0].mxu0
  %v1935 = vadd.f32 0.0, %v1934
  %1936 = vdwg.mxu0
  %v1937 = vadd.f32 %v1603, %v1737
  %v1938 = vadd.f32 %v1604, %v1739
  %v1939 = vadd.f32 %v1605, %v1826
  %v1940 = vadd.f32 %v1606, %v1828
  %v1941 = vadd.f32 %v1607, %v1915
  %v1942 = vadd.f32 %v1608, %v1917
  %v1943 = vadd.f32 %v1609, %v1743
  %v1944 = vadd.f32 %v1610, %v1745
  %v1945 = vadd.f32 %v1611, %v1832
  %v1946 = vadd.f32 %v1612, %v1834
  %v1947 = vadd.f32 %v1613, %v1921
  %v1948 = vadd.f32 %v1614, %v1923
  %v1949 = vadd.f32 %v1615, %v1749
  %v1950 = vadd.f32 %v1616, %v1751
  %v1951 = vadd.f32 %v1617, %v1838
  %v1952 = vadd.f32 %v1618, %v1840
  %v1953 = vadd.f32 %v1619, %v1927
  %v1954 = vadd.f32 %v1620, %v1929
  %v1955 = vadd.f32 %v1621, %v1755
  %v1956 = vadd.f32 %v1622, %v1757
  %v1957 = vadd.f32 %v1623, %v1844
  %v1958 = vadd.f32 %v1624, %v1846
  %v1959 = vadd.f32 %v1625, %v1933
  %v1960 = vadd.f32 %v1626, %v1935
  %1961 = vrot.lane.b32.xlu0 %v11, 80
  %v1962 = vpop.permute.xlu0 %1961
  %1963 = vrot.lane.b32.xlu0 %v12, 80
  %v1964 = vpop.permute.xlu0 %1963
  %1965 = vrot.lane.b32.xlu0 %v13, 80
  %v1966 = vpop.permute.xlu0 %1965
  %1967 = vrot.lane.b32.xlu0 %v14, 80
  %v1968 = vpop.permute.xlu0 %1967
  %1969 = vrot.lane.b32.xlu0 %v21, 92
  %v1970 = vpop.permute.xlu0 %1969
  %1971 = vrot.lane.b32.xlu0 %v22, 92
  %v1972 = vpop.permute.xlu0 %1971
  %1973 = vrot.lane.b32.xlu0 %v23, 92
  %v1974 = vpop.permute.xlu0 %1973
  %1975 = vrot.lane.b32.xlu0 %v24, 92
  %v1976 = vpop.permute.xlu0 %1975
  %1977 = vrot.lane.b32.xlu0 %v25, 92
  %v1978 = vpop.permute.xlu0 %1977
  %1979 = vrot.lane.b32.xlu0 %v26, 92
  %v1980 = vpop.permute.xlu0 %1979
  %1981 = vrot.lane.b32.xlu0 %v27, 92
  %v1982 = vpop.permute.xlu0 %1981
  %vm1983 = vcmask 752640
  %v1984 = vsel %vm1983, %v1970, %v1972
  %v1985 = vsel %vm1983, %v1972, %v1974
  %v1986 = vsel %vm1983, %v1974, %v1976
  %v1987 = vsel %vm1983, %v1976, %v1978
  %v1988 = vsel %vm1983, %v1978, %v1980
  %v1989 = vsel %vm1983, %v1980, %v1982
  %v1996 = vsel %vm74, %v1962, 0
  %v1998 = vsel %vm74, %v1964, 0
  %v2000 = vsel %vm74, %v1966, 0
  %v2002 = vsel %vm74, %v1968, 0
  %2004 = vmatprep.subr.mxu0 %v1985
  %2005 = vmatpush1.msra.mxu0 %v1984
  %2006 = vmatprep.subr.mxu0 0.0
  %2007 = vmatpush1.msra.mxu0 0.0
  %2008 = vmatprep.subr.mxu0 0.0
  %2009 = vmatpush1.msra.mxu0 0.0
  %2010 = vmatprep.subr.mxu0 0.0
  %2011 = vmatpush1.msra.mxu0 0.0
  %2012 = vmatprep.subr.mxu0 0.0
  %2013 = vmatpush1.msra.mxu0 0.0
  %2014 = vmatprep.subr.mxu0 0.0
  %2015 = vmatpush1.msra.mxu0 0.0
  %2016 = vmatprep.subr.mxu0 0.0
  %2017 = vmatpush1.msra.mxu0 0.0
  %2018 = vmatprep.subr.mxu0 0.0
  %2019 = vmatpush1.msra.mxu0 0.0
  %2020 = vmatprep.subr.mxu0 0.0
  %2021 = vmatpush1.msra.mxu0 0.0
  %2022 = vmatprep.subr.mxu0 0.0
  %2023 = vmatpush1.msra.mxu0 0.0
  %2024 = vmatprep.subr.mxu0 0.0
  %2025 = vmatpush1.msra.mxu0 0.0
  %2026 = vmatprep.subr.mxu0 0.0
  %2027 = vmatpush1.msra.mxu0 0.0
  %2028 = vmatprep.subr.mxu0 0.0
  %2029 = vmatpush1.msra.mxu0 0.0
  %2030 = vmatprep.subr.mxu0 0.0
  %2031 = vmatpush1.msra.mxu0 0.0
  %2032 = vmatprep.subr.mxu0 0.0
  %2033 = vmatpush1.msra.mxu0 0.0
  %2034 = vmatprep.subr.mxu0 0.0
  %2035 = vmatpush1.msra.mxu0 0.0
  %2036 = vmatprep.subr.mxu0 0.0
  %2037 = vmatpush1.msra.mxu0 0.0
  %2038 = vmatprep.subr.mxu0 0.0
  %2039 = vmatpush1.msra.mxu0 0.0
  %2040 = vmatprep.subr.mxu0 0.0
  %2041 = vmatpush1.msra.mxu0 0.0
  %2042 = vmatprep.subr.mxu0 0.0
  %2043 = vmatpush1.msra.mxu0 0.0
  %2044 = vmatprep.subr.mxu0 0.0
  %2045 = vmatpush1.msra.mxu0 0.0
  %2046 = vmatprep.subr.mxu0 0.0
  %2047 = vmatpush1.msra.mxu0 0.0
  %2048 = vmatprep.subr.mxu0 0.0
  %2049 = vmatpush1.msra.mxu0 0.0
  %2050 = vmatprep.subr.mxu0 0.0
  %2051 = vmatpush1.msra.mxu0 0.0
  %2052 = vmatprep.subr.mxu0 0.0
  %2053 = vmatpush1.msra.mxu0 0.0
  %2054 = vmatprep.subr.mxu0 0.0
  %2055 = vmatpush1.msra.mxu0 0.0
  %2056 = vmatprep.subr.mxu0 0.0
  %2057 = vmatpush1.msra.mxu0 0.0
  %2058 = vmatprep.subr.mxu0 0.0
  %2059 = vmatpush1.msra.mxu0 0.0
  %2060 = vmatprep.subr.mxu0 0.0
  %2061 = vmatpush1.msra.mxu0 0.0
  %2062 = vmatprep.subr.mxu0 0.0
  %2063 = vmatpush1.msra.mxu0 0.0
  %2064 = vmatprep.subr.mxu0 0.0
  %2065 = vmatpush1.msra.mxu0 0.0
  %2066 = vmatprep.subr.mxu0 0.0
  %2067 = vmatpush1.msra.mxu0 0.0
  %2068 = vmatprep.mubr.f32.mxu0 0.0
  %2069 = vmatmul.mubr.f32.gmra.mrb[0].mxu0 %v1996
  %v2070 = vpop.f32.mrb[0].mxu0
  %v2071 = vadd.f32 0.0, %v2070
  %v2072 = vpop.f32.mrb[0].mxu0
  %v2073 = vadd.f32 0.0, %v2072
  %2074 = vmatprep.mubr.f32.mxu0 0.0
  %2075 = vmatmul.mubr.f32.gmra.mrb[0].mxu0 %v1998
  %v2076 = vpop.f32.mrb[0].mxu0
  %v2077 = vadd.f32 0.0, %v2076
  %v2078 = vpop.f32.mrb[0].mxu0
  %v2079 = vadd.f32 0.0, %v2078
  %2080 = vmatprep.mubr.f32.mxu0 0.0
  %2081 = vmatmul.mubr.f32.gmra.mrb[0].mxu0 %v2000
  %v2082 = vpop.f32.mrb[0].mxu0
  %v2083 = vadd.f32 0.0, %v2082
  %v2084 = vpop.f32.mrb[0].mxu0
  %v2085 = vadd.f32 0.0, %v2084
  %2086 = vmatprep.mubr.f32.mxu0 0.0
  %2087 = vmatmul.mubr.f32.gmra.mrb[0].mxu0 %v2002
  %v2088 = vpop.f32.mrb[0].mxu0
  %v2089 = vadd.f32 0.0, %v2088
  %v2090 = vpop.f32.mrb[0].mxu0
  %v2091 = vadd.f32 0.0, %v2090
  %2092 = vdwg.mxu0
  %2093 = vmatprep.subr.mxu0 %v1987
  %2094 = vmatpush1.msra.mxu0 %v1986
  %2095 = vmatprep.subr.mxu0 0.0
  %2096 = vmatpush1.msra.mxu0 0.0
  %2097 = vmatprep.subr.mxu0 0.0
  %2098 = vmatpush1.msra.mxu0 0.0
  %2099 = vmatprep.subr.mxu0 0.0
  %2100 = vmatpush1.msra.mxu0 0.0
  %2101 = vmatprep.subr.mxu0 0.0
  %2102 = vmatpush1.msra.mxu0 0.0
  %2103 = vmatprep.subr.mxu0 0.0
  %2104 = vmatpush1.msra.mxu0 0.0
  %2105 = vmatprep.subr.mxu0 0.0
  %2106 = vmatpush1.msra.mxu0 0.0
  %2107 = vmatprep.subr.mxu0 0.0
  %2108 = vmatpush1.msra.mxu0 0.0
  %2109 = vmatprep.subr.mxu0 0.0
  %2110 = vmatpush1.msra.mxu0 0.0
  %2111 = vmatprep.subr.mxu0 0.0
  %2112 = vmatpush1.msra.mxu0 0.0
  %2113 = vmatprep.subr.mxu0 0.0
  %2114 = vmatpush1.msra.mxu0 0.0
  %2115 = vmatprep.subr.mxu0 0.0
  %2116 = vmatpush1.msra.mxu0 0.0
  %2117 = vmatprep.subr.mxu0 0.0
  %2118 = vmatpush1.msra.mxu0 0.0
  %2119 = vmatprep.subr.mxu0 0.0
  %2120 = vmatpush1.msra.mxu0 0.0
  %2121 = vmatprep.subr.mxu0 0.0
  %2122 = vmatpush1.msra.mxu0 0.0
  %2123 = vmatprep.subr.mxu0 0.0
  %2124 = vmatpush1.msra.mxu0 0.0
  %2125 = vmatprep.subr.mxu0 0.0
  %2126 = vmatpush1.msra.mxu0 0.0
  %2127 = vmatprep.subr.mxu0 0.0
  %2128 = vmatpush1.msra.mxu0 0.0
  %2129 = vmatprep.subr.mxu0 0.0
  %2130 = vmatpush1.msra.mxu0 0.0
  %2131 = vmatprep.subr.mxu0 0.0
  %2132 = vmatpush1.msra.mxu0 0.0
  %2133 = vmatprep.subr.mxu0 0.0
  %2134 = vmatpush1.msra.mxu0 0.0
  %2135 = vmatprep.subr.mxu0 0.0
  %2136 = vmatpush1.msra.mxu0 0.0
  %2137 = vmatprep.subr.mxu0 0.0
  %2138 = vmatpush1.msra.mxu0 0.0
  %2139 = vmatprep.subr.mxu0 0.0
  %2140 = vmatpush1.msra.mxu0 0.0
  %2141 = vmatprep.subr.mxu0 0.0
  %2142 = vmatpush1.msra.mxu0 0.0
  %2143 = vmatprep.subr.mxu0 0.0
  %2144 = vmatpush1.msra.mxu0 0.0
  %2145 = vmatprep.subr.mxu0 0.0
  %2146 = vmatpush1.msra.mxu0 0.0
  %2147 = vmatprep.subr.mxu0 0.0
  %2148 = vmatpush1.msra.mxu0 0.0
  %2149 = vmatprep.subr.mxu0 0.0
  %2150 = vmatpush1.msra.mxu0 0.0
  %2151 = vmatprep.subr.mxu0 0.0
  %2152 = vmatpush1.msra.mxu0 0.0
  %2153 = vmatprep.subr.mxu0 0.0
  %2154 = vmatpush1.msra.mxu0 0.0
  %2155 = vmatprep.subr.mxu0 0.0
  %2156 = vmatpush1.msra.mxu0 0.0
  %2157 = vmatprep.mubr.f32.mxu0 0.0
  %2158 = vmatmul.mubr.f32.gmra.mrb[0].mxu0 %v1996
  %v2159 = vpop.f32.mrb[0].mxu0
  %v2160 = vadd.f32 0.0, %v2159
  %v2161 = vpop.f32.mrb[0].mxu0
  %v2162 = vadd.f32 0.0, %v2161
  %2163 = vmatprep.mubr.f32.mxu0 0.0
  %2164 = vmatmul.mubr.f32.gmra.mrb[0].mxu0 %v1998
  %v2165 = vpop.f32.mrb[0].mxu0
  %v2166 = vadd.f32 0.0, %v2165
  %v2167 = vpop.f32.mrb[0].mxu0
  %v2168 = vadd.f32 0.0, %v2167
  %2169 = vmatprep.mubr.f32.mxu0 0.0
  %2170 = vmatmul.mubr.f32.gmra.mrb[0].mxu0 %v2000
  %v2171 = vpop.f32.mrb[0].mxu0
  %v2172 = vadd.f32 0.0, %v2171
  %v2173 = vpop.f32.mrb[0].mxu0
  %v2174 = vadd.f32 0.0, %v2173
  %2175 = vmatprep.mubr.f32.mxu0 0.0
  %2176 = vmatmul.mubr.f32.gmra.mrb[0].mxu0 %v2002
  %v2177 = vpop.f32.mrb[0].mxu0
  %v2178 = vadd.f32 0.0, %v2177
  %v2179 = vpop.f32.mrb[0].mxu0
  %v2180 = vadd.f32 0.0, %v2179
  %2181 = vdwg.mxu0
  %2182 = vmatprep.subr.mxu0 %v1989
  %2183 = vmatpush1.msra.mxu0 %v1988
  %2184 = vmatprep.subr.mxu0 0.0
  %2185 = vmatpush1.msra.mxu0 0.0
  %2186 = vmatprep.subr.mxu0 0.0
  %2187 = vmatpush1.msra.mxu0 0.0
  %2188 = vmatprep.subr.mxu0 0.0
  %2189 = vmatpush1.msra.mxu0 0.0
  %2190 = vmatprep.subr.mxu0 0.0
  %2191 = vmatpush1.msra.mxu0 0.0
  %2192 = vmatprep.subr.mxu0 0.0
  %2193 = vmatpush1.msra.mxu0 0.0
  %2194 = vmatprep.subr.mxu0 0.0
  %2195 = vmatpush1.msra.mxu0 0.0
  %2196 = vmatprep.subr.mxu0 0.0
  %2197 = vmatpush1.msra.mxu0 0.0
  %2198 = vmatprep.subr.mxu0 0.0
  %2199 = vmatpush1.msra.mxu0 0.0
  %2200 = vmatprep.subr.mxu0 0.0
  %2201 = vmatpush1.msra.mxu0 0.0
  %2202 = vmatprep.subr.mxu0 0.0
  %2203 = vmatpush1.msra.mxu0 0.0
  %2204 = vmatprep.subr.mxu0 0.0
  %2205 = vmatpush1.msra.mxu0 0.0
  %2206 = vmatprep.subr.mxu0 0.0
  %2207 = vmatpush1.msra.mxu0 0.0
  %2208 = vmatprep.subr.mxu0 0.0
  %2209 = vmatpush1.msra.mxu0 0.0
  %2210 = vmatprep.subr.mxu0 0.0
  %2211 = vmatpush1.msra.mxu0 0.0
  %2212 = vmatprep.subr.mxu0 0.0
  %2213 = vmatpush1.msra.mxu0 0.0
  %2214 = vmatprep.subr.mxu0 0.0
  %2215 = vmatpush1.msra.mxu0 0.0
  %2216 = vmatprep.subr.mxu0 0.0
  %2217 = vmatpush1.msra.mxu0 0.0
  %2218 = vmatprep.subr.mxu0 0.0
  %2219 = vmatpush1.msra.mxu0 0.0
  %2220 = vmatprep.subr.mxu0 0.0
  %2221 = vmatpush1.msra.mxu0 0.0
  %2222 = vmatprep.subr.mxu0 0.0
  %2223 = vmatpush1.msra.mxu0 0.0
  %2224 = vmatprep.subr.mxu0 0.0
  %2225 = vmatpush1.msra.mxu0 0.0
  %2226 = vmatprep.subr.mxu0 0.0
  %2227 = vmatpush1.msra.mxu0 0.0
  %2228 = vmatprep.subr.mxu0 0.0
  %2229 = vmatpush1.msra.mxu0 0.0
  %2230 = vmatprep.subr.mxu0 0.0
  %2231 = vmatpush1.msra.mxu0 0.0
  %2232 = vmatprep.subr.mxu0 0.0
  %2233 = vmatpush1.msra.mxu0 0.0
  %2234 = vmatprep.subr.mxu0 0.0
  %2235 = vmatpush1.msra.mxu0 0.0
  %2236 = vmatprep.subr.mxu0 0.0
  %2237 = vmatpush1.msra.mxu0 0.0
  %2238 = vmatprep.subr.mxu0 0.0
  %2239 = vmatpush1.msra.mxu0 0.0
  %2240 = vmatprep.subr.mxu0 0.0
  %2241 = vmatpush1.msra.mxu0 0.0
  %2242 = vmatprep.subr.mxu0 0.0
  %2243 = vmatpush1.msra.mxu0 0.0
  %2244 = vmatprep.subr.mxu0 0.0
  %2245 = vmatpush1.msra.mxu0 0.0
  %2246 = vmatprep.mubr.f32.mxu0 0.0
  %2247 = vmatmul.mubr.f32.gmra.mrb[0].mxu0 %v1996
  %v2248 = vpop.f32.mrb[0].mxu0
  %v2249 = vadd.f32 0.0, %v2248
  %v2250 = vpop.f32.mrb[0].mxu0
  %v2251 = vadd.f32 0.0, %v2250
  %2252 = vmatprep.mubr.f32.mxu0 0.0
  %2253 = vmatmul.mubr.f32.gmra.mrb[0].mxu0 %v1998
  %v2254 = vpop.f32.mrb[0].mxu0
  %v2255 = vadd.f32 0.0, %v2254
  %v2256 = vpop.f32.mrb[0].mxu0
  %v2257 = vadd.f32 0.0, %v2256
  %2258 = vmatprep.mubr.f32.mxu0 0.0
  %2259 = vmatmul.mubr.f32.gmra.mrb[0].mxu0 %v2000
  %v2260 = vpop.f32.mrb[0].mxu0
  %v2261 = vadd.f32 0.0, %v2260
  %v2262 = vpop.f32.mrb[0].mxu0
  %v2263 = vadd.f32 0.0, %v2262
  %2264 = vmatprep.mubr.f32.mxu0 0.0
  %2265 = vmatmul.mubr.f32.gmra.mrb[0].mxu0 %v2002
  %v2266 = vpop.f32.mrb[0].mxu0
  %v2267 = vadd.f32 0.0, %v2266
  %v2268 = vpop.f32.mrb[0].mxu0
  %v2269 = vadd.f32 0.0, %v2268
  %2270 = vdwg.mxu0
  %v2271 = vadd.f32 %v1937, %v2071
  %v2272 = vadd.f32 %v1938, %v2073
  %v2273 = vadd.f32 %v1939, %v2160
  %v2274 = vadd.f32 %v1940, %v2162
  %v2275 = vadd.f32 %v1941, %v2249
  %v2276 = vadd.f32 %v1942, %v2251
  %v2277 = vadd.f32 %v1943, %v2077
  %v2278 = vadd.f32 %v1944, %v2079
  %v2279 = vadd.f32 %v1945, %v2166
  %v2280 = vadd.f32 %v1946, %v2168
  %v2281 = vadd.f32 %v1947, %v2255
  %v2282 = vadd.f32 %v1948, %v2257
  %v2283 = vadd.f32 %v1949, %v2083
  %v2284 = vadd.f32 %v1950, %v2085
  %v2285 = vadd.f32 %v1951, %v2172
  %v2286 = vadd.f32 %v1952, %v2174
  %v2287 = vadd.f32 %v1953, %v2261
  %v2288 = vadd.f32 %v1954, %v2263
  %v2289 = vadd.f32 %v1955, %v2089
  %v2290 = vadd.f32 %v1956, %v2091
  %v2291 = vadd.f32 %v1957, %v2178
  %v2292 = vadd.f32 %v1958, %v2180
  %v2293 = vadd.f32 %v1959, %v2267
  %v2294 = vadd.f32 %v1960, %v2269
  %2295 = vrot.lane.b32.xlu0 %v11, 72
  %v2296 = vpop.permute.xlu0 %2295
  %2297 = vrot.lane.b32.xlu0 %v12, 72
  %v2298 = vpop.permute.xlu0 %2297
  %2299 = vrot.lane.b32.xlu0 %v13, 72
  %v2300 = vpop.permute.xlu0 %2299
  %2301 = vrot.lane.b32.xlu0 %v14, 72
  %v2302 = vpop.permute.xlu0 %2301
  %2303 = vrot.lane.b32.xlu0 %v21, 91
  %v2304 = vpop.permute.xlu0 %2303
  %2305 = vrot.lane.b32.xlu0 %v22, 91
  %v2306 = vpop.permute.xlu0 %2305
  %2307 = vrot.lane.b32.xlu0 %v23, 91
  %v2308 = vpop.permute.xlu0 %2307
  %2309 = vrot.lane.b32.xlu0 %v24, 91
  %v2310 = vpop.permute.xlu0 %2309
  %2311 = vrot.lane.b32.xlu0 %v25, 91
  %v2312 = vpop.permute.xlu0 %2311
  %2313 = vrot.lane.b32.xlu0 %v26, 91
  %v2314 = vpop.permute.xlu0 %2313
  %2315 = vrot.lane.b32.xlu0 %v27, 91
  %v2316 = vpop.permute.xlu0 %2315
  %vm2317 = vcmask 744448
  %v2318 = vsel %vm2317, %v2304, %v2306
  %v2319 = vsel %vm2317, %v2306, %v2308
  %v2320 = vsel %vm2317, %v2308, %v2310
  %v2321 = vsel %vm2317, %v2310, %v2312
  %v2322 = vsel %vm2317, %v2312, %v2314
  %v2323 = vsel %vm2317, %v2314, %v2316
  %v2330 = vsel %vm74, %v2296, 0
  %v2332 = vsel %vm74, %v2298, 0
  %v2334 = vsel %vm74, %v2300, 0
  %v2336 = vsel %vm74, %v2302, 0
  %2338 = vmatprep.subr.mxu0 %v2319
  %2339 = vmatpush1.msra.mxu0 %v2318
  %2340 = vmatprep.subr.mxu0 0.0
  %2341 = vmatpush1.msra.mxu0 0.0
  %2342 = vmatprep.subr.mxu0 0.0
  %2343 = vmatpush1.msra.mxu0 0.0
  %2344 = vmatprep.subr.mxu0 0.0
  %2345 = vmatpush1.msra.mxu0 0.0
  %2346 = vmatprep.subr.mxu0 0.0
  %2347 = vmatpush1.msra.mxu0 0.0
  %2348 = vmatprep.subr.mxu0 0.0
  %2349 = vmatpush1.msra.mxu0 0.0
  %2350 = vmatprep.subr.mxu0 0.0
  %2351 = vmatpush1.msra.mxu0 0.0
  %2352 = vmatprep.subr.mxu0 0.0
  %2353 = vmatpush1.msra.mxu0 0.0
  %2354 = vmatprep.subr.mxu0 0.0
  %2355 = vmatpush1.msra.mxu0 0.0
  %2356 = vmatprep.subr.mxu0 0.0
  %2357 = vmatpush1.msra.mxu0 0.0
  %2358 = vmatprep.subr.mxu0 0.0
  %2359 = vmatpush1.msra.mxu0 0.0
  %2360 = vmatprep.subr.mxu0 0.0
  %2361 = vmatpush1.msra.mxu0 0.0
  %2362 = vmatprep.subr.mxu0 0.0
  %2363 = vmatpush1.msra.mxu0 0.0
  %2364 = vmatprep.subr.mxu0 0.0
  %2365 = vmatpush1.msra.mxu0 0.0
  %2366 = vmatprep.subr.mxu0 0.0
  %2367 = vmatpush1.msra.mxu0 0.0
  %2368 = vmatprep.subr.mxu0 0.0
  %2369 = vmatpush1.msra.mxu0 0.0
  %2370 = vmatprep.subr.mxu0 0.0
  %2371 = vmatpush1.msra.mxu0 0.0
  %2372 = vmatprep.subr.mxu0 0.0
  %2373 = vmatpush1.msra.mxu0 0.0
  %2374 = vmatprep.subr.mxu0 0.0
  %2375 = vmatpush1.msra.mxu0 0.0
  %2376 = vmatprep.subr.mxu0 0.0
  %2377 = vmatpush1.msra.mxu0 0.0
  %2378 = vmatprep.subr.mxu0 0.0
  %2379 = vmatpush1.msra.mxu0 0.0
  %2380 = vmatprep.subr.mxu0 0.0
  %2381 = vmatpush1.msra.mxu0 0.0
  %2382 = vmatprep.subr.mxu0 0.0
  %2383 = vmatpush1.msra.mxu0 0.0
  %2384 = vmatprep.subr.mxu0 0.0
  %2385 = vmatpush1.msra.mxu0 0.0
  %2386 = vmatprep.subr.mxu0 0.0
  %2387 = vmatpush1.msra.mxu0 0.0
  %2388 = vmatprep.subr.mxu0 0.0
  %2389 = vmatpush1.msra.mxu0 0.0
  %2390 = vmatprep.subr.mxu0 0.0
  %2391 = vmatpush1.msra.mxu0 0.0
  %2392 = vmatprep.subr.mxu0 0.0
  %2393 = vmatpush1.msra.mxu0 0.0
  %2394 = vmatprep.subr.mxu0 0.0
  %2395 = vmatpush1.msra.mxu0 0.0
  %2396 = vmatprep.subr.mxu0 0.0
  %2397 = vmatpush1.msra.mxu0 0.0
  %2398 = vmatprep.subr.mxu0 0.0
  %2399 = vmatpush1.msra.mxu0 0.0
  %2400 = vmatprep.subr.mxu0 0.0
  %2401 = vmatpush1.msra.mxu0 0.0
  %2402 = vmatprep.mubr.f32.mxu0 0.0
  %2403 = vmatmul.mubr.f32.gmra.mrb[0].mxu0 %v2330
  %v2404 = vpop.f32.mrb[0].mxu0
  %v2405 = vadd.f32 0.0, %v2404
  %v2406 = vpop.f32.mrb[0].mxu0
  %v2407 = vadd.f32 0.0, %v2406
  %2408 = vmatprep.mubr.f32.mxu0 0.0
  %2409 = vmatmul.mubr.f32.gmra.mrb[0].mxu0 %v2332
  %v2410 = vpop.f32.mrb[0].mxu0
  %v2411 = vadd.f32 0.0, %v2410
  %v2412 = vpop.f32.mrb[0].mxu0
  %v2413 = vadd.f32 0.0, %v2412
  %2414 = vmatprep.mubr.f32.mxu0 0.0
  %2415 = vmatmul.mubr.f32.gmra.mrb[0].mxu0 %v2334
  %v2416 = vpop.f32.mrb[0].mxu0
  %v2417 = vadd.f32 0.0, %v2416
  %v2418 = vpop.f32.mrb[0].mxu0
  %v2419 = vadd.f32 0.0, %v2418
  %2420 = vmatprep.mubr.f32.mxu0 0.0
  %2421 = vmatmul.mubr.f32.gmra.mrb[0].mxu0 %v2336
  %v2422 = vpop.f32.mrb[0].mxu0
  %v2423 = vadd.f32 0.0, %v2422
  %v2424 = vpop.f32.mrb[0].mxu0
  %v2425 = vadd.f32 0.0, %v2424
  %2426 = vdwg.mxu0
  %2427 = vmatprep.subr.mxu0 %v2321
  %2428 = vmatpush1.msra.mxu0 %v2320
  %2429 = vmatprep.subr.mxu0 0.0
  %2430 = vmatpush1.msra.mxu0 0.0
  %2431 = vmatprep.subr.mxu0 0.0
  %2432 = vmatpush1.msra.mxu0 0.0
  %2433 = vmatprep.subr.mxu0 0.0
  %2434 = vmatpush1.msra.mxu0 0.0
  %2435 = vmatprep.subr.mxu0 0.0
  %2436 = vmatpush1.msra.mxu0 0.0
  %2437 = vmatprep.subr.mxu0 0.0
  %2438 = vmatpush1.msra.mxu0 0.0
  %2439 = vmatprep.subr.mxu0 0.0
  %2440 = vmatpush1.msra.mxu0 0.0
  %2441 = vmatprep.subr.mxu0 0.0
  %2442 = vmatpush1.msra.mxu0 0.0
  %2443 = vmatprep.subr.mxu0 0.0
  %2444 = vmatpush1.msra.mxu0 0.0
  %2445 = vmatprep.subr.mxu0 0.0
  %2446 = vmatpush1.msra.mxu0 0.0
  %2447 = vmatprep.subr.mxu0 0.0
  %2448 = vmatpush1.msra.mxu0 0.0
  %2449 = vmatprep.subr.mxu0 0.0
  %2450 = vmatpush1.msra.mxu0 0.0
  %2451 = vmatprep.subr.mxu0 0.0
  %2452 = vmatpush1.msra.mxu0 0.0
  %2453 = vmatprep.subr.mxu0 0.0
  %2454 = vmatpush1.msra.mxu0 0.0
  %2455 = vmatprep.subr.mxu0 0.0
  %2456 = vmatpush1.msra.mxu0 0.0
  %2457 = vmatprep.subr.mxu0 0.0
  %2458 = vmatpush1.msra.mxu0 0.0
  %2459 = vmatprep.subr.mxu0 0.0
  %2460 = vmatpush1.msra.mxu0 0.0
  %2461 = vmatprep.subr.mxu0 0.0
  %2462 = vmatpush1.msra.mxu0 0.0
  %2463 = vmatprep.subr.mxu0 0.0
  %2464 = vmatpush1.msra.mxu0 0.0
  %2465 = vmatprep.subr.mxu0 0.0
  %2466 = vmatpush1.msra.mxu0 0.0
  %2467 = vmatprep.subr.mxu0 0.0
  %2468 = vmatpush1.msra.mxu0 0.0
  %2469 = vmatprep.subr.mxu0 0.0
  %2470 = vmatpush1.msra.mxu0 0.0
  %2471 = vmatprep.subr.mxu0 0.0
  %2472 = vmatpush1.msra.mxu0 0.0
  %2473 = vmatprep.subr.mxu0 0.0
  %2474 = vmatpush1.msra.mxu0 0.0
  %2475 = vmatprep.subr.mxu0 0.0
  %2476 = vmatpush1.msra.mxu0 0.0
  %2477 = vmatprep.subr.mxu0 0.0
  %2478 = vmatpush1.msra.mxu0 0.0
  %2479 = vmatprep.subr.mxu0 0.0
  %2480 = vmatpush1.msra.mxu0 0.0
  %2481 = vmatprep.subr.mxu0 0.0
  %2482 = vmatpush1.msra.mxu0 0.0
  %2483 = vmatprep.subr.mxu0 0.0
  %2484 = vmatpush1.msra.mxu0 0.0
  %2485 = vmatprep.subr.mxu0 0.0
  %2486 = vmatpush1.msra.mxu0 0.0
  %2487 = vmatprep.subr.mxu0 0.0
  %2488 = vmatpush1.msra.mxu0 0.0
  %2489 = vmatprep.subr.mxu0 0.0
  %2490 = vmatpush1.msra.mxu0 0.0
  %2491 = vmatprep.mubr.f32.mxu0 0.0
  %2492 = vmatmul.mubr.f32.gmra.mrb[0].mxu0 %v2330
  %v2493 = vpop.f32.mrb[0].mxu0
  %v2494 = vadd.f32 0.0, %v2493
  %v2495 = vpop.f32.mrb[0].mxu0
  %v2496 = vadd.f32 0.0, %v2495
  %2497 = vmatprep.mubr.f32.mxu0 0.0
  %2498 = vmatmul.mubr.f32.gmra.mrb[0].mxu0 %v2332
  %v2499 = vpop.f32.mrb[0].mxu0
  %v2500 = vadd.f32 0.0, %v2499
  %v2501 = vpop.f32.mrb[0].mxu0
  %v2502 = vadd.f32 0.0, %v2501
  %2503 = vmatprep.mubr.f32.mxu0 0.0
  %2504 = vmatmul.mubr.f32.gmra.mrb[0].mxu0 %v2334
  %v2505 = vpop.f32.mrb[0].mxu0
  %v2506 = vadd.f32 0.0, %v2505
  %v2507 = vpop.f32.mrb[0].mxu0
  %v2508 = vadd.f32 0.0, %v2507
  %2509 = vmatprep.mubr.f32.mxu0 0.0
  %2510 = vmatmul.mubr.f32.gmra.mrb[0].mxu0 %v2336
  %v2511 = vpop.f32.mrb[0].mxu0
  %v2512 = vadd.f32 0.0, %v2511
  %v2513 = vpop.f32.mrb[0].mxu0
  %v2514 = vadd.f32 0.0, %v2513
  %2515 = vdwg.mxu0
  %2516 = vmatprep.subr.mxu0 %v2323
  %2517 = vmatpush1.msra.mxu0 %v2322
  %2518 = vmatprep.subr.mxu0 0.0
  %2519 = vmatpush1.msra.mxu0 0.0
  %2520 = vmatprep.subr.mxu0 0.0
  %2521 = vmatpush1.msra.mxu0 0.0
  %2522 = vmatprep.subr.mxu0 0.0
  %2523 = vmatpush1.msra.mxu0 0.0
  %2524 = vmatprep.subr.mxu0 0.0
  %2525 = vmatpush1.msra.mxu0 0.0
  %2526 = vmatprep.subr.mxu0 0.0
  %2527 = vmatpush1.msra.mxu0 0.0
  %2528 = vmatprep.subr.mxu0 0.0
  %2529 = vmatpush1.msra.mxu0 0.0
  %2530 = vmatprep.subr.mxu0 0.0
  %2531 = vmatpush1.msra.mxu0 0.0
  %2532 = vmatprep.subr.mxu0 0.0
  %2533 = vmatpush1.msra.mxu0 0.0
  %2534 = vmatprep.subr.mxu0 0.0
  %2535 = vmatpush1.msra.mxu0 0.0
  %2536 = vmatprep.subr.mxu0 0.0
  %2537 = vmatpush1.msra.mxu0 0.0
  %2538 = vmatprep.subr.mxu0 0.0
  %2539 = vmatpush1.msra.mxu0 0.0
  %2540 = vmatprep.subr.mxu0 0.0
  %2541 = vmatpush1.msra.mxu0 0.0
  %2542 = vmatprep.subr.mxu0 0.0
  %2543 = vmatpush1.msra.mxu0 0.0
  %2544 = vmatprep.subr.mxu0 0.0
  %2545 = vmatpush1.msra.mxu0 0.0
  %2546 = vmatprep.subr.mxu0 0.0
  %2547 = vmatpush1.msra.mxu0 0.0
  %2548 = vmatprep.subr.mxu0 0.0
  %2549 = vmatpush1.msra.mxu0 0.0
  %2550 = vmatprep.subr.mxu0 0.0
  %2551 = vmatpush1.msra.mxu0 0.0
  %2552 = vmatprep.subr.mxu0 0.0
  %2553 = vmatpush1.msra.mxu0 0.0
  %2554 = vmatprep.subr.mxu0 0.0
  %2555 = vmatpush1.msra.mxu0 0.0
  %2556 = vmatprep.subr.mxu0 0.0
  %2557 = vmatpush1.msra.mxu0 0.0
  %2558 = vmatprep.subr.mxu0 0.0
  %2559 = vmatpush1.msra.mxu0 0.0
  %2560 = vmatprep.subr.mxu0 0.0
  %2561 = vmatpush1.msra.mxu0 0.0
  %2562 = vmatprep.subr.mxu0 0.0
  %2563 = vmatpush1.msra.mxu0 0.0
  %2564 = vmatprep.subr.mxu0 0.0
  %2565 = vmatpush1.msra.mxu0 0.0
  %2566 = vmatprep.subr.mxu0 0.0
  %2567 = vmatpush1.msra.mxu0 0.0
  %2568 = vmatprep.subr.mxu0 0.0
  %2569 = vmatpush1.msra.mxu0 0.0
  %2570 = vmatprep.subr.mxu0 0.0
  %2571 = vmatpush1.msra.mxu0 0.0
  %2572 = vmatprep.subr.mxu0 0.0
  %2573 = vmatpush1.msra.mxu0 0.0
  %2574 = vmatprep.subr.mxu0 0.0
  %2575 = vmatpush1.msra.mxu0 0.0
  %2576 = vmatprep.subr.mxu0 0.0
  %2577 = vmatpush1.msra.mxu0 0.0
  %2578 = vmatprep.subr.mxu0 0.0
  %2579 = vmatpush1.msra.mxu0 0.0
  %2580 = vmatprep.mubr.f32.mxu0 0.0
  %2581 = vmatmul.mubr.f32.gmra.mrb[0].mxu0 %v2330
  %v2582 = vpop.f32.mrb[0].mxu0
  %v2583 = vadd.f32 0.0, %v2582
  %v2584 = vpop.f32.mrb[0].mxu0
  %v2585 = vadd.f32 0.0, %v2584
  %2586 = vmatprep.mubr.f32.mxu0 0.0
  %2587 = vmatmul.mubr.f32.gmra.mrb[0].mxu0 %v2332
  %v2588 = vpop.f32.mrb[0].mxu0
  %v2589 = vadd.f32 0.0, %v2588
  %v2590 = vpop.f32.mrb[0].mxu0
  %v2591 = vadd.f32 0.0, %v2590
  %2592 = vmatprep.mubr.f32.mxu0 0.0
  %2593 = vmatmul.mubr.f32.gmra.mrb[0].mxu0 %v2334
  %v2594 = vpop.f32.mrb[0].mxu0
  %v2595 = vadd.f32 0.0, %v2594
  %v2596 = vpop.f32.mrb[0].mxu0
  %v2597 = vadd.f32 0.0, %v2596
  %2598 = vmatprep.mubr.f32.mxu0 0.0
  %2599 = vmatmul.mubr.f32.gmra.mrb[0].mxu0 %v2336
  %v2600 = vpop.f32.mrb[0].mxu0
  %v2601 = vadd.f32 0.0, %v2600
  %v2602 = vpop.f32.mrb[0].mxu0
  %v2603 = vadd.f32 0.0, %v2602
  %2604 = vdwg.mxu0
  %v2605 = vadd.f32 %v2271, %v2405
  %v2606 = vadd.f32 %v2272, %v2407
  %v2607 = vadd.f32 %v2273, %v2494
  %v2608 = vadd.f32 %v2274, %v2496
  %v2609 = vadd.f32 %v2275, %v2583
  %v2610 = vadd.f32 %v2276, %v2585
  %v2611 = vadd.f32 %v2277, %v2411
  %v2612 = vadd.f32 %v2278, %v2413
  %v2613 = vadd.f32 %v2279, %v2500
  %v2614 = vadd.f32 %v2280, %v2502
  %v2615 = vadd.f32 %v2281, %v2589
  %v2616 = vadd.f32 %v2282, %v2591
  %v2617 = vadd.f32 %v2283, %v2417
  %v2618 = vadd.f32 %v2284, %v2419
  %v2619 = vadd.f32 %v2285, %v2506
  %v2620 = vadd.f32 %v2286, %v2508
  %v2621 = vadd.f32 %v2287, %v2595
  %v2622 = vadd.f32 %v2288, %v2597
  %v2623 = vadd.f32 %v2289, %v2423
  %v2624 = vadd.f32 %v2290, %v2425
  %v2625 = vadd.f32 %v2291, %v2512
  %v2626 = vadd.f32 %v2292, %v2514
  %v2627 = vadd.f32 %v2293, %v2601
  %v2628 = vadd.f32 %v2294, %v2603
  %2629 = vrot.lane.b32.xlu0 %v11, 64
  %v2630 = vpop.permute.xlu0 %2629
  %2631 = vrot.lane.b32.xlu0 %v12, 64
  %v2632 = vpop.permute.xlu0 %2631
  %2633 = vrot.lane.b32.xlu0 %v13, 64
  %v2634 = vpop.permute.xlu0 %2633
  %2635 = vrot.lane.b32.xlu0 %v14, 64
  %v2636 = vpop.permute.xlu0 %2635
  %2637 = vrot.lane.b32.xlu0 %v21, 90
  %v2638 = vpop.permute.xlu0 %2637
  %2639 = vrot.lane.b32.xlu0 %v22, 90
  %v2640 = vpop.permute.xlu0 %2639
  %2641 = vrot.lane.b32.xlu0 %v23, 90
  %v2642 = vpop.permute.xlu0 %2641
  %2643 = vrot.lane.b32.xlu0 %v24, 90
  %v2644 = vpop.permute.xlu0 %2643
  %2645 = vrot.lane.b32.xlu0 %v25, 90
  %v2646 = vpop.permute.xlu0 %2645
  %2647 = vrot.lane.b32.xlu0 %v26, 90
  %v2648 = vpop.permute.xlu0 %2647
  %2649 = vrot.lane.b32.xlu0 %v27, 90
  %v2650 = vpop.permute.xlu0 %2649
  %vm2651 = vcmask 736256
  %v2652 = vsel %vm2651, %v2638, %v2640
  %v2653 = vsel %vm2651, %v2640, %v2642
  %v2654 = vsel %vm2651, %v2642, %v2644
  %v2655 = vsel %vm2651, %v2644, %v2646
  %v2656 = vsel %vm2651, %v2646, %v2648
  %v2657 = vsel %vm2651, %v2648, %v2650
  %v2664 = vsel %vm74, %v2630, 0
  %v2666 = vsel %vm74, %v2632, 0
  %v2668 = vsel %vm74, %v2634, 0
  %v2670 = vsel %vm74, %v2636, 0
  %2672 = vmatprep.subr.mxu0 %v2653
  %2673 = vmatpush1.msra.mxu0 %v2652
  %2674 = vmatprep.subr.mxu0 0.0
  %2675 = vmatpush1.msra.mxu0 0.0
  %2676 = vmatprep.subr.mxu0 0.0
  %2677 = vmatpush1.msra.mxu0 0.0
  %2678 = vmatprep.subr.mxu0 0.0
  %2679 = vmatpush1.msra.mxu0 0.0
  %2680 = vmatprep.subr.mxu0 0.0
  %2681 = vmatpush1.msra.mxu0 0.0
  %2682 = vmatprep.subr.mxu0 0.0
  %2683 = vmatpush1.msra.mxu0 0.0
  %2684 = vmatprep.subr.mxu0 0.0
  %2685 = vmatpush1.msra.mxu0 0.0
  %2686 = vmatprep.subr.mxu0 0.0
  %2687 = vmatpush1.msra.mxu0 0.0
  %2688 = vmatprep.subr.mxu0 0.0
  %2689 = vmatpush1.msra.mxu0 0.0
  %2690 = vmatprep.subr.mxu0 0.0
  %2691 = vmatpush1.msra.mxu0 0.0
  %2692 = vmatprep.subr.mxu0 0.0
  %2693 = vmatpush1.msra.mxu0 0.0
  %2694 = vmatprep.subr.mxu0 0.0
  %2695 = vmatpush1.msra.mxu0 0.0
  %2696 = vmatprep.subr.mxu0 0.0
  %2697 = vmatpush1.msra.mxu0 0.0
  %2698 = vmatprep.subr.mxu0 0.0
  %2699 = vmatpush1.msra.mxu0 0.0
  %2700 = vmatprep.subr.mxu0 0.0
  %2701 = vmatpush1.msra.mxu0 0.0
  %2702 = vmatprep.subr.mxu0 0.0
  %2703 = vmatpush1.msra.mxu0 0.0
  %2704 = vmatprep.subr.mxu0 0.0
  %2705 = vmatpush1.msra.mxu0 0.0
  %2706 = vmatprep.subr.mxu0 0.0
  %2707 = vmatpush1.msra.mxu0 0.0
  %2708 = vmatprep.subr.mxu0 0.0
  %2709 = vmatpush1.msra.mxu0 0.0
  %2710 = vmatprep.subr.mxu0 0.0
  %2711 = vmatpush1.msra.mxu0 0.0
  %2712 = vmatprep.subr.mxu0 0.0
  %2713 = vmatpush1.msra.mxu0 0.0
  %2714 = vmatprep.subr.mxu0 0.0
  %2715 = vmatpush1.msra.mxu0 0.0
  %2716 = vmatprep.subr.mxu0 0.0
  %2717 = vmatpush1.msra.mxu0 0.0
  %2718 = vmatprep.subr.mxu0 0.0
  %2719 = vmatpush1.msra.mxu0 0.0
  %2720 = vmatprep.subr.mxu0 0.0
  %2721 = vmatpush1.msra.mxu0 0.0
  %2722 = vmatprep.subr.mxu0 0.0
  %2723 = vmatpush1.msra.mxu0 0.0
  %2724 = vmatprep.subr.mxu0 0.0
  %2725 = vmatpush1.msra.mxu0 0.0
  %2726 = vmatprep.subr.mxu0 0.0
  %2727 = vmatpush1.msra.mxu0 0.0
  %2728 = vmatprep.subr.mxu0 0.0
  %2729 = vmatpush1.msra.mxu0 0.0
  %2730 = vmatprep.subr.mxu0 0.0
  %2731 = vmatpush1.msra.mxu0 0.0
  %2732 = vmatprep.subr.mxu0 0.0
  %2733 = vmatpush1.msra.mxu0 0.0
  %2734 = vmatprep.subr.mxu0 0.0
  %2735 = vmatpush1.msra.mxu0 0.0
  %2736 = vmatprep.mubr.f32.mxu0 0.0
  %2737 = vmatmul.mubr.f32.gmra.mrb[0].mxu0 %v2664
  %v2738 = vpop.f32.mrb[0].mxu0
  %v2739 = vadd.f32 0.0, %v2738
  %v2740 = vpop.f32.mrb[0].mxu0
  %v2741 = vadd.f32 0.0, %v2740
  %2742 = vmatprep.mubr.f32.mxu0 0.0
  %2743 = vmatmul.mubr.f32.gmra.mrb[0].mxu0 %v2666
  %v2744 = vpop.f32.mrb[0].mxu0
  %v2745 = vadd.f32 0.0, %v2744
  %v2746 = vpop.f32.mrb[0].mxu0
  %v2747 = vadd.f32 0.0, %v2746
  %2748 = vmatprep.mubr.f32.mxu0 0.0
  %2749 = vmatmul.mubr.f32.gmra.mrb[0].mxu0 %v2668
  %v2750 = vpop.f32.mrb[0].mxu0
  %v2751 = vadd.f32 0.0, %v2750
  %v2752 = vpop.f32.mrb[0].mxu0
  %v2753 = vadd.f32 0.0, %v2752
  %2754 = vmatprep.mubr.f32.mxu0 0.0
  %2755 = vmatmul.mubr.f32.gmra.mrb[0].mxu0 %v2670
  %v2756 = vpop.f32.mrb[0].mxu0
  %v2757 = vadd.f32 0.0, %v2756
  %v2758 = vpop.f32.mrb[0].mxu0
  %v2759 = vadd.f32 0.0, %v2758
  %2760 = vdwg.mxu0
  %2761 = vmatprep.subr.mxu0 %v2655
  %2762 = vmatpush1.msra.mxu0 %v2654
  %2763 = vmatprep.subr.mxu0 0.0
  %2764 = vmatpush1.msra.mxu0 0.0
  %2765 = vmatprep.subr.mxu0 0.0
  %2766 = vmatpush1.msra.mxu0 0.0
  %2767 = vmatprep.subr.mxu0 0.0
  %2768 = vmatpush1.msra.mxu0 0.0
  %2769 = vmatprep.subr.mxu0 0.0
  %2770 = vmatpush1.msra.mxu0 0.0
  %2771 = vmatprep.subr.mxu0 0.0
  %2772 = vmatpush1.msra.mxu0 0.0
  %2773 = vmatprep.subr.mxu0 0.0
  %2774 = vmatpush1.msra.mxu0 0.0
  %2775 = vmatprep.subr.mxu0 0.0
  %2776 = vmatpush1.msra.mxu0 0.0
  %2777 = vmatprep.subr.mxu0 0.0
  %2778 = vmatpush1.msra.mxu0 0.0
  %2779 = vmatprep.subr.mxu0 0.0
  %2780 = vmatpush1.msra.mxu0 0.0
  %2781 = vmatprep.subr.mxu0 0.0
  %2782 = vmatpush1.msra.mxu0 0.0
  %2783 = vmatprep.subr.mxu0 0.0
  %2784 = vmatpush1.msra.mxu0 0.0
  %2785 = vmatprep.subr.mxu0 0.0
  %2786 = vmatpush1.msra.mxu0 0.0
  %2787 = vmatprep.subr.mxu0 0.0
  %2788 = vmatpush1.msra.mxu0 0.0
  %2789 = vmatprep.subr.mxu0 0.0
  %2790 = vmatpush1.msra.mxu0 0.0
  %2791 = vmatprep.subr.mxu0 0.0
  %2792 = vmatpush1.msra.mxu0 0.0
  %2793 = vmatprep.subr.mxu0 0.0
  %2794 = vmatpush1.msra.mxu0 0.0
  %2795 = vmatprep.subr.mxu0 0.0
  %2796 = vmatpush1.msra.mxu0 0.0
  %2797 = vmatprep.subr.mxu0 0.0
  %2798 = vmatpush1.msra.mxu0 0.0
  %2799 = vmatprep.subr.mxu0 0.0
  %2800 = vmatpush1.msra.mxu0 0.0
  %2801 = vmatprep.subr.mxu0 0.0
  %2802 = vmatpush1.msra.mxu0 0.0
  %2803 = vmatprep.subr.mxu0 0.0
  %2804 = vmatpush1.msra.mxu0 0.0
  %2805 = vmatprep.subr.mxu0 0.0
  %2806 = vmatpush1.msra.mxu0 0.0
  %2807 = vmatprep.subr.mxu0 0.0
  %2808 = vmatpush1.msra.mxu0 0.0
  %2809 = vmatprep.subr.mxu0 0.0
  %2810 = vmatpush1.msra.mxu0 0.0
  %2811 = vmatprep.subr.mxu0 0.0
  %2812 = vmatpush1.msra.mxu0 0.0
  %2813 = vmatprep.subr.mxu0 0.0
  %2814 = vmatpush1.msra.mxu0 0.0
  %2815 = vmatprep.subr.mxu0 0.0
  %2816 = vmatpush1.msra.mxu0 0.0
  %2817 = vmatprep.subr.mxu0 0.0
  %2818 = vmatpush1.msra.mxu0 0.0
  %2819 = vmatprep.subr.mxu0 0.0
  %2820 = vmatpush1.msra.mxu0 0.0
  %2821 = vmatprep.subr.mxu0 0.0
  %2822 = vmatpush1.msra.mxu0 0.0
  %2823 = vmatprep.subr.mxu0 0.0
  %2824 = vmatpush1.msra.mxu0 0.0
  %2825 = vmatprep.mubr.f32.mxu0 0.0
  %2826 = vmatmul.mubr.f32.gmra.mrb[0].mxu0 %v2664
  %v2827 = vpop.f32.mrb[0].mxu0
  %v2828 = vadd.f32 0.0, %v2827
  %v2829 = vpop.f32.mrb[0].mxu0
  %v2830 = vadd.f32 0.0, %v2829
  %2831 = vmatprep.mubr.f32.mxu0 0.0
  %2832 = vmatmul.mubr.f32.gmra.mrb[0].mxu0 %v2666
  %v2833 = vpop.f32.mrb[0].mxu0
  %v2834 = vadd.f32 0.0, %v2833
  %v2835 = vpop.f32.mrb[0].mxu0
  %v2836 = vadd.f32 0.0, %v2835
  %2837 = vmatprep.mubr.f32.mxu0 0.0
  %2838 = vmatmul.mubr.f32.gmra.mrb[0].mxu0 %v2668
  %v2839 = vpop.f32.mrb[0].mxu0
  %v2840 = vadd.f32 0.0, %v2839
  %v2841 = vpop.f32.mrb[0].mxu0
  %v2842 = vadd.f32 0.0, %v2841
  %2843 = vmatprep.mubr.f32.mxu0 0.0
  %2844 = vmatmul.mubr.f32.gmra.mrb[0].mxu0 %v2670
  %v2845 = vpop.f32.mrb[0].mxu0
  %v2846 = vadd.f32 0.0, %v2845
  %v2847 = vpop.f32.mrb[0].mxu0
  %v2848 = vadd.f32 0.0, %v2847
  %2849 = vdwg.mxu0
  %2850 = vmatprep.subr.mxu0 %v2657
  %2851 = vmatpush1.msra.mxu0 %v2656
  %2852 = vmatprep.subr.mxu0 0.0
  %2853 = vmatpush1.msra.mxu0 0.0
  %2854 = vmatprep.subr.mxu0 0.0
  %2855 = vmatpush1.msra.mxu0 0.0
  %2856 = vmatprep.subr.mxu0 0.0
  %2857 = vmatpush1.msra.mxu0 0.0
  %2858 = vmatprep.subr.mxu0 0.0
  %2859 = vmatpush1.msra.mxu0 0.0
  %2860 = vmatprep.subr.mxu0 0.0
  %2861 = vmatpush1.msra.mxu0 0.0
  %2862 = vmatprep.subr.mxu0 0.0
  %2863 = vmatpush1.msra.mxu0 0.0
  %2864 = vmatprep.subr.mxu0 0.0
  %2865 = vmatpush1.msra.mxu0 0.0
  %2866 = vmatprep.subr.mxu0 0.0
  %2867 = vmatpush1.msra.mxu0 0.0
  %2868 = vmatprep.subr.mxu0 0.0
  %2869 = vmatpush1.msra.mxu0 0.0
  %2870 = vmatprep.subr.mxu0 0.0
  %2871 = vmatpush1.msra.mxu0 0.0
  %2872 = vmatprep.subr.mxu0 0.0
  %2873 = vmatpush1.msra.mxu0 0.0
  %2874 = vmatprep.subr.mxu0 0.0
  %2875 = vmatpush1.msra.mxu0 0.0
  %2876 = vmatprep.subr.mxu0 0.0
  %2877 = vmatpush1.msra.mxu0 0.0
  %2878 = vmatprep.subr.mxu0 0.0
  %2879 = vmatpush1.msra.mxu0 0.0
  %2880 = vmatprep.subr.mxu0 0.0
  %2881 = vmatpush1.msra.mxu0 0.0
  %2882 = vmatprep.subr.mxu0 0.0
  %2883 = vmatpush1.msra.mxu0 0.0
  %2884 = vmatprep.subr.mxu0 0.0
  %2885 = vmatpush1.msra.mxu0 0.0
  %2886 = vmatprep.subr.mxu0 0.0
  %2887 = vmatpush1.msra.mxu0 0.0
  %2888 = vmatprep.subr.mxu0 0.0
  %2889 = vmatpush1.msra.mxu0 0.0
  %2890 = vmatprep.subr.mxu0 0.0
  %2891 = vmatpush1.msra.mxu0 0.0
  %2892 = vmatprep.subr.mxu0 0.0
  %2893 = vmatpush1.msra.mxu0 0.0
  %2894 = vmatprep.subr.mxu0 0.0
  %2895 = vmatpush1.msra.mxu0 0.0
  %2896 = vmatprep.subr.mxu0 0.0
  %2897 = vmatpush1.msra.mxu0 0.0
  %2898 = vmatprep.subr.mxu0 0.0
  %2899 = vmatpush1.msra.mxu0 0.0
  %2900 = vmatprep.subr.mxu0 0.0
  %2901 = vmatpush1.msra.mxu0 0.0
  %2902 = vmatprep.subr.mxu0 0.0
  %2903 = vmatpush1.msra.mxu0 0.0
  %2904 = vmatprep.subr.mxu0 0.0
  %2905 = vmatpush1.msra.mxu0 0.0
  %2906 = vmatprep.subr.mxu0 0.0
  %2907 = vmatpush1.msra.mxu0 0.0
  %2908 = vmatprep.subr.mxu0 0.0
  %2909 = vmatpush1.msra.mxu0 0.0
  %2910 = vmatprep.subr.mxu0 0.0
  %2911 = vmatpush1.msra.mxu0 0.0
  %2912 = vmatprep.subr.mxu0 0.0
  %2913 = vmatpush1.msra.mxu0 0.0
  %2914 = vmatprep.mubr.f32.mxu0 0.0
  %2915 = vmatmul.mubr.f32.gmra.mrb[0].mxu0 %v2664
  %v2916 = vpop.f32.mrb[0].mxu0
  %v2917 = vadd.f32 0.0, %v2916
  %v2918 = vpop.f32.mrb[0].mxu0
  %v2919 = vadd.f32 0.0, %v2918
  %2920 = vmatprep.mubr.f32.mxu0 0.0
  %2921 = vmatmul.mubr.f32.gmra.mrb[0].mxu0 %v2666
  %v2922 = vpop.f32.mrb[0].mxu0
  %v2923 = vadd.f32 0.0, %v2922
  %v2924 = vpop.f32.mrb[0].mxu0
  %v2925 = vadd.f32 0.0, %v2924
  %2926 = vmatprep.mubr.f32.mxu0 0.0
  %2927 = vmatmul.mubr.f32.gmra.mrb[0].mxu0 %v2668
  %v2928 = vpop.f32.mrb[0].mxu0
  %v2929 = vadd.f32 0.0, %v2928
  %v2930 = vpop.f32.mrb[0].mxu0
  %v2931 = vadd.f32 0.0, %v2930
  %2932 = vmatprep.mubr.f32.mxu0 0.0
  %2933 = vmatmul.mubr.f32.gmra.mrb[0].mxu0 %v2670
  %v2934 = vpop.f32.mrb[0].mxu0
  %v2935 = vadd.f32 0.0, %v2934
  %v2936 = vpop.f32.mrb[0].mxu0
  %v2937 = vadd.f32 0.0, %v2936
  %2938 = vdwg.mxu0
  %v2939 = vadd.f32 %v2605, %v2739
  %v2940 = vadd.f32 %v2606, %v2741
  %v2941 = vadd.f32 %v2607, %v2828
  %v2942 = vadd.f32 %v2608, %v2830
  %v2943 = vadd.f32 %v2609, %v2917
  %v2944 = vadd.f32 %v2610, %v2919
  %v2945 = vadd.f32 %v2611, %v2745
  %v2946 = vadd.f32 %v2612, %v2747
  %v2947 = vadd.f32 %v2613, %v2834
  %v2948 = vadd.f32 %v2614, %v2836
  %v2949 = vadd.f32 %v2615, %v2923
  %v2950 = vadd.f32 %v2616, %v2925
  %v2951 = vadd.f32 %v2617, %v2751
  %v2952 = vadd.f32 %v2618, %v2753
  %v2953 = vadd.f32 %v2619, %v2840
  %v2954 = vadd.f32 %v2620, %v2842
  %v2955 = vadd.f32 %v2621, %v2929
  %v2956 = vadd.f32 %v2622, %v2931
  %v2957 = vadd.f32 %v2623, %v2757
  %v2958 = vadd.f32 %v2624, %v2759
  %v2959 = vadd.f32 %v2625, %v2846
  %v2960 = vadd.f32 %v2626, %v2848
  %v2961 = vadd.f32 %v2627, %v2935
  %v2962 = vadd.f32 %v2628, %v2937
  %v2963 = vmax.f32 %v2939, 0.0
  %v2964 = vmax.f32 %v2940, 0.0
  %v2965 = vmax.f32 %v2941, 0.0
  %v2966 = vmax.f32 %v2942, 0.0
  %v2967 = vmax.f32 %v2943, 0.0
  %v2968 = vmax.f32 %v2944, 0.0
  %v2969 = vmax.f32 %v2945, 0.0
  %v2970 = vmax.f32 %v2946, 0.0
  %v2971 = vmax.f32 %v2947, 0.0
  %v2972 = vmax.f32 %v2948, 0.0
  %v2973 = vmax.f32 %v2949, 0.0
  %v2974 = vmax.f32 %v2950, 0.0
  %v2975 = vmax.f32 %v2951, 0.0
  %v2976 = vmax.f32 %v2952, 0.0
  %v2977 = vmax.f32 %v2953, 0.0
  %v2978 = vmax.f32 %v2954, 0.0
  %v2979 = vmax.f32 %v2955, 0.0
  %v2980 = vmax.f32 %v2956, 0.0
  %v2981 = vmax.f32 %v2957, 0.0
  %v2982 = vmax.f32 %v2958, 0.0
  %v2983 = vmax.f32 %v2959, 0.0
  %v2984 = vmax.f32 %v2960, 0.0
  %v2985 = vmax.f32 %v2961, 0.0
  %v2986 = vmax.f32 %v2962, 0.0
  %s2987 = scalar_lea.vmem %s0, 4
  %v2988 = vld [vmem:[%s2987] ss:$8 sm:$0xf]
  %v2989 = vld [vmem:[%s2987] ss:$8 sm:$0x30]
  %v2990 = vor.u32 %v2988, %v2989
  %v2992 = vlaneseq
  %v2993 = vshrl.u32 %v2992, 7
  %v2994 = vsub.s32 0, %v2993
  %v2995 = vrot.slane %v2990, %v2994
  %v2996 = vlaneseq
  %v2997 = vshrl.u32 %v2996, 7
  %v2998 = vsub.s32 1, %v2997
  %v2999 = vrot.slane %v2990, %v2998
  %v3000 = vlaneseq
  %v3001 = vshrl.u32 %v3000, 7
  %v3002 = vsub.s32 2, %v3001
  %v3003 = vrot.slane %v2990, %v3002
  %v3004 = vlaneseq
  %v3005 = vshrl.u32 %v3004, 7
  %v3006 = vsub.s32 3, %v3005
  %v3007 = vrot.slane %v2990, %v3006
  %v3008 = vlaneseq
  %v3009 = vshrl.u32 %v3008, 7
  %v3010 = vsub.s32 4, %v3009
  %v3011 = vrot.slane %v2990, %v3010
  %v3012 = vlaneseq
  %v3013 = vshrl.u32 %v3012, 7
  %v3014 = vsub.s32 5, %v3013
  %v3015 = vrot.slane %v2990, %v3014
  %3022 = vmatprep.subr.mxu0 %v2964
  %3023 = vmatpush1.xpose.msra.mxu0 %v2963
  %3024 = vmatprep.subr.mxu0 %v2970
  %3025 = vmatpush1.xpose.msra.mxu0 %v2969
  %3026 = vmatprep.subr.mxu0 %v2976
  %3027 = vmatpush1.xpose.msra.mxu0 %v2975
  %3028 = vmatprep.subr.mxu0 %v2982
  %3029 = vmatpush1.xpose.msra.mxu0 %v2981
  %3030 = vmatprep.subr.mxu0 0.0
  %3031 = vmatpush1.xpose.msra.mxu0 0.0
  %3032 = vmatprep.subr.mxu0 0.0
  %3033 = vmatpush1.xpose.msra.mxu0 0.0
  %3034 = vmatprep.subr.mxu0 0.0
  %3035 = vmatpush1.xpose.msra.mxu0 0.0
  %3036 = vmatprep.subr.mxu0 0.0
  %3037 = vmatpush1.xpose.msra.mxu0 0.0
  %3038 = vmatprep.subr.mxu0 0.0
  %3039 = vmatpush1.xpose.msra.mxu0 0.0
  %3040 = vmatprep.subr.mxu0 0.0
  %3041 = vmatpush1.xpose.msra.mxu0 0.0
  %3042 = vmatprep.subr.mxu0 0.0
  %3043 = vmatpush1.xpose.msra.mxu0 0.0
  %3044 = vmatprep.subr.mxu0 0.0
  %3045 = vmatpush1.xpose.msra.mxu0 0.0
  %3046 = vmatprep.subr.mxu0 0.0
  %3047 = vmatpush1.xpose.msra.mxu0 0.0
  %3048 = vmatprep.subr.mxu0 0.0
  %3049 = vmatpush1.xpose.msra.mxu0 0.0
  %3050 = vmatprep.subr.mxu0 0.0
  %3051 = vmatpush1.xpose.msra.mxu0 0.0
  %3052 = vmatprep.subr.mxu0 0.0
  %3053 = vmatpush1.xpose.msra.mxu0 0.0
  %3054 = vmatprep.subr.mxu0 0.0
  %3055 = vmatpush1.xpose.msra.mxu0 0.0
  %3056 = vmatprep.subr.mxu0 0.0
  %3057 = vmatpush1.xpose.msra.mxu0 0.0
  %3058 = vmatprep.subr.mxu0 0.0
  %3059 = vmatpush1.xpose.msra.mxu0 0.0
  %3060 = vmatprep.subr.mxu0 0.0
  %3061 = vmatpush1.xpose.msra.mxu0 0.0
  %3062 = vmatprep.subr.mxu0 0.0
  %3063 = vmatpush1.xpose.msra.mxu0 0.0
  %3064 = vmatprep.subr.mxu0 0.0
  %3065 = vmatpush1.xpose.msra.mxu0 0.0
  %3066 = vmatprep.subr.mxu0 0.0
  %3067 = vmatpush1.xpose.msra.mxu0 0.0
  %3068 = vmatprep.subr.mxu0 0.0
  %3069 = vmatpush1.xpose.msra.mxu0 0.0
  %3070 = vmatprep.subr.mxu0 0.0
  %3071 = vmatpush1.xpose.msra.mxu0 0.0
  %3072 = vmatprep.subr.mxu0 0.0
  %3073 = vmatpush1.xpose.msra.mxu0 0.0
  %3074 = vmatprep.subr.mxu0 0.0
  %3075 = vmatpush1.xpose.msra.mxu0 0.0
  %3076 = vmatprep.subr.mxu0 0.0
  %3077 = vmatpush1.xpose.msra.mxu0 0.0
  %3078 = vmatprep.subr.mxu0 0.0
  %3079 = vmatpush1.xpose.msra.mxu0 0.0
  %3080 = vmatprep.subr.mxu0 0.0
  %3081 = vmatpush1.xpose.msra.mxu0 0.0
  %3082 = vmatprep.subr.mxu0 0.0
  %3083 = vmatpush1.xpose.msra.mxu0 0.0
  %3084 = vmatprep.subr.mxu0 0.0
  %3085 = vmatpush1.xpose.msra.mxu0 0.0
  %3086 = vmatprep.mubr.f32.mxu0 %v2999
  %3087 = vmatmul.mubr.f32.gmra.mrb[0].mxu0 %v2995
  %v3088 = vpop.f32.mrb[0].mxu0
  %v3089 = vadd.f32 0.0, %v3088
  %v3090 = vpop.f32.mrb[0].mxu0
  %3091 = vdwg.mxu0
  %3092 = vmatprep.subr.mxu0 %v2966
  %3093 = vmatpush1.xpose.msra.mxu0 %v2965
  %3094 = vmatprep.subr.mxu0 %v2972
  %3095 = vmatpush1.xpose.msra.mxu0 %v2971
  %3096 = vmatprep.subr.mxu0 %v2978
  %3097 = vmatpush1.xpose.msra.mxu0 %v2977
  %3098 = vmatprep.subr.mxu0 %v2984
  %3099 = vmatpush1.xpose.msra.mxu0 %v2983
  %3100 = vmatprep.subr.mxu0 0.0
  %3101 = vmatpush1.xpose.msra.mxu0 0.0
  %3102 = vmatprep.subr.mxu0 0.0
  %3103 = vmatpush1.xpose.msra.mxu0 0.0
  %3104 = vmatprep.subr.mxu0 0.0
  %3105 = vmatpush1.xpose.msra.mxu0 0.0
  %3106 = vmatprep.subr.mxu0 0.0
  %3107 = vmatpush1.xpose.msra.mxu0 0.0
  %3108 = vmatprep.subr.mxu0 0.0
  %3109 = vmatpush1.xpose.msra.mxu0 0.0
  %3110 = vmatprep.subr.mxu0 0.0
  %3111 = vmatpush1.xpose.msra.mxu0 0.0
  %3112 = vmatprep.subr.mxu0 0.0
  %3113 = vmatpush1.xpose.msra.mxu0 0.0
  %3114 = vmatprep.subr.mxu0 0.0
  %3115 = vmatpush1.xpose.msra.mxu0 0.0
  %3116 = vmatprep.subr.mxu0 0.0
  %3117 = vmatpush1.xpose.msra.mxu0 0.0
  %3118 = vmatprep.subr.mxu0 0.0
  %3119 = vmatpush1.xpose.msra.mxu0 0.0
  %3120 = vmatprep.subr.mxu0 0.0
  %3121 = vmatpush1.xpose.msra.mxu0 0.0
  %3122 = vmatprep.subr.mxu0 0.0
  %3123 = vmatpush1.xpose.msra.mxu0 0.0
  %3124 = vmatprep.subr.mxu0 0.0
  %3125 = vmatpush1.xpose.msra.mxu0 0.0
  %3126 = vmatprep.subr.mxu0 0.0
  %3127 = vmatpush1.xpose.msra.mxu0 0.0
  %3128 = vmatprep.subr.mxu0 0.0
  %3129 = vmatpush1.xpose.msra.mxu0 0.0
  %3130 = vmatprep.subr.mxu0 0.0
  %3131 = vmatpush1.xpose.msra.mxu0 0.0
  %3132 = vmatprep.subr.mxu0 0.0
  %3133 = vmatpush1.xpose.msra.mxu0 0.0
  %3134 = vmatprep.subr.mxu0 0.0
  %3135 = vmatpush1.xpose.msra.mxu0 0.0
  %3136 = vmatprep.subr.mxu0 0.0
  %3137 = vmatpush1.xpose.msra.mxu0 0.0
  %3138 = vmatprep.subr.mxu0 0.0
  %3139 = vmatpush1.xpose.msra.mxu0 0.0
  %3140 = vmatprep.subr.mxu0 0.0
  %3141 = vmatpush1.xpose.msra.mxu0 0.0
  %3142 = vmatprep.subr.mxu0 0.0
  %3143 = vmatpush1.xpose.msra.mxu0 0.0
  %3144 = vmatprep.subr.mxu0 0.0
  %3145 = vmatpush1.xpose.msra.mxu0 0.0
  %3146 = vmatprep.subr.mxu0 0.0
  %3147 = vmatpush1.xpose.msra.mxu0 0.0
  %3148 = vmatprep.subr.mxu0 0.0
  %3149 = vmatpush1.xpose.msra.mxu0 0.0
  %3150 = vmatprep.subr.mxu0 0.0
  %3151 = vmatpush1.xpose.msra.mxu0 0.0
  %3152 = vmatprep.subr.mxu0 0.0
  %3153 = vmatpush1.xpose.msra.mxu0 0.0
  %3154 = vmatprep.subr.mxu0 0.0
  %3155 = vmatpush1.xpose.msra.mxu0 0.0
  %3156 = vmatprep.mubr.f32.mxu0 %v3007
  %3157 = vmatmul.mubr.f32.gmra.mrb[0].mxu0 %v3003
  %v3158 = vpop.f32.mrb[0].mxu0
  %v3159 = vadd.f32 %v3089, %v3158
  %v3160 = vpop.f32.mrb[0].mxu0
  %3161 = vdwg.mxu0
  %3162 = vmatprep.subr.mxu0 %v2968
  %3163 = vmatpush1.xpose.msra.mxu0 %v2967
  %3164 = vmatprep.subr.mxu0 %v2974
  %3165 = vmatpush1.xpose.msra.mxu0 %v2973
  %3166 = vmatprep.subr.mxu0 %v2980
  %3167 = vmatpush1.xpose.msra.mxu0 %v2979
  %3168 = vmatprep.subr.mxu0 %v2986
  %3169 = vmatpush1.xpose.msra.mxu0 %v2985
  %3170 = vmatprep.subr.mxu0 0.0
  %3171 = vmatpush1.xpose.msra.mxu0 0.0
  %3172 = vmatprep.subr.mxu0 0.0
  %3173 = vmatpush1.xpose.msra.mxu0 0.0
  %3174 = vmatprep.subr.mxu0 0.0
  %3175 = vmatpush1.xpose.msra.mxu0 0.0
  %3176 = vmatprep.subr.mxu0 0.0
  %3177 = vmatpush1.xpose.msra.mxu0 0.0
  %3178 = vmatprep.subr.mxu0 0.0
  %3179 = vmatpush1.xpose.msra.mxu0 0.0
  %3180 = vmatprep.subr.mxu0 0.0
  %3181 = vmatpush1.xpose.msra.mxu0 0.0
  %3182 = vmatprep.subr.mxu0 0.0
  %3183 = vmatpush1.xpose.msra.mxu0 0.0
  %3184 = vmatprep.subr.mxu0 0.0
  %3185 = vmatpush1.xpose.msra.mxu0 0.0
  %3186 = vmatprep.subr.mxu0 0.0
  %3187 = vmatpush1.xpose.msra.mxu0 0.0
  %3188 = vmatprep.subr.mxu0 0.0
  %3189 = vmatpush1.xpose.msra.mxu0 0.0
  %3190 = vmatprep.subr.mxu0 0.0
  %3191 = vmatpush1.xpose.msra.mxu0 0.0
  %3192 = vmatprep.subr.mxu0 0.0
  %3193 = vmatpush1.xpose.msra.mxu0 0.0
  %3194 = vmatprep.subr.mxu0 0.0
  %3195 = vmatpush1.xpose.msra.mxu0 0.0
  %3196 = vmatprep.subr.mxu0 0.0
  %3197 = vmatpush1.xpose.msra.mxu0 0.0
  %3198 = vmatprep.subr.mxu0 0.0
  %3199 = vmatpush1.xpose.msra.mxu0 0.0
  %3200 = vmatprep.subr.mxu0 0.0
  %3201 = vmatpush1.xpose.msra.mxu0 0.0
  %3202 = vmatprep.subr.mxu0 0.0
  %3203 = vmatpush1.xpose.msra.mxu0 0.0
  %3204 = vmatprep.subr.mxu0 0.0
  %3205 = vmatpush1.xpose.msra.mxu0 0.0
  %3206 = vmatprep.subr.mxu0 0.0
  %3207 = vmatpush1.xpose.msra.mxu0 0.0
  %3208 = vmatprep.subr.mxu0 0.0
  %3209 = vmatpush1.xpose.msra.mxu0 0.0
  %3210 = vmatprep.subr.mxu0 0.0
  %3211 = vmatpush1.xpose.msra.mxu0 0.0
  %3212 = vmatprep.subr.mxu0 0.0
  %3213 = vmatpush1.xpose.msra.mxu0 0.0
  %3214 = vmatprep.subr.mxu0 0.0
  %3215 = vmatpush1.xpose.msra.mxu0 0.0
  %3216 = vmatprep.subr.mxu0 0.0
  %3217 = vmatpush1.xpose.msra.mxu0 0.0
  %3218 = vmatprep.subr.mxu0 0.0
  %3219 = vmatpush1.xpose.msra.mxu0 0.0
  %3220 = vmatprep.subr.mxu0 0.0
  %3221 = vmatpush1.xpose.msra.mxu0 0.0
  %3222 = vmatprep.subr.mxu0 0.0
  %3223 = vmatpush1.xpose.msra.mxu0 0.0
  %3224 = vmatprep.subr.mxu0 0.0
  %3225 = vmatpush1.xpose.msra.mxu0 0.0
  %3226 = vmatprep.mubr.f32.mxu0 %v3015
  %3227 = vmatmul.mubr.f32.gmra.mrb[0].mxu0 %v3011
  %v3228 = vpop.f32.mrb[0].mxu0
  %v3229 = vadd.f32 %v3159, %v3228
  %v3230 = vpop.f32.mrb[0].mxu0
  %3231 = vdwg.mxu0
  %v3232 = vld [vmem:[%s0 + $0x6] ss:$0 sm:$0xff]
  %v3233 = vld [vmem:[%s1 + $0x20] sm:$0xff]
  %v3234 = vld [vmem:[%s1 + $0x28] sm:$0xff]
  %v3235 = vld [vmem:[%s1 + $0x30] sm:$0xff]
  %v3236 = vld [vmem:[%s1 + $0x38] sm:$0xff]
  %v3237 = vld [vmem:[%s1 + $0x40] sm:$0xff]
  %v3239 = vsel %vm74, %v3232, 0
  %3241 = vmatprep.subr.mxu0 0.0
  %3242 = vmatpush1.msra.mxu0 %v3237
  %3243 = vmatprep.subr.mxu0 0.0
  %3244 = vmatpush1.msra.mxu0 0.0
  %3245 = vmatprep.subr.mxu0 0.0
  %3246 = vmatpush1.msra.mxu0 0.0
  %3247 = vmatprep.subr.mxu0 0.0
  %3248 = vmatpush1.msra.mxu0 0.0
  %3249 = vmatprep.subr.mxu0 0.0
  %3250 = vmatpush1.msra.mxu0 0.0
  %3251 = vmatprep.subr.mxu0 0.0
  %3252 = vmatpush1.msra.mxu0 0.0
  %3253 = vmatprep.subr.mxu0 0.0
  %3254 = vmatpush1.msra.mxu0 0.0
  %3255 = vmatprep.subr.mxu0 0.0
  %3256 = vmatpush1.msra.mxu0 0.0
  %3257 = vmatprep.subr.mxu0 0.0
  %3258 = vmatpush1.msra.mxu0 0.0
  %3259 = vmatprep.subr.mxu0 0.0
  %3260 = vmatpush1.msra.mxu0 0.0
  %3261 = vmatprep.subr.mxu0 0.0
  %3262 = vmatpush1.msra.mxu0 0.0
  %3263 = vmatprep.subr.mxu0 0.0
  %3264 = vmatpush1.msra.mxu0 0.0
  %3265 = vmatprep.subr.mxu0 0.0
  %3266 = vmatpush1.msra.mxu0 0.0
  %3267 = vmatprep.subr.mxu0 0.0
  %3268 = vmatpush1.msra.mxu0 0.0
  %3269 = vmatprep.subr.mxu0 0.0
  %3270 = vmatpush1.msra.mxu0 0.0
  %3271 = vmatprep.subr.mxu0 0.0
  %3272 = vmatpush1.msra.mxu0 0.0
  %3273 = vmatprep.subr.mxu0 0.0
  %3274 = vmatpush1.msra.mxu0 0.0
  %3275 = vmatprep.subr.mxu0 0.0
  %3276 = vmatpush1.msra.mxu0 0.0
  %3277 = vmatprep.subr.mxu0 0.0
  %3278 = vmatpush1.msra.mxu0 0.0
  %3279 = vmatprep.subr.mxu0 0.0
  %3280 = vmatpush1.msra.mxu0 0.0
  %3281 = vmatprep.subr.mxu0 0.0
  %3282 = vmatpush1.msra.mxu0 0.0
  %3283 = vmatprep.subr.mxu0 0.0
  %3284 = vmatpush1.msra.mxu0 0.0
  %3285 = vmatprep.subr.mxu0 0.0
  %3286 = vmatpush1.msra.mxu0 0.0
  %3287 = vmatprep.subr.mxu0 0.0
  %3288 = vmatpush1.msra.mxu0 0.0
  %3289 = vmatprep.subr.mxu0 0.0
  %3290 = vmatpush1.msra.mxu0 0.0
  %3291 = vmatprep.subr.mxu0 0.0
  %3292 = vmatpush1.msra.mxu0 0.0
  %3293 = vmatprep.subr.mxu0 0.0
  %3294 = vmatpush1.msra.mxu0 0.0
  %3295 = vmatprep.subr.mxu0 0.0
  %3296 = vmatpush1.msra.mxu0 0.0
  %3297 = vmatprep.subr.mxu0 0.0
  %3298 = vmatpush1.msra.mxu0 0.0
  %3299 = vmatprep.subr.mxu0 0.0
  %3300 = vmatpush1.msra.mxu0 0.0
  %3301 = vmatprep.subr.mxu0 0.0
  %3302 = vmatpush1.msra.mxu0 0.0
  %3303 = vmatprep.subr.mxu0 0.0
  %3304 = vmatpush1.msra.mxu0 0.0
  %3305 = vmatprep.mubr.f32.mxu0 0.0
  %3306 = vmatmul.mubr.f32.gmra.mrb[0].mxu0 %v3239
  %v3307 = vpop.f32.mrb[0].mxu0
  %v3308 = vadd.f32 0.0, %v3307
  %v3309 = vpop.f32.mrb[0].mxu0
  %3310 = vdwg.mxu0
  %vm3311 = vcmask 261120
  %v3313 = vsel %vm3311, %v3229, 0
  %3315 = vmatprep.subr.mxu0 0.0
  %3316 = vmatpush1.msra.mxu0 %v3233
  %3317 = vmatprep.subr.mxu0 0.0
  %3318 = vmatpush1.msra.mxu0 %v3234
  %3319 = vmatprep.subr.mxu0 0.0
  %3320 = vmatpush1.msra.mxu0 %v3235
  %3321 = vmatprep.subr.mxu0 0.0
  %3322 = vmatpush1.msra.mxu0 %v3236
  %3323 = vmatprep.subr.mxu0 0.0
  %3324 = vmatpush1.msra.mxu0 0.0
  %3325 = vmatprep.subr.mxu0 0.0
  %3326 = vmatpush1.msra.mxu0 0.0
  %3327 = vmatprep.subr.mxu0 0.0
  %3328 = vmatpush1.msra.mxu0 0.0
  %3329 = vmatprep.subr.mxu0 0.0
  %3330 = vmatpush1.msra.mxu0 0.0
  %3331 = vmatprep.subr.mxu0 0.0
  %3332 = vmatpush1.msra.mxu0 0.0
  %3333 = vmatprep.subr.mxu0 0.0
  %3334 = vmatpush1.msra.mxu0 0.0
  %3335 = vmatprep.subr.mxu0 0.0
  %3336 = vmatpush1.msra.mxu0 0.0
  %3337 = vmatprep.subr.mxu0 0.0
  %3338 = vmatpush1.msra.mxu0 0.0
  %3339 = vmatprep.subr.mxu0 0.0
  %3340 = vmatpush1.msra.mxu0 0.0
  %3341 = vmatprep.subr.mxu0 0.0
  %3342 = vmatpush1.msra.mxu0 0.0
  %3343 = vmatprep.subr.mxu0 0.0
  %3344 = vmatpush1.msra.mxu0 0.0
  %3345 = vmatprep.subr.mxu0 0.0
  %3346 = vmatpush1.msra.mxu0 0.0
  %3347 = vmatprep.subr.mxu0 0.0
  %3348 = vmatpush1.msra.mxu0 0.0
  %3349 = vmatprep.subr.mxu0 0.0
  %3350 = vmatpush1.msra.mxu0 0.0
  %3351 = vmatprep.subr.mxu0 0.0
  %3352 = vmatpush1.msra.mxu0 0.0
  %3353 = vmatprep.subr.mxu0 0.0
  %3354 = vmatpush1.msra.mxu0 0.0
  %3355 = vmatprep.subr.mxu0 0.0
  %3356 = vmatpush1.msra.mxu0 0.0
  %3357 = vmatprep.subr.mxu0 0.0
  %3358 = vmatpush1.msra.mxu0 0.0
  %3359 = vmatprep.subr.mxu0 0.0
  %3360 = vmatpush1.msra.mxu0 0.0
  %3361 = vmatprep.subr.mxu0 0.0
  %3362 = vmatpush1.msra.mxu0 0.0
  %3363 = vmatprep.subr.mxu0 0.0
  %3364 = vmatpush1.msra.mxu0 0.0
  %3365 = vmatprep.subr.mxu0 0.0
  %3366 = vmatpush1.msra.mxu0 0.0
  %3367 = vmatprep.subr.mxu0 0.0
  %3368 = vmatpush1.msra.mxu0 0.0
  %3369 = vmatprep.subr.mxu0 0.0
  %3370 = vmatpush1.msra.mxu0 0.0
  %3371 = vmatprep.subr.mxu0 0.0
  %3372 = vmatpush1.msra.mxu0 0.0
  %3373 = vmatprep.subr.mxu0 0.0
  %3374 = vmatpush1.msra.mxu0 0.0
  %3375 = vmatprep.subr.mxu0 0.0
  %3376 = vmatpush1.msra.mxu0 0.0
  %3377 = vmatprep.subr.mxu0 0.0
  %3378 = vmatpush1.msra.mxu0 0.0
  %3379 = vmatprep.mubr.f32.mxu0 0.0
  %3380 = vmatmul.mubr.f32.gmra.mrb[0].mxu0 %v3313
  %v3381 = vpop.f32.mrb[0].mxu0
  %v3382 = vadd.f32 %v3308, %v3381
  %v3383 = vpop.f32.mrb[0].mxu0
  %3384 = vdwg.mxu0
  %v3385 = vld [vmem:[%s1 + $0x48] sm:$0x1]
  %v3386 = vadd.f32 %v3382, %v3385
  %3387 = vst [vmem:[%s2] sm:$0x1] %v3386
  // Predicated region
  $region10: #{backbone_forward.1} parent=0 // pred_check
    _
  $region11: #{backbone_forward.1} parent=0 // pred_check_branch
    %3389 = sbr.rel (0) target = $region13
  $region12: #{backbone_forward.1} parent=0 // pred_region
    _
  $region13: #{backbone_forward.1} parent=0 // pred_fallthru
    _
  // Predicated region
  $region14: #{backbone_forward.1} parent=0 // pred_check
    _
  $region15: #{backbone_forward.1} parent=0 // pred_check_branch
    %3391 = sbr.rel (0) target = $region17
  $region16: #{backbone_forward.1} parent=0 // pred_region
    _
  $region17: #{backbone_forward.1} parent=0 // pred_fallthru
    _

</llo_original>
